<compile_context>
chip_gen: v5e
topology: v5e:2x2
jax: 0.10.0
libtpu: 0.0.40
codegen_flags: <defaults>
</compile_context>

<pallas_src>
import jax
import jax.numpy as jnp
from jax.experimental import pallas as pl
from jax.experimental.pallas import tpu as pltpu

EMBEDDING_DIM = 10
HIDDEN_DIM = 128          # the module's forward hard-codes HIDDEN_DIM in .view
VOCAB_SIZE = 20           # synthetic small vocab (stand-in for len(word2index))
TARGET_SIZE = 4
TARGET_PAD = 128          # lane-padded output width
SEQ_LEN = 8
B_TILE = 8                # sentences per grid step (M dimension of the matmuls)
NEG_BIG = -1e30           # finite "minus infinity" for padded logits


def lstm_classifier_kernel(ids_ref, table_ref, whh_ref, wo_ref, bo_ref,
                           o_ref, xg_ref):
    """ids_ref:   SMEM (B_total*S,) int32 token ids (scalar prefetch).
    table_ref: (VOCAB, 4H) f32   = embedding @ W_ih + b_ih + b_hh (pre-folded).
    whh_ref:   (H, 4H)     bf16  = W_hh^T.
    wo_ref:    (H, TARGET_PAD) bf16 (zero-padded hidden2tag weight^T).
    bo_ref:    (1, TARGET_PAD) f32  (NEG_BIG-padded hidden2tag bias).
    o_ref:     (B_TILE, TARGET_PAD) f32 log-probs (padded lanes ~NEG_BIG).
    xg_ref:    (S*B_TILE, 4H) f32 VMEM scratch for the pre-gathered x-path.
    """
    g = pl.program_id(0)
    H = HIDDEN_DIM
    B = B_TILE
    S = SEQ_LEN

    # ---- Pre-gather every x-projection row (independent of h => off the
    # serial critical path; done once per grid step, before the recurrence). ----
    for t in range(S):
        for b in range(B):
            row = ids_ref[(g * B + b) * S + t]
            xg_ref[pl.ds(t * B + b, 1), :] = table_ref[pl.ds(row, 1), :]

    h = jnp.zeros((B, H), jnp.float32)
    c = jnp.zeros((B, H), jnp.float32)

    # Fully unrolled recurrence (S = 8, static).  Per step only h @ W_hh sits on
    # the serial chain; xg is a pre-gathered VMEM read.
    for t in range(S):
        xg = xg_ref[pl.ds(t * B, B), :]                                 # (B, 4H)
        hg = jnp.dot(h.astype(jnp.bfloat16), whh_ref[...],
                     preferred_element_type=jnp.float32)                # (B, 4H)
        gates = xg + hg
        i = jax.nn.sigmoid(gates[:, 0 * H:1 * H])
        f = jax.nn.sigmoid(gates[:, 1 * H:2 * H])
        gg = jnp.tanh(gates[:, 2 * H:3 * H])
        o = jax.nn.sigmoid(gates[:, 3 * H:4 * H])
        c = f * c + i * gg
        h = o * jnp.tanh(c)

    # hidden2tag (bf16 weights, f32 accumulation) + LogSoftmax(dim=1) over the
    # lane-padded width; padded lanes carry ~NEG_BIG so exp() underflows to 0.
    tag = jnp.dot(h.astype(jnp.bfloat16), wo_ref[...],
                  preferred_element_type=jnp.float32) + bo_ref[...]
    m = jnp.max(tag, axis=1, keepdims=True)
    lse = m + jnp.log(jnp.sum(jnp.exp(tag - m), axis=1, keepdims=True))
    o_ref[...] = tag - lse


@jax.jit
def lstm_classifier_forward_batch(sentences, kparams):
    """sentences: int32 (B_total, SEQ_LEN), B_total % B_TILE == 0.
    Returns (B_total, TARGET_SIZE) log-probs (one row per sentence, identical
    math to the original module's single-sentence forward)."""
    B_total, S = sentences.shape
    assert S == SEQ_LEN and B_total % B_TILE == 0
    num_groups = B_total // B_TILE
    ids = jnp.clip(sentences.astype(jnp.int32), 0, VOCAB_SIZE - 1).reshape(-1)

    out = pl.pallas_call(
        lstm_classifier_kernel,
        out_shape=jax.ShapeDtypeStruct((B_total, TARGET_PAD), jnp.float32),
        grid_spec=pltpu.PrefetchScalarGridSpec(
            num_scalar_prefetch=1,              # token ids -> SMEM
            grid=(num_groups,),
            in_specs=[
                # constant index_maps => weights stay VMEM-resident across grid
                pl.BlockSpec((VOCAB_SIZE, 4 * HIDDEN_DIM), lambda g, ids: (0, 0)),
                pl.BlockSpec((HIDDEN_DIM, 4 * HIDDEN_DIM), lambda g, ids: (0, 0)),
                pl.BlockSpec((HIDDEN_DIM, TARGET_PAD), lambda g, ids: (0, 0)),
                pl.BlockSpec((1, TARGET_PAD), lambda g, ids: (0, 0)),
            ],
            out_specs=pl.BlockSpec((B_TILE, TARGET_PAD), lambda g, ids: (g, 0)),
            scratch_shapes=[
                pltpu.VMEM((SEQ_LEN * B_TILE, 4 * HIDDEN_DIM), jnp.float32),
            ],
        ),
        compiler_params=pltpu.CompilerParams(
            # sentence groups are independent -> shard across TCs (v7x megacore)
            dimension_semantics=("parallel",)),
    )(
        ids,                          # scalar-prefetch operand
        kparams["table"],             # (VOCAB, 4H) f32
        kparams["w_hh_bf16"],         # (H, 4H) bf16
        kparams["w_out_bf16"],        # (H, TARGET_PAD) bf16
        kparams["b_out_pad"],         # (1, TARGET_PAD) f32
    )
    return out[:, :TARGET_SIZE]


def lstm_classifier_forward(sentence, kparams):
    """Original module semantics: one int32 (seq_len,) sentence -> (1, TARGET_SIZE)
    log-probs.  Implemented by tiling the sentence into one B_TILE group."""
    batch = jnp.tile(sentence[None, :].astype(jnp.int32), (B_TILE, 1))
    return lstm_classifier_forward_batch(batch, kparams)[:1]


def init_params(key):
    """PyTorch-layout parameters (weights stored transposed)."""
    ks = jax.random.split(key, 7)
    bound = 1.0 / jnp.sqrt(HIDDEN_DIM)
    u = lambda k, shape: jax.random.uniform(k, shape, jnp.float32, -bound, bound)
    return {
        "embedding": jax.random.normal(ks[0], (VOCAB_SIZE, EMBEDDING_DIM),
                                       jnp.float32),
        # PyTorch weight_ih_l0: (4H, E); stored transposed.
        "w_ih_t": u(ks[1], (EMBEDDING_DIM, 4 * HIDDEN_DIM)),
        # PyTorch weight_hh_l0: (4H, H); stored transposed.
        "w_hh_t": u(ks[2], (HIDDEN_DIM, 4 * HIDDEN_DIM)),
        "b_ih": u(ks[3], (1, 4 * HIDDEN_DIM)),
        "b_hh": u(ks[4], (1, 4 * HIDDEN_DIM)),
        # hidden2tag Linear: weight (T, H) stored transposed, bias (1, T).
        "w_out_t": u(ks[5], (HIDDEN_DIM, TARGET_SIZE)),
        "b_out": u(ks[6], (1, TARGET_SIZE)),
    }


def prepare_kernel_params(p):
    """Fold embedding @ W_ih + biases into a lookup table; pad/cast for the kernel."""
    table = (jnp.dot(p["embedding"], p["w_ih_t"],
                     preferred_element_type=jnp.float32)
             + p["b_ih"] + p["b_hh"])                               # (V, 4H)
    w_out_pad = jnp.zeros((HIDDEN_DIM, TARGET_PAD), jnp.float32)
    w_out_pad = w_out_pad.at[:, :TARGET_SIZE].set(p["w_out_t"])
    b_out_pad = jnp.full((1, TARGET_PAD), NEG_BIG, jnp.float32)
    b_out_pad = b_out_pad.at[:, :TARGET_SIZE].set(p["b_out"])
    return {
        "table": table,
        "w_hh_bf16": p["w_hh_t"].astype(jnp.bfloat16),
        "w_out_bf16": w_out_pad.astype(jnp.bfloat16),
        "b_out_pad": b_out_pad,
    }


def reference_forward_single(sentence, p):
    """Pure-JAX mirror of the kernel math for one sentence (bf16 W_hh / W_out,
    f32 elementwise), matching the original module's forward."""
    xg = (jnp.dot(p["embedding"][sentence], p["w_ih_t"],
                  preferred_element_type=jnp.float32)
          + p["b_ih"] + p["b_hh"])                                  # (S, 4H)
    w_hh = p["w_hh_t"].astype(jnp.bfloat16)
    w_out = p["w_out_t"].astype(jnp.bfloat16)
    H = HIDDEN_DIM
    h = jnp.zeros((1, H), jnp.float32)
    c = jnp.zeros((1, H), jnp.float32)
    for t in range(sentence.shape[0]):
        gates = xg[t:t + 1] + jnp.dot(h.astype(jnp.bfloat16), w_hh,
                                      preferred_element_type=jnp.float32)
        i = jax.nn.sigmoid(gates[:, 0 * H:1 * H])
        f = jax.nn.sigmoid(gates[:, 1 * H:2 * H])
        g = jnp.tanh(gates[:, 2 * H:3 * H])
        o = jax.nn.sigmoid(gates[:, 3 * H:4 * H])
        c = f * c + i * g
        h = o * jnp.tanh(c)
    tag = (jnp.dot(h.astype(jnp.bfloat16), w_out,
                   preferred_element_type=jnp.float32) + p["b_out"])
    return jax.nn.log_softmax(tag, axis=1)


if __name__ == "__main__":
    key = jax.random.PRNGKey(0)
    pkey, skey = jax.random.split(key)
    params = init_params(pkey)
    kparams = prepare_kernel_params(params)

    # Batched path: 16 sentences -> grid=(2,) "parallel", M=8 in every matmul.
    B_total = 16
    sentences = jax.random.randint(skey, (B_total, SEQ_LEN), 0, VOCAB_SIZE,
                                   jnp.int32)
    scores = lstm_classifier_forward_batch(sentences, kparams)
    jax.block_until_ready(scores)

    assert scores.shape == (B_total, TARGET_SIZE)
    # log-probs exp-sum to 1 along dim=1
    assert jnp.allclose(jnp.sum(jnp.exp(scores), axis=1), 1.0, atol=1e-4)

    # correctness vs. pure-JAX reference, sentence by sentence
    ref = jnp.concatenate(
        [reference_forward_single(sentences[b], params) for b in range(B_total)],
        axis=0)
    assert jnp.allclose(scores, ref, atol=2e-2, rtol=2e-2), (scores, ref)

    # Single-sentence path (original module signature): (1, TARGET_SIZE).
    single = lstm_classifier_forward(sentences[0], kparams)
    jax.block_until_ready(single)
    assert single.shape == (1, TARGET_SIZE)
    assert jnp.allclose(single, ref[0:1], atol=2e-2, rtol=2e-2), (single, ref[0:1])

    print("KERNEL_OK")
</pallas_src>

<mosaic_0001>
module attributes {stable_mosaic.version = 11 : i64} {
  func.func @lstm_classifier_kernel(%arg0: i32, %arg1: memref<128xi32, #tpu.memory_space<smem>>, %arg2: memref<20x512xf32, #tpu.memory_space<vmem>>, %arg3: memref<128x512xbf16, #tpu.memory_space<vmem>>, %arg4: memref<128x128xbf16, #tpu.memory_space<vmem>>, %arg5: memref<1x128xf32, #tpu.memory_space<vmem>>, %arg6: memref<8x128xf32, #tpu.memory_space<vmem>>, %arg7: memref<64x512xf32, #tpu.memory_space<vmem>>) attributes {dimension_semantics = [#tpu.dimension_semantics<parallel>], iteration_bounds = array<i64: 2>, scalar_prefetch = 1 : i64, scratch_operands = 1 : i64, tpu.core_type = #tpu.core_type<tc>, window_params = [{pipeline_mode = #tpu.pipeline_mode<synchronous>, transform_indices = @transform_0, window_bounds = array<i64: 20, 512>}, {pipeline_mode = #tpu.pipeline_mode<synchronous>, transform_indices = @transform_1, window_bounds = array<i64: 128, 512>}, {pipeline_mode = #tpu.pipeline_mode<synchronous>, transform_indices = @transform_2, window_bounds = array<i64: 128, 128>}, {pipeline_mode = #tpu.pipeline_mode<synchronous>, transform_indices = @transform_3, window_bounds = array<i64: 1, 128>}, {transform_indices = @transform_4, window_bounds = array<i64: 8, 128>}]} {
    %c8_i32 = arith.constant 8 : i32
    %0 = arith.muli %arg0, %c8_i32 : i32
    %c0_i32 = arith.constant 0 : i32
    %1 = arith.addi %0, %c0_i32 : i32
    %c8_i32_0 = arith.constant 8 : i32
    %2 = arith.muli %1, %c8_i32_0 : i32
    %c0_i32_1 = arith.constant 0 : i32
    %3 = arith.addi %2, %c0_i32_1 : i32
    %4 = arith.index_cast %3 : i32 to index
    %5 = memref.load %arg1[%4] : memref<128xi32, #tpu.memory_space<smem>>
    %6 = arith.index_cast %5 : i32 to index
    %c0 = arith.constant 0 : index
    %7 = vector.load %arg2[%6, %c0] : memref<20x512xf32, #tpu.memory_space<vmem>>, vector<1x512xf32>
    %c0_2 = arith.constant 0 : index
    %c0_3 = arith.constant 0 : index
    %8 = vector.load %arg7[%c0_2, %c0_3] : memref<64x512xf32, #tpu.memory_space<vmem>>, vector<1x512xf32>
    tpu.vector_store %arg7[%c0_2, %c0_3], %7 {strides = array<i32>} : memref<64x512xf32, #tpu.memory_space<vmem>>, vector<1x512xf32>,
    %c8_i32_4 = arith.constant 8 : i32
    %9 = arith.muli %arg0, %c8_i32_4 : i32
    %c1_i32 = arith.constant 1 : i32
    %10 = arith.addi %9, %c1_i32 : i32
    %c8_i32_5 = arith.constant 8 : i32
    %11 = arith.muli %10, %c8_i32_5 : i32
    %c0_i32_6 = arith.constant 0 : i32
    %12 = arith.addi %11, %c0_i32_6 : i32
    %13 = arith.index_cast %12 : i32 to index
    %14 = memref.load %arg1[%13] : memref<128xi32, #tpu.memory_space<smem>>
    %15 = arith.index_cast %14 : i32 to index
    %c0_7 = arith.constant 0 : index
    %16 = vector.load %arg2[%15, %c0_7] : memref<20x512xf32, #tpu.memory_space<vmem>>, vector<1x512xf32>
    %c1 = arith.constant 1 : index
    %c0_8 = arith.constant 0 : index
    %17 = vector.load %arg7[%c1, %c0_8] : memref<64x512xf32, #tpu.memory_space<vmem>>, vector<1x512xf32>
    tpu.vector_store %arg7[%c1, %c0_8], %16 {strides = array<i32>} : memref<64x512xf32, #tpu.memory_space<vmem>>, vector<1x512xf32>,
    %c8_i32_9 = arith.constant 8 : i32
    %18 = arith.muli %arg0, %c8_i32_9 : i32
    %c2_i32 = arith.constant 2 : i32
    %19 = arith.addi %18, %c2_i32 : i32
    %c8_i32_10 = arith.constant 8 : i32
    %20 = arith.muli %19, %c8_i32_10 : i32
    %c0_i32_11 = arith.constant 0 : i32
    %21 = arith.addi %20, %c0_i32_11 : i32
    %22 = arith.index_cast %21 : i32 to index
    %23 = memref.load %arg1[%22] : memref<128xi32, #tpu.memory_space<smem>>
    %24 = arith.index_cast %23 : i32 to index
    %c0_12 = arith.constant 0 : index
    %25 = vector.load %arg2[%24, %c0_12] : memref<20x512xf32, #tpu.memory_space<vmem>>, vector<1x512xf32>
    %c2 = arith.constant 2 : index
    %c0_13 = arith.constant 0 : index
    %26 = vector.load %arg7[%c2, %c0_13] : memref<64x512xf32, #tpu.memory_space<vmem>>, vector<1x512xf32>
    tpu.vector_store %arg7[%c2, %c0_13], %25 {strides = array<i32>} : memref<64x512xf32, #tpu.memory_space<vmem>>, vector<1x512xf32>,
    %c8_i32_14 = arith.constant 8 : i32
    %27 = arith.muli %arg0, %c8_i32_14 : i32
    %c3_i32 = arith.constant 3 : i32
    %28 = arith.addi %27, %c3_i32 : i32
    %c8_i32_15 = arith.constant 8 : i32
    %29 = arith.muli %28, %c8_i32_15 : i32
    %c0_i32_16 = arith.constant 0 : i32
    %30 = arith.addi %29, %c0_i32_16 : i32
    %31 = arith.index_cast %30 : i32 to index
    %32 = memref.load %arg1[%31] : memref<128xi32, #tpu.memory_space<smem>>
    %33 = arith.index_cast %32 : i32 to index
    %c0_17 = arith.constant 0 : index
    %34 = vector.load %arg2[%33, %c0_17] : memref<20x512xf32, #tpu.memory_space<vmem>>, vector<1x512xf32>
    %c3 = arith.constant 3 : index
    %c0_18 = arith.constant 0 : index
    %35 = vector.load %arg7[%c3, %c0_18] : memref<64x512xf32, #tpu.memory_space<vmem>>, vector<1x512xf32>
    tpu.vector_store %arg7[%c3, %c0_18], %34 {strides = array<i32>} : memref<64x512xf32, #tpu.memory_space<vmem>>, vector<1x512xf32>,
    %c8_i32_19 = arith.constant 8 : i32
    %36 = arith.muli %arg0, %c8_i32_19 : i32
    %c4_i32 = arith.constant 4 : i32
    %37 = arith.addi %36, %c4_i32 : i32
    %c8_i32_20 = arith.constant 8 : i32
    %38 = arith.muli %37, %c8_i32_20 : i32
    %c0_i32_21 = arith.constant 0 : i32
    %39 = arith.addi %38, %c0_i32_21 : i32
    %40 = arith.index_cast %39 : i32 to index
    %41 = memref.load %arg1[%40] : memref<128xi32, #tpu.memory_space<smem>>
    %42 = arith.index_cast %41 : i32 to index
    %c0_22 = arith.constant 0 : index
    %43 = vector.load %arg2[%42, %c0_22] : memref<20x512xf32, #tpu.memory_space<vmem>>, vector<1x512xf32>
    %c4 = arith.constant 4 : index
    %c0_23 = arith.constant 0 : index
    %44 = vector.load %arg7[%c4, %c0_23] : memref<64x512xf32, #tpu.memory_space<vmem>>, vector<1x512xf32>
    tpu.vector_store %arg7[%c4, %c0_23], %43 {strides = array<i32>} : memref<64x512xf32, #tpu.memory_space<vmem>>, vector<1x512xf32>,
    %c8_i32_24 = arith.constant 8 : i32
    %45 = arith.muli %arg0, %c8_i32_24 : i32
    %c5_i32 = arith.constant 5 : i32
    %46 = arith.addi %45, %c5_i32 : i32
    %c8_i32_25 = arith.constant 8 : i32
    %47 = arith.muli %46, %c8_i32_25 : i32
    %c0_i32_26 = arith.constant 0 : i32
    %48 = arith.addi %47, %c0_i32_26 : i32
    %49 = arith.index_cast %48 : i32 to index
    %50 = memref.load %arg1[%49] : memref<128xi32, #tpu.memory_space<smem>>
    %51 = arith.index_cast %50 : i32 to index
    %c0_27 = arith.constant 0 : index
    %52 = vector.load %arg2[%51, %c0_27] : memref<20x512xf32, #tpu.memory_space<vmem>>, vector<1x512xf32>
    %c5 = arith.constant 5 : index
    %c0_28 = arith.constant 0 : index
    %53 = vector.load %arg7[%c5, %c0_28] : memref<64x512xf32, #tpu.memory_space<vmem>>, vector<1x512xf32>
    tpu.vector_store %arg7[%c5, %c0_28], %52 {strides = array<i32>} : memref<64x512xf32, #tpu.memory_space<vmem>>, vector<1x512xf32>,
    %c8_i32_29 = arith.constant 8 : i32
    %54 = arith.muli %arg0, %c8_i32_29 : i32
    %c6_i32 = arith.constant 6 : i32
    %55 = arith.addi %54, %c6_i32 : i32
    %c8_i32_30 = arith.constant 8 : i32
    %56 = arith.muli %55, %c8_i32_30 : i32
    %c0_i32_31 = arith.constant 0 : i32
    %57 = arith.addi %56, %c0_i32_31 : i32
    %58 = arith.index_cast %57 : i32 to index
    %59 = memref.load %arg1[%58] : memref<128xi32, #tpu.memory_space<smem>>
    %60 = arith.index_cast %59 : i32 to index
    %c0_32 = arith.constant 0 : index
    %61 = vector.load %arg2[%60, %c0_32] : memref<20x512xf32, #tpu.memory_space<vmem>>, vector<1x512xf32>
    %c6 = arith.constant 6 : index
    %c0_33 = arith.constant 0 : index
    %62 = vector.load %arg7[%c6, %c0_33] : memref<64x512xf32, #tpu.memory_space<vmem>>, vector<1x512xf32>
    tpu.vector_store %arg7[%c6, %c0_33], %61 {strides = array<i32>} : memref<64x512xf32, #tpu.memory_space<vmem>>, vector<1x512xf32>,
    %c8_i32_34 = arith.constant 8 : i32
    %63 = arith.muli %arg0, %c8_i32_34 : i32
    %c7_i32 = arith.constant 7 : i32
    %64 = arith.addi %63, %c7_i32 : i32
    %c8_i32_35 = arith.constant 8 : i32
    %65 = arith.muli %64, %c8_i32_35 : i32
    %c0_i32_36 = arith.constant 0 : i32
    %66 = arith.addi %65, %c0_i32_36 : i32
    %67 = arith.index_cast %66 : i32 to index
    %68 = memref.load %arg1[%67] : memref<128xi32, #tpu.memory_space<smem>>
    %69 = arith.index_cast %68 : i32 to index
    %c0_37 = arith.constant 0 : index
    %70 = vector.load %arg2[%69, %c0_37] : memref<20x512xf32, #tpu.memory_space<vmem>>, vector<1x512xf32>
    %c7 = arith.constant 7 : index
    %c0_38 = arith.constant 0 : index
    %71 = vector.load %arg7[%c7, %c0_38] : memref<64x512xf32, #tpu.memory_space<vmem>>, vector<1x512xf32>
    tpu.vector_store %arg7[%c7, %c0_38], %70 {strides = array<i32>} : memref<64x512xf32, #tpu.memory_space<vmem>>, vector<1x512xf32>,
    %c8_i32_39 = arith.constant 8 : i32
    %72 = arith.muli %arg0, %c8_i32_39 : i32
    %c0_i32_40 = arith.constant 0 : i32
    %73 = arith.addi %72, %c0_i32_40 : i32
    %c8_i32_41 = arith.constant 8 : i32
    %74 = arith.muli %73, %c8_i32_41 : i32
    %c1_i32_42 = arith.constant 1 : i32
    %75 = arith.addi %74, %c1_i32_42 : i32
    %76 = arith.index_cast %75 : i32 to index
    %77 = memref.load %arg1[%76] : memref<128xi32, #tpu.memory_space<smem>>
    %78 = arith.index_cast %77 : i32 to index
    %c0_43 = arith.constant 0 : index
    %79 = vector.load %arg2[%78, %c0_43] : memref<20x512xf32, #tpu.memory_space<vmem>>, vector<1x512xf32>
    %c8 = arith.constant 8 : index
    %c0_44 = arith.constant 0 : index
    %80 = vector.load %arg7[%c8, %c0_44] : memref<64x512xf32, #tpu.memory_space<vmem>>, vector<1x512xf32>
    tpu.vector_store %arg7[%c8, %c0_44], %79 {strides = array<i32>} : memref<64x512xf32, #tpu.memory_space<vmem>>, vector<1x512xf32>,
    %c8_i32_45 = arith.constant 8 : i32
    %81 = arith.muli %arg0, %c8_i32_45 : i32
    %c1_i32_46 = arith.constant 1 : i32
    %82 = arith.addi %81, %c1_i32_46 : i32
    %c8_i32_47 = arith.constant 8 : i32
    %83 = arith.muli %82, %c8_i32_47 : i32
    %c1_i32_48 = arith.constant 1 : i32
    %84 = arith.addi %83, %c1_i32_48 : i32
    %85 = arith.index_cast %84 : i32 to index
    %86 = memref.load %arg1[%85] : memref<128xi32, #tpu.memory_space<smem>>
    %87 = arith.index_cast %86 : i32 to index
    %c0_49 = arith.constant 0 : index
    %88 = vector.load %arg2[%87, %c0_49] : memref<20x512xf32, #tpu.memory_space<vmem>>, vector<1x512xf32>
    %c9 = arith.constant 9 : index
    %c0_50 = arith.constant 0 : index
    %89 = vector.load %arg7[%c9, %c0_50] : memref<64x512xf32, #tpu.memory_space<vmem>>, vector<1x512xf32>
    tpu.vector_store %arg7[%c9, %c0_50], %88 {strides = array<i32>} : memref<64x512xf32, #tpu.memory_space<vmem>>, vector<1x512xf32>,
    %c8_i32_51 = arith.constant 8 : i32
    %90 = arith.muli %arg0, %c8_i32_51 : i32
    %c2_i32_52 = arith.constant 2 : i32
    %91 = arith.addi %90, %c2_i32_52 : i32
    %c8_i32_53 = arith.constant 8 : i32
    %92 = arith.muli %91, %c8_i32_53 : i32
    %c1_i32_54 = arith.constant 1 : i32
    %93 = arith.addi %92, %c1_i32_54 : i32
    %94 = arith.index_cast %93 : i32 to index
    %95 = memref.load %arg1[%94] : memref<128xi32, #tpu.memory_space<smem>>
    %96 = arith.index_cast %95 : i32 to index
    %c0_55 = arith.constant 0 : index
    %97 = vector.load %arg2[%96, %c0_55] : memref<20x512xf32, #tpu.memory_space<vmem>>, vector<1x512xf32>
    %c10 = arith.constant 10 : index
    %c0_56 = arith.constant 0 : index
    %98 = vector.load %arg7[%c10, %c0_56] : memref<64x512xf32, #tpu.memory_space<vmem>>, vector<1x512xf32>
    tpu.vector_store %arg7[%c10, %c0_56], %97 {strides = array<i32>} : memref<64x512xf32, #tpu.memory_space<vmem>>, vector<1x512xf32>,
    %c8_i32_57 = arith.constant 8 : i32
    %99 = arith.muli %arg0, %c8_i32_57 : i32
    %c3_i32_58 = arith.constant 3 : i32
    %100 = arith.addi %99, %c3_i32_58 : i32
    %c8_i32_59 = arith.constant 8 : i32
    %101 = arith.muli %100, %c8_i32_59 : i32
    %c1_i32_60 = arith.constant 1 : i32
    %102 = arith.addi %101, %c1_i32_60 : i32
    %103 = arith.index_cast %102 : i32 to index
    %104 = memref.load %arg1[%103] : memref<128xi32, #tpu.memory_space<smem>>
    %105 = arith.index_cast %104 : i32 to index
    %c0_61 = arith.constant 0 : index
    %106 = vector.load %arg2[%105, %c0_61] : memref<20x512xf32, #tpu.memory_space<vmem>>, vector<1x512xf32>
    %c11 = arith.constant 11 : index
    %c0_62 = arith.constant 0 : index
    %107 = vector.load %arg7[%c11, %c0_62] : memref<64x512xf32, #tpu.memory_space<vmem>>, vector<1x512xf32>
    tpu.vector_store %arg7[%c11, %c0_62], %106 {strides = array<i32>} : memref<64x512xf32, #tpu.memory_space<vmem>>, vector<1x512xf32>,
    %c8_i32_63 = arith.constant 8 : i32
    %108 = arith.muli %arg0, %c8_i32_63 : i32
    %c4_i32_64 = arith.constant 4 : i32
    %109 = arith.addi %108, %c4_i32_64 : i32
    %c8_i32_65 = arith.constant 8 : i32
    %110 = arith.muli %109, %c8_i32_65 : i32
    %c1_i32_66 = arith.constant 1 : i32
    %111 = arith.addi %110, %c1_i32_66 : i32
    %112 = arith.index_cast %111 : i32 to index
    %113 = memref.load %arg1[%112] : memref<128xi32, #tpu.memory_space<smem>>
    %114 = arith.index_cast %113 : i32 to index
    %c0_67 = arith.constant 0 : index
    %115 = vector.load %arg2[%114, %c0_67] : memref<20x512xf32, #tpu.memory_space<vmem>>, vector<1x512xf32>
    %c12 = arith.constant 12 : index
    %c0_68 = arith.constant 0 : index
    %116 = vector.load %arg7[%c12, %c0_68] : memref<64x512xf32, #tpu.memory_space<vmem>>, vector<1x512xf32>
    tpu.vector_store %arg7[%c12, %c0_68], %115 {strides = array<i32>} : memref<64x512xf32, #tpu.memory_space<vmem>>, vector<1x512xf32>,
    %c8_i32_69 = arith.constant 8 : i32
    %117 = arith.muli %arg0, %c8_i32_69 : i32
    %c5_i32_70 = arith.constant 5 : i32
    %118 = arith.addi %117, %c5_i32_70 : i32
    %c8_i32_71 = arith.constant 8 : i32
    %119 = arith.muli %118, %c8_i32_71 : i32
    %c1_i32_72 = arith.constant 1 : i32
    %120 = arith.addi %119, %c1_i32_72 : i32
    %121 = arith.index_cast %120 : i32 to index
    %122 = memref.load %arg1[%121] : memref<128xi32, #tpu.memory_space<smem>>
    %123 = arith.index_cast %122 : i32 to index
    %c0_73 = arith.constant 0 : index
    %124 = vector.load %arg2[%123, %c0_73] : memref<20x512xf32, #tpu.memory_space<vmem>>, vector<1x512xf32>
    %c13 = arith.constant 13 : index
    %c0_74 = arith.constant 0 : index
    %125 = vector.load %arg7[%c13, %c0_74] : memref<64x512xf32, #tpu.memory_space<vmem>>, vector<1x512xf32>
    tpu.vector_store %arg7[%c13, %c0_74], %124 {strides = array<i32>} : memref<64x512xf32, #tpu.memory_space<vmem>>, vector<1x512xf32>,
    %c8_i32_75 = arith.constant 8 : i32
    %126 = arith.muli %arg0, %c8_i32_75 : i32
    %c6_i32_76 = arith.constant 6 : i32
    %127 = arith.addi %126, %c6_i32_76 : i32
    %c8_i32_77 = arith.constant 8 : i32
    %128 = arith.muli %127, %c8_i32_77 : i32
    %c1_i32_78 = arith.constant 1 : i32
    %129 = arith.addi %128, %c1_i32_78 : i32
    %130 = arith.index_cast %129 : i32 to index
    %131 = memref.load %arg1[%130] : memref<128xi32, #tpu.memory_space<smem>>
    %132 = arith.index_cast %131 : i32 to index
    %c0_79 = arith.constant 0 : index
    %133 = vector.load %arg2[%132, %c0_79] : memref<20x512xf32, #tpu.memory_space<vmem>>, vector<1x512xf32>
    %c14 = arith.constant 14 : index
    %c0_80 = arith.constant 0 : index
    %134 = vector.load %arg7[%c14, %c0_80] : memref<64x512xf32, #tpu.memory_space<vmem>>, vector<1x512xf32>
    tpu.vector_store %arg7[%c14, %c0_80], %133 {strides = array<i32>} : memref<64x512xf32, #tpu.memory_space<vmem>>, vector<1x512xf32>,
    %c8_i32_81 = arith.constant 8 : i32
    %135 = arith.muli %arg0, %c8_i32_81 : i32
    %c7_i32_82 = arith.constant 7 : i32
    %136 = arith.addi %135, %c7_i32_82 : i32
    %c8_i32_83 = arith.constant 8 : i32
    %137 = arith.muli %136, %c8_i32_83 : i32
    %c1_i32_84 = arith.constant 1 : i32
    %138 = arith.addi %137, %c1_i32_84 : i32
    %139 = arith.index_cast %138 : i32 to index
    %140 = memref.load %arg1[%139] : memref<128xi32, #tpu.memory_space<smem>>
    %141 = arith.index_cast %140 : i32 to index
    %c0_85 = arith.constant 0 : index
    %142 = vector.load %arg2[%141, %c0_85] : memref<20x512xf32, #tpu.memory_space<vmem>>, vector<1x512xf32>
    %c15 = arith.constant 15 : index
    %c0_86 = arith.constant 0 : index
    %143 = vector.load %arg7[%c15, %c0_86] : memref<64x512xf32, #tpu.memory_space<vmem>>, vector<1x512xf32>
    tpu.vector_store %arg7[%c15, %c0_86], %142 {strides = array<i32>} : memref<64x512xf32, #tpu.memory_space<vmem>>, vector<1x512xf32>,
    %c8_i32_87 = arith.constant 8 : i32
    %144 = arith.muli %arg0, %c8_i32_87 : i32
    %c0_i32_88 = arith.constant 0 : i32
    %145 = arith.addi %144, %c0_i32_88 : i32
    %c8_i32_89 = arith.constant 8 : i32
    %146 = arith.muli %145, %c8_i32_89 : i32
    %c2_i32_90 = arith.constant 2 : i32
    %147 = arith.addi %146, %c2_i32_90 : i32
    %148 = arith.index_cast %147 : i32 to index
    %149 = memref.load %arg1[%148] : memref<128xi32, #tpu.memory_space<smem>>
    %150 = arith.index_cast %149 : i32 to index
    %c0_91 = arith.constant 0 : index
    %151 = vector.load %arg2[%150, %c0_91] : memref<20x512xf32, #tpu.memory_space<vmem>>, vector<1x512xf32>
    %c16 = arith.constant 16 : index
    %c0_92 = arith.constant 0 : index
    %152 = vector.load %arg7[%c16, %c0_92] : memref<64x512xf32, #tpu.memory_space<vmem>>, vector<1x512xf32>
    tpu.vector_store %arg7[%c16, %c0_92], %151 {strides = array<i32>} : memref<64x512xf32, #tpu.memory_space<vmem>>, vector<1x512xf32>,
    %c8_i32_93 = arith.constant 8 : i32
    %153 = arith.muli %arg0, %c8_i32_93 : i32
    %c1_i32_94 = arith.constant 1 : i32
    %154 = arith.addi %153, %c1_i32_94 : i32
    %c8_i32_95 = arith.constant 8 : i32
    %155 = arith.muli %154, %c8_i32_95 : i32
    %c2_i32_96 = arith.constant 2 : i32
    %156 = arith.addi %155, %c2_i32_96 : i32
    %157 = arith.index_cast %156 : i32 to index
    %158 = memref.load %arg1[%157] : memref<128xi32, #tpu.memory_space<smem>>
    %159 = arith.index_cast %158 : i32 to index
    %c0_97 = arith.constant 0 : index
    %160 = vector.load %arg2[%159, %c0_97] : memref<20x512xf32, #tpu.memory_space<vmem>>, vector<1x512xf32>
    %c17 = arith.constant 17 : index
    %c0_98 = arith.constant 0 : index
    %161 = vector.load %arg7[%c17, %c0_98] : memref<64x512xf32, #tpu.memory_space<vmem>>, vector<1x512xf32>
    tpu.vector_store %arg7[%c17, %c0_98], %160 {strides = array<i32>} : memref<64x512xf32, #tpu.memory_space<vmem>>, vector<1x512xf32>,
    %c8_i32_99 = arith.constant 8 : i32
    %162 = arith.muli %arg0, %c8_i32_99 : i32
    %c2_i32_100 = arith.constant 2 : i32
    %163 = arith.addi %162, %c2_i32_100 : i32
    %c8_i32_101 = arith.constant 8 : i32
    %164 = arith.muli %163, %c8_i32_101 : i32
    %c2_i32_102 = arith.constant 2 : i32
    %165 = arith.addi %164, %c2_i32_102 : i32
    %166 = arith.index_cast %165 : i32 to index
    %167 = memref.load %arg1[%166] : memref<128xi32, #tpu.memory_space<smem>>
    %168 = arith.index_cast %167 : i32 to index
    %c0_103 = arith.constant 0 : index
    %169 = vector.load %arg2[%168, %c0_103] : memref<20x512xf32, #tpu.memory_space<vmem>>, vector<1x512xf32>
    %c18 = arith.constant 18 : index
    %c0_104 = arith.constant 0 : index
    %170 = vector.load %arg7[%c18, %c0_104] : memref<64x512xf32, #tpu.memory_space<vmem>>, vector<1x512xf32>
    tpu.vector_store %arg7[%c18, %c0_104], %169 {strides = array<i32>} : memref<64x512xf32, #tpu.memory_space<vmem>>, vector<1x512xf32>,
    %c8_i32_105 = arith.constant 8 : i32
    %171 = arith.muli %arg0, %c8_i32_105 : i32
    %c3_i32_106 = arith.constant 3 : i32
    %172 = arith.addi %171, %c3_i32_106 : i32
    %c8_i32_107 = arith.constant 8 : i32
    %173 = arith.muli %172, %c8_i32_107 : i32
    %c2_i32_108 = arith.constant 2 : i32
    %174 = arith.addi %173, %c2_i32_108 : i32
    %175 = arith.index_cast %174 : i32 to index
    %176 = memref.load %arg1[%175] : memref<128xi32, #tpu.memory_space<smem>>
    %177 = arith.index_cast %176 : i32 to index
    %c0_109 = arith.constant 0 : index
    %178 = vector.load %arg2[%177, %c0_109] : memref<20x512xf32, #tpu.memory_space<vmem>>, vector<1x512xf32>
    %c19 = arith.constant 19 : index
    %c0_110 = arith.constant 0 : index
    %179 = vector.load %arg7[%c19, %c0_110] : memref<64x512xf32, #tpu.memory_space<vmem>>, vector<1x512xf32>
    tpu.vector_store %arg7[%c19, %c0_110], %178 {strides = array<i32>} : memref<64x512xf32, #tpu.memory_space<vmem>>, vector<1x512xf32>,
    %c8_i32_111 = arith.constant 8 : i32
    %180 = arith.muli %arg0, %c8_i32_111 : i32
    %c4_i32_112 = arith.constant 4 : i32
    %181 = arith.addi %180, %c4_i32_112 : i32
    %c8_i32_113 = arith.constant 8 : i32
    %182 = arith.muli %181, %c8_i32_113 : i32
    %c2_i32_114 = arith.constant 2 : i32
    %183 = arith.addi %182, %c2_i32_114 : i32
    %184 = arith.index_cast %183 : i32 to index
    %185 = memref.load %arg1[%184] : memref<128xi32, #tpu.memory_space<smem>>
    %186 = arith.index_cast %185 : i32 to index
    %c0_115 = arith.constant 0 : index
    %187 = vector.load %arg2[%186, %c0_115] : memref<20x512xf32, #tpu.memory_space<vmem>>, vector<1x512xf32>
    %c20 = arith.constant 20 : index
    %c0_116 = arith.constant 0 : index
    %188 = vector.load %arg7[%c20, %c0_116] : memref<64x512xf32, #tpu.memory_space<vmem>>, vector<1x512xf32>
    tpu.vector_store %arg7[%c20, %c0_116], %187 {strides = array<i32>} : memref<64x512xf32, #tpu.memory_space<vmem>>, vector<1x512xf32>,
    %c8_i32_117 = arith.constant 8 : i32
    %189 = arith.muli %arg0, %c8_i32_117 : i32
    %c5_i32_118 = arith.constant 5 : i32
    %190 = arith.addi %189, %c5_i32_118 : i32
    %c8_i32_119 = arith.constant 8 : i32
    %191 = arith.muli %190, %c8_i32_119 : i32
    %c2_i32_120 = arith.constant 2 : i32
    %192 = arith.addi %191, %c2_i32_120 : i32
    %193 = arith.index_cast %192 : i32 to index
    %194 = memref.load %arg1[%193] : memref<128xi32, #tpu.memory_space<smem>>
    %195 = arith.index_cast %194 : i32 to index
    %c0_121 = arith.constant 0 : index
    %196 = vector.load %arg2[%195, %c0_121] : memref<20x512xf32, #tpu.memory_space<vmem>>, vector<1x512xf32>
    %c21 = arith.constant 21 : index
    %c0_122 = arith.constant 0 : index
    %197 = vector.load %arg7[%c21, %c0_122] : memref<64x512xf32, #tpu.memory_space<vmem>>, vector<1x512xf32>
    tpu.vector_store %arg7[%c21, %c0_122], %196 {strides = array<i32>} : memref<64x512xf32, #tpu.memory_space<vmem>>, vector<1x512xf32>,
    %c8_i32_123 = arith.constant 8 : i32
    %198 = arith.muli %arg0, %c8_i32_123 : i32
    %c6_i32_124 = arith.constant 6 : i32
    %199 = arith.addi %198, %c6_i32_124 : i32
    %c8_i32_125 = arith.constant 8 : i32
    %200 = arith.muli %199, %c8_i32_125 : i32
    %c2_i32_126 = arith.constant 2 : i32
    %201 = arith.addi %200, %c2_i32_126 : i32
    %202 = arith.index_cast %201 : i32 to index
    %203 = memref.load %arg1[%202] : memref<128xi32, #tpu.memory_space<smem>>
    %204 = arith.index_cast %203 : i32 to index
    %c0_127 = arith.constant 0 : index
    %205 = vector.load %arg2[%204, %c0_127] : memref<20x512xf32, #tpu.memory_space<vmem>>, vector<1x512xf32>
    %c22 = arith.constant 22 : index
    %c0_128 = arith.constant 0 : index
    %206 = vector.load %arg7[%c22, %c0_128] : memref<64x512xf32, #tpu.memory_space<vmem>>, vector<1x512xf32>
    tpu.vector_store %arg7[%c22, %c0_128], %205 {strides = array<i32>} : memref<64x512xf32, #tpu.memory_space<vmem>>, vector<1x512xf32>,
    %c8_i32_129 = arith.constant 8 : i32
    %207 = arith.muli %arg0, %c8_i32_129 : i32
    %c7_i32_130 = arith.constant 7 : i32
    %208 = arith.addi %207, %c7_i32_130 : i32
    %c8_i32_131 = arith.constant 8 : i32
    %209 = arith.muli %208, %c8_i32_131 : i32
    %c2_i32_132 = arith.constant 2 : i32
    %210 = arith.addi %209, %c2_i32_132 : i32
    %211 = arith.index_cast %210 : i32 to index
    %212 = memref.load %arg1[%211] : memref<128xi32, #tpu.memory_space<smem>>
    %213 = arith.index_cast %212 : i32 to index
    %c0_133 = arith.constant 0 : index
    %214 = vector.load %arg2[%213, %c0_133] : memref<20x512xf32, #tpu.memory_space<vmem>>, vector<1x512xf32>
    %c23 = arith.constant 23 : index
    %c0_134 = arith.constant 0 : index
    %215 = vector.load %arg7[%c23, %c0_134] : memref<64x512xf32, #tpu.memory_space<vmem>>, vector<1x512xf32>
    tpu.vector_store %arg7[%c23, %c0_134], %214 {strides = array<i32>} : memref<64x512xf32, #tpu.memory_space<vmem>>, vector<1x512xf32>,
    %c8_i32_135 = arith.constant 8 : i32
    %216 = arith.muli %arg0, %c8_i32_135 : i32
    %c0_i32_136 = arith.constant 0 : i32
    %217 = arith.addi %216, %c0_i32_136 : i32
    %c8_i32_137 = arith.constant 8 : i32
    %218 = arith.muli %217, %c8_i32_137 : i32
    %c3_i32_138 = arith.constant 3 : i32
    %219 = arith.addi %218, %c3_i32_138 : i32
    %220 = arith.index_cast %219 : i32 to index
    %221 = memref.load %arg1[%220] : memref<128xi32, #tpu.memory_space<smem>>
    %222 = arith.index_cast %221 : i32 to index
    %c0_139 = arith.constant 0 : index
    %223 = vector.load %arg2[%222, %c0_139] : memref<20x512xf32, #tpu.memory_space<vmem>>, vector<1x512xf32>
    %c24 = arith.constant 24 : index
    %c0_140 = arith.constant 0 : index
    %224 = vector.load %arg7[%c24, %c0_140] : memref<64x512xf32, #tpu.memory_space<vmem>>, vector<1x512xf32>
    tpu.vector_store %arg7[%c24, %c0_140], %223 {strides = array<i32>} : memref<64x512xf32, #tpu.memory_space<vmem>>, vector<1x512xf32>,
    %c8_i32_141 = arith.constant 8 : i32
    %225 = arith.muli %arg0, %c8_i32_141 : i32
    %c1_i32_142 = arith.constant 1 : i32
    %226 = arith.addi %225, %c1_i32_142 : i32
    %c8_i32_143 = arith.constant 8 : i32
    %227 = arith.muli %226, %c8_i32_143 : i32
    %c3_i32_144 = arith.constant 3 : i32
    %228 = arith.addi %227, %c3_i32_144 : i32
    %229 = arith.index_cast %228 : i32 to index
    %230 = memref.load %arg1[%229] : memref<128xi32, #tpu.memory_space<smem>>
    %231 = arith.index_cast %230 : i32 to index
    %c0_145 = arith.constant 0 : index
    %232 = vector.load %arg2[%231, %c0_145] : memref<20x512xf32, #tpu.memory_space<vmem>>, vector<1x512xf32>
    %c25 = arith.constant 25 : index
    %c0_146 = arith.constant 0 : index
    %233 = vector.load %arg7[%c25, %c0_146] : memref<64x512xf32, #tpu.memory_space<vmem>>, vector<1x512xf32>
    tpu.vector_store %arg7[%c25, %c0_146], %232 {strides = array<i32>} : memref<64x512xf32, #tpu.memory_space<vmem>>, vector<1x512xf32>,
    %c8_i32_147 = arith.constant 8 : i32
    %234 = arith.muli %arg0, %c8_i32_147 : i32
    %c2_i32_148 = arith.constant 2 : i32
    %235 = arith.addi %234, %c2_i32_148 : i32
    %c8_i32_149 = arith.constant 8 : i32
    %236 = arith.muli %235, %c8_i32_149 : i32
    %c3_i32_150 = arith.constant 3 : i32
    %237 = arith.addi %236, %c3_i32_150 : i32
    %238 = arith.index_cast %237 : i32 to index
    %239 = memref.load %arg1[%238] : memref<128xi32, #tpu.memory_space<smem>>
    %240 = arith.index_cast %239 : i32 to index
    %c0_151 = arith.constant 0 : index
    %241 = vector.load %arg2[%240, %c0_151] : memref<20x512xf32, #tpu.memory_space<vmem>>, vector<1x512xf32>
    %c26 = arith.constant 26 : index
    %c0_152 = arith.constant 0 : index
    %242 = vector.load %arg7[%c26, %c0_152] : memref<64x512xf32, #tpu.memory_space<vmem>>, vector<1x512xf32>
    tpu.vector_store %arg7[%c26, %c0_152], %241 {strides = array<i32>} : memref<64x512xf32, #tpu.memory_space<vmem>>, vector<1x512xf32>,
    %c8_i32_153 = arith.constant 8 : i32
    %243 = arith.muli %arg0, %c8_i32_153 : i32
    %c3_i32_154 = arith.constant 3 : i32
    %244 = arith.addi %243, %c3_i32_154 : i32
    %c8_i32_155 = arith.constant 8 : i32
    %245 = arith.muli %244, %c8_i32_155 : i32
    %c3_i32_156 = arith.constant 3 : i32
    %246 = arith.addi %245, %c3_i32_156 : i32
    %247 = arith.index_cast %246 : i32 to index
    %248 = memref.load %arg1[%247] : memref<128xi32, #tpu.memory_space<smem>>
    %249 = arith.index_cast %248 : i32 to index
    %c0_157 = arith.constant 0 : index
    %250 = vector.load %arg2[%249, %c0_157] : memref<20x512xf32, #tpu.memory_space<vmem>>, vector<1x512xf32>
    %c27 = arith.constant 27 : index
    %c0_158 = arith.constant 0 : index
    %251 = vector.load %arg7[%c27, %c0_158] : memref<64x512xf32, #tpu.memory_space<vmem>>, vector<1x512xf32>
    tpu.vector_store %arg7[%c27, %c0_158], %250 {strides = array<i32>} : memref<64x512xf32, #tpu.memory_space<vmem>>, vector<1x512xf32>,
    %c8_i32_159 = arith.constant 8 : i32
    %252 = arith.muli %arg0, %c8_i32_159 : i32
    %c4_i32_160 = arith.constant 4 : i32
    %253 = arith.addi %252, %c4_i32_160 : i32
    %c8_i32_161 = arith.constant 8 : i32
    %254 = arith.muli %253, %c8_i32_161 : i32
    %c3_i32_162 = arith.constant 3 : i32
    %255 = arith.addi %254, %c3_i32_162 : i32
    %256 = arith.index_cast %255 : i32 to index
    %257 = memref.load %arg1[%256] : memref<128xi32, #tpu.memory_space<smem>>
    %258 = arith.index_cast %257 : i32 to index
    %c0_163 = arith.constant 0 : index
    %259 = vector.load %arg2[%258, %c0_163] : memref<20x512xf32, #tpu.memory_space<vmem>>, vector<1x512xf32>
    %c28 = arith.constant 28 : index
    %c0_164 = arith.constant 0 : index
    %260 = vector.load %arg7[%c28, %c0_164] : memref<64x512xf32, #tpu.memory_space<vmem>>, vector<1x512xf32>
    tpu.vector_store %arg7[%c28, %c0_164], %259 {strides = array<i32>} : memref<64x512xf32, #tpu.memory_space<vmem>>, vector<1x512xf32>,
    %c8_i32_165 = arith.constant 8 : i32
    %261 = arith.muli %arg0, %c8_i32_165 : i32
    %c5_i32_166 = arith.constant 5 : i32
    %262 = arith.addi %261, %c5_i32_166 : i32
    %c8_i32_167 = arith.constant 8 : i32
    %263 = arith.muli %262, %c8_i32_167 : i32
    %c3_i32_168 = arith.constant 3 : i32
    %264 = arith.addi %263, %c3_i32_168 : i32
    %265 = arith.index_cast %264 : i32 to index
    %266 = memref.load %arg1[%265] : memref<128xi32, #tpu.memory_space<smem>>
    %267 = arith.index_cast %266 : i32 to index
    %c0_169 = arith.constant 0 : index
    %268 = vector.load %arg2[%267, %c0_169] : memref<20x512xf32, #tpu.memory_space<vmem>>, vector<1x512xf32>
    %c29 = arith.constant 29 : index
    %c0_170 = arith.constant 0 : index
    %269 = vector.load %arg7[%c29, %c0_170] : memref<64x512xf32, #tpu.memory_space<vmem>>, vector<1x512xf32>
    tpu.vector_store %arg7[%c29, %c0_170], %268 {strides = array<i32>} : memref<64x512xf32, #tpu.memory_space<vmem>>, vector<1x512xf32>,
    %c8_i32_171 = arith.constant 8 : i32
    %270 = arith.muli %arg0, %c8_i32_171 : i32
    %c6_i32_172 = arith.constant 6 : i32
    %271 = arith.addi %270, %c6_i32_172 : i32
    %c8_i32_173 = arith.constant 8 : i32
    %272 = arith.muli %271, %c8_i32_173 : i32
    %c3_i32_174 = arith.constant 3 : i32
    %273 = arith.addi %272, %c3_i32_174 : i32
    %274 = arith.index_cast %273 : i32 to index
    %275 = memref.load %arg1[%274] : memref<128xi32, #tpu.memory_space<smem>>
    %276 = arith.index_cast %275 : i32 to index
    %c0_175 = arith.constant 0 : index
    %277 = vector.load %arg2[%276, %c0_175] : memref<20x512xf32, #tpu.memory_space<vmem>>, vector<1x512xf32>
    %c30 = arith.constant 30 : index
    %c0_176 = arith.constant 0 : index
    %278 = vector.load %arg7[%c30, %c0_176] : memref<64x512xf32, #tpu.memory_space<vmem>>, vector<1x512xf32>
    tpu.vector_store %arg7[%c30, %c0_176], %277 {strides = array<i32>} : memref<64x512xf32, #tpu.memory_space<vmem>>, vector<1x512xf32>,
    %c8_i32_177 = arith.constant 8 : i32
    %279 = arith.muli %arg0, %c8_i32_177 : i32
    %c7_i32_178 = arith.constant 7 : i32
    %280 = arith.addi %279, %c7_i32_178 : i32
    %c8_i32_179 = arith.constant 8 : i32
    %281 = arith.muli %280, %c8_i32_179 : i32
    %c3_i32_180 = arith.constant 3 : i32
    %282 = arith.addi %281, %c3_i32_180 : i32
    %283 = arith.index_cast %282 : i32 to index
    %284 = memref.load %arg1[%283] : memref<128xi32, #tpu.memory_space<smem>>
    %285 = arith.index_cast %284 : i32 to index
    %c0_181 = arith.constant 0 : index
    %286 = vector.load %arg2[%285, %c0_181] : memref<20x512xf32, #tpu.memory_space<vmem>>, vector<1x512xf32>
    %c31 = arith.constant 31 : index
    %c0_182 = arith.constant 0 : index
    %287 = vector.load %arg7[%c31, %c0_182] : memref<64x512xf32, #tpu.memory_space<vmem>>, vector<1x512xf32>
    tpu.vector_store %arg7[%c31, %c0_182], %286 {strides = array<i32>} : memref<64x512xf32, #tpu.memory_space<vmem>>, vector<1x512xf32>,
    %c8_i32_183 = arith.constant 8 : i32
    %288 = arith.muli %arg0, %c8_i32_183 : i32
    %c0_i32_184 = arith.constant 0 : i32
    %289 = arith.addi %288, %c0_i32_184 : i32
    %c8_i32_185 = arith.constant 8 : i32
    %290 = arith.muli %289, %c8_i32_185 : i32
    %c4_i32_186 = arith.constant 4 : i32
    %291 = arith.addi %290, %c4_i32_186 : i32
    %292 = arith.index_cast %291 : i32 to index
    %293 = memref.load %arg1[%292] : memref<128xi32, #tpu.memory_space<smem>>
    %294 = arith.index_cast %293 : i32 to index
    %c0_187 = arith.constant 0 : index
    %295 = vector.load %arg2[%294, %c0_187] : memref<20x512xf32, #tpu.memory_space<vmem>>, vector<1x512xf32>
    %c32 = arith.constant 32 : index
    %c0_188 = arith.constant 0 : index
    %296 = vector.load %arg7[%c32, %c0_188] : memref<64x512xf32, #tpu.memory_space<vmem>>, vector<1x512xf32>
    tpu.vector_store %arg7[%c32, %c0_188], %295 {strides = array<i32>} : memref<64x512xf32, #tpu.memory_space<vmem>>, vector<1x512xf32>,
    %c8_i32_189 = arith.constant 8 : i32
    %297 = arith.muli %arg0, %c8_i32_189 : i32
    %c1_i32_190 = arith.constant 1 : i32
    %298 = arith.addi %297, %c1_i32_190 : i32
    %c8_i32_191 = arith.constant 8 : i32
    %299 = arith.muli %298, %c8_i32_191 : i32
    %c4_i32_192 = arith.constant 4 : i32
    %300 = arith.addi %299, %c4_i32_192 : i32
    %301 = arith.index_cast %300 : i32 to index
    %302 = memref.load %arg1[%301] : memref<128xi32, #tpu.memory_space<smem>>
    %303 = arith.index_cast %302 : i32 to index
    %c0_193 = arith.constant 0 : index
    %304 = vector.load %arg2[%303, %c0_193] : memref<20x512xf32, #tpu.memory_space<vmem>>, vector<1x512xf32>
    %c33 = arith.constant 33 : index
    %c0_194 = arith.constant 0 : index
    %305 = vector.load %arg7[%c33, %c0_194] : memref<64x512xf32, #tpu.memory_space<vmem>>, vector<1x512xf32>
    tpu.vector_store %arg7[%c33, %c0_194], %304 {strides = array<i32>} : memref<64x512xf32, #tpu.memory_space<vmem>>, vector<1x512xf32>,
    %c8_i32_195 = arith.constant 8 : i32
    %306 = arith.muli %arg0, %c8_i32_195 : i32
    %c2_i32_196 = arith.constant 2 : i32
    %307 = arith.addi %306, %c2_i32_196 : i32
    %c8_i32_197 = arith.constant 8 : i32
    %308 = arith.muli %307, %c8_i32_197 : i32
    %c4_i32_198 = arith.constant 4 : i32
    %309 = arith.addi %308, %c4_i32_198 : i32
    %310 = arith.index_cast %309 : i32 to index
    %311 = memref.load %arg1[%310] : memref<128xi32, #tpu.memory_space<smem>>
    %312 = arith.index_cast %311 : i32 to index
    %c0_199 = arith.constant 0 : index
    %313 = vector.load %arg2[%312, %c0_199] : memref<20x512xf32, #tpu.memory_space<vmem>>, vector<1x512xf32>
    %c34 = arith.constant 34 : index
    %c0_200 = arith.constant 0 : index
    %314 = vector.load %arg7[%c34, %c0_200] : memref<64x512xf32, #tpu.memory_space<vmem>>, vector<1x512xf32>
    tpu.vector_store %arg7[%c34, %c0_200], %313 {strides = array<i32>} : memref<64x512xf32, #tpu.memory_space<vmem>>, vector<1x512xf32>,
    %c8_i32_201 = arith.constant 8 : i32
    %315 = arith.muli %arg0, %c8_i32_201 : i32
    %c3_i32_202 = arith.constant 3 : i32
    %316 = arith.addi %315, %c3_i32_202 : i32
    %c8_i32_203 = arith.constant 8 : i32
    %317 = arith.muli %316, %c8_i32_203 : i32
    %c4_i32_204 = arith.constant 4 : i32
    %318 = arith.addi %317, %c4_i32_204 : i32
    %319 = arith.index_cast %318 : i32 to index
    %320 = memref.load %arg1[%319] : memref<128xi32, #tpu.memory_space<smem>>
    %321 = arith.index_cast %320 : i32 to index
    %c0_205 = arith.constant 0 : index
    %322 = vector.load %arg2[%321, %c0_205] : memref<20x512xf32, #tpu.memory_space<vmem>>, vector<1x512xf32>
    %c35 = arith.constant 35 : index
    %c0_206 = arith.constant 0 : index
    %323 = vector.load %arg7[%c35, %c0_206] : memref<64x512xf32, #tpu.memory_space<vmem>>, vector<1x512xf32>
    tpu.vector_store %arg7[%c35, %c0_206], %322 {strides = array<i32>} : memref<64x512xf32, #tpu.memory_space<vmem>>, vector<1x512xf32>,
    %c8_i32_207 = arith.constant 8 : i32
    %324 = arith.muli %arg0, %c8_i32_207 : i32
    %c4_i32_208 = arith.constant 4 : i32
    %325 = arith.addi %324, %c4_i32_208 : i32
    %c8_i32_209 = arith.constant 8 : i32
    %326 = arith.muli %325, %c8_i32_209 : i32
    %c4_i32_210 = arith.constant 4 : i32
    %327 = arith.addi %326, %c4_i32_210 : i32
    %328 = arith.index_cast %327 : i32 to index
    %329 = memref.load %arg1[%328] : memref<128xi32, #tpu.memory_space<smem>>
    %330 = arith.index_cast %329 : i32 to index
    %c0_211 = arith.constant 0 : index
    %331 = vector.load %arg2[%330, %c0_211] : memref<20x512xf32, #tpu.memory_space<vmem>>, vector<1x512xf32>
    %c36 = arith.constant 36 : index
    %c0_212 = arith.constant 0 : index
    %332 = vector.load %arg7[%c36, %c0_212] : memref<64x512xf32, #tpu.memory_space<vmem>>, vector<1x512xf32>
    tpu.vector_store %arg7[%c36, %c0_212], %331 {strides = array<i32>} : memref<64x512xf32, #tpu.memory_space<vmem>>, vector<1x512xf32>,
    %c8_i32_213 = arith.constant 8 : i32
    %333 = arith.muli %arg0, %c8_i32_213 : i32
    %c5_i32_214 = arith.constant 5 : i32
    %334 = arith.addi %333, %c5_i32_214 : i32
    %c8_i32_215 = arith.constant 8 : i32
    %335 = arith.muli %334, %c8_i32_215 : i32
    %c4_i32_216 = arith.constant 4 : i32
    %336 = arith.addi %335, %c4_i32_216 : i32
    %337 = arith.index_cast %336 : i32 to index
    %338 = memref.load %arg1[%337] : memref<128xi32, #tpu.memory_space<smem>>
    %339 = arith.index_cast %338 : i32 to index
    %c0_217 = arith.constant 0 : index
    %340 = vector.load %arg2[%339, %c0_217] : memref<20x512xf32, #tpu.memory_space<vmem>>, vector<1x512xf32>
    %c37 = arith.constant 37 : index
    %c0_218 = arith.constant 0 : index
    %341 = vector.load %arg7[%c37, %c0_218] : memref<64x512xf32, #tpu.memory_space<vmem>>, vector<1x512xf32>
    tpu.vector_store %arg7[%c37, %c0_218], %340 {strides = array<i32>} : memref<64x512xf32, #tpu.memory_space<vmem>>, vector<1x512xf32>,
    %c8_i32_219 = arith.constant 8 : i32
    %342 = arith.muli %arg0, %c8_i32_219 : i32
    %c6_i32_220 = arith.constant 6 : i32
    %343 = arith.addi %342, %c6_i32_220 : i32
    %c8_i32_221 = arith.constant 8 : i32
    %344 = arith.muli %343, %c8_i32_221 : i32
    %c4_i32_222 = arith.constant 4 : i32
    %345 = arith.addi %344, %c4_i32_222 : i32
    %346 = arith.index_cast %345 : i32 to index
    %347 = memref.load %arg1[%346] : memref<128xi32, #tpu.memory_space<smem>>
    %348 = arith.index_cast %347 : i32 to index
    %c0_223 = arith.constant 0 : index
    %349 = vector.load %arg2[%348, %c0_223] : memref<20x512xf32, #tpu.memory_space<vmem>>, vector<1x512xf32>
    %c38 = arith.constant 38 : index
    %c0_224 = arith.constant 0 : index
    %350 = vector.load %arg7[%c38, %c0_224] : memref<64x512xf32, #tpu.memory_space<vmem>>, vector<1x512xf32>
    tpu.vector_store %arg7[%c38, %c0_224], %349 {strides = array<i32>} : memref<64x512xf32, #tpu.memory_space<vmem>>, vector<1x512xf32>,
    %c8_i32_225 = arith.constant 8 : i32
    %351 = arith.muli %arg0, %c8_i32_225 : i32
    %c7_i32_226 = arith.constant 7 : i32
    %352 = arith.addi %351, %c7_i32_226 : i32
    %c8_i32_227 = arith.constant 8 : i32
    %353 = arith.muli %352, %c8_i32_227 : i32
    %c4_i32_228 = arith.constant 4 : i32
    %354 = arith.addi %353, %c4_i32_228 : i32
    %355 = arith.index_cast %354 : i32 to index
    %356 = memref.load %arg1[%355] : memref<128xi32, #tpu.memory_space<smem>>
    %357 = arith.index_cast %356 : i32 to index
    %c0_229 = arith.constant 0 : index
    %358 = vector.load %arg2[%357, %c0_229] : memref<20x512xf32, #tpu.memory_space<vmem>>, vector<1x512xf32>
    %c39 = arith.constant 39 : index
    %c0_230 = arith.constant 0 : index
    %359 = vector.load %arg7[%c39, %c0_230] : memref<64x512xf32, #tpu.memory_space<vmem>>, vector<1x512xf32>
    tpu.vector_store %arg7[%c39, %c0_230], %358 {strides = array<i32>} : memref<64x512xf32, #tpu.memory_space<vmem>>, vector<1x512xf32>,
    %c8_i32_231 = arith.constant 8 : i32
    %360 = arith.muli %arg0, %c8_i32_231 : i32
    %c0_i32_232 = arith.constant 0 : i32
    %361 = arith.addi %360, %c0_i32_232 : i32
    %c8_i32_233 = arith.constant 8 : i32
    %362 = arith.muli %361, %c8_i32_233 : i32
    %c5_i32_234 = arith.constant 5 : i32
    %363 = arith.addi %362, %c5_i32_234 : i32
    %364 = arith.index_cast %363 : i32 to index
    %365 = memref.load %arg1[%364] : memref<128xi32, #tpu.memory_space<smem>>
    %366 = arith.index_cast %365 : i32 to index
    %c0_235 = arith.constant 0 : index
    %367 = vector.load %arg2[%366, %c0_235] : memref<20x512xf32, #tpu.memory_space<vmem>>, vector<1x512xf32>
    %c40 = arith.constant 40 : index
    %c0_236 = arith.constant 0 : index
    %368 = vector.load %arg7[%c40, %c0_236] : memref<64x512xf32, #tpu.memory_space<vmem>>, vector<1x512xf32>
    tpu.vector_store %arg7[%c40, %c0_236], %367 {strides = array<i32>} : memref<64x512xf32, #tpu.memory_space<vmem>>, vector<1x512xf32>,
    %c8_i32_237 = arith.constant 8 : i32
    %369 = arith.muli %arg0, %c8_i32_237 : i32
    %c1_i32_238 = arith.constant 1 : i32
    %370 = arith.addi %369, %c1_i32_238 : i32
    %c8_i32_239 = arith.constant 8 : i32
    %371 = arith.muli %370, %c8_i32_239 : i32
    %c5_i32_240 = arith.constant 5 : i32
    %372 = arith.addi %371, %c5_i32_240 : i32
    %373 = arith.index_cast %372 : i32 to index
    %374 = memref.load %arg1[%373] : memref<128xi32, #tpu.memory_space<smem>>
    %375 = arith.index_cast %374 : i32 to index
    %c0_241 = arith.constant 0 : index
    %376 = vector.load %arg2[%375, %c0_241] : memref<20x512xf32, #tpu.memory_space<vmem>>, vector<1x512xf32>
    %c41 = arith.constant 41 : index
    %c0_242 = arith.constant 0 : index
    %377 = vector.load %arg7[%c41, %c0_242] : memref<64x512xf32, #tpu.memory_space<vmem>>, vector<1x512xf32>
    tpu.vector_store %arg7[%c41, %c0_242], %376 {strides = array<i32>} : memref<64x512xf32, #tpu.memory_space<vmem>>, vector<1x512xf32>,
    %c8_i32_243 = arith.constant 8 : i32
    %378 = arith.muli %arg0, %c8_i32_243 : i32
    %c2_i32_244 = arith.constant 2 : i32
    %379 = arith.addi %378, %c2_i32_244 : i32
    %c8_i32_245 = arith.constant 8 : i32
    %380 = arith.muli %379, %c8_i32_245 : i32
    %c5_i32_246 = arith.constant 5 : i32
    %381 = arith.addi %380, %c5_i32_246 : i32
    %382 = arith.index_cast %381 : i32 to index
    %383 = memref.load %arg1[%382] : memref<128xi32, #tpu.memory_space<smem>>
    %384 = arith.index_cast %383 : i32 to index
    %c0_247 = arith.constant 0 : index
    %385 = vector.load %arg2[%384, %c0_247] : memref<20x512xf32, #tpu.memory_space<vmem>>, vector<1x512xf32>
    %c42 = arith.constant 42 : index
    %c0_248 = arith.constant 0 : index
    %386 = vector.load %arg7[%c42, %c0_248] : memref<64x512xf32, #tpu.memory_space<vmem>>, vector<1x512xf32>
    tpu.vector_store %arg7[%c42, %c0_248], %385 {strides = array<i32>} : memref<64x512xf32, #tpu.memory_space<vmem>>, vector<1x512xf32>,
    %c8_i32_249 = arith.constant 8 : i32
    %387 = arith.muli %arg0, %c8_i32_249 : i32
    %c3_i32_250 = arith.constant 3 : i32
    %388 = arith.addi %387, %c3_i32_250 : i32
    %c8_i32_251 = arith.constant 8 : i32
    %389 = arith.muli %388, %c8_i32_251 : i32
    %c5_i32_252 = arith.constant 5 : i32
    %390 = arith.addi %389, %c5_i32_252 : i32
    %391 = arith.index_cast %390 : i32 to index
    %392 = memref.load %arg1[%391] : memref<128xi32, #tpu.memory_space<smem>>
    %393 = arith.index_cast %392 : i32 to index
    %c0_253 = arith.constant 0 : index
    %394 = vector.load %arg2[%393, %c0_253] : memref<20x512xf32, #tpu.memory_space<vmem>>, vector<1x512xf32>
    %c43 = arith.constant 43 : index
    %c0_254 = arith.constant 0 : index
    %395 = vector.load %arg7[%c43, %c0_254] : memref<64x512xf32, #tpu.memory_space<vmem>>, vector<1x512xf32>
    tpu.vector_store %arg7[%c43, %c0_254], %394 {strides = array<i32>} : memref<64x512xf32, #tpu.memory_space<vmem>>, vector<1x512xf32>,
    %c8_i32_255 = arith.constant 8 : i32
    %396 = arith.muli %arg0, %c8_i32_255 : i32
    %c4_i32_256 = arith.constant 4 : i32
    %397 = arith.addi %396, %c4_i32_256 : i32
    %c8_i32_257 = arith.constant 8 : i32
    %398 = arith.muli %397, %c8_i32_257 : i32
    %c5_i32_258 = arith.constant 5 : i32
    %399 = arith.addi %398, %c5_i32_258 : i32
    %400 = arith.index_cast %399 : i32 to index
    %401 = memref.load %arg1[%400] : memref<128xi32, #tpu.memory_space<smem>>
    %402 = arith.index_cast %401 : i32 to index
    %c0_259 = arith.constant 0 : index
    %403 = vector.load %arg2[%402, %c0_259] : memref<20x512xf32, #tpu.memory_space<vmem>>, vector<1x512xf32>
    %c44 = arith.constant 44 : index
    %c0_260 = arith.constant 0 : index
    %404 = vector.load %arg7[%c44, %c0_260] : memref<64x512xf32, #tpu.memory_space<vmem>>, vector<1x512xf32>
    tpu.vector_store %arg7[%c44, %c0_260], %403 {strides = array<i32>} : memref<64x512xf32, #tpu.memory_space<vmem>>, vector<1x512xf32>,
    %c8_i32_261 = arith.constant 8 : i32
    %405 = arith.muli %arg0, %c8_i32_261 : i32
    %c5_i32_262 = arith.constant 5 : i32
    %406 = arith.addi %405, %c5_i32_262 : i32
    %c8_i32_263 = arith.constant 8 : i32
    %407 = arith.muli %406, %c8_i32_263 : i32
    %c5_i32_264 = arith.constant 5 : i32
    %408 = arith.addi %407, %c5_i32_264 : i32
    %409 = arith.index_cast %408 : i32 to index
    %410 = memref.load %arg1[%409] : memref<128xi32, #tpu.memory_space<smem>>
    %411 = arith.index_cast %410 : i32 to index
    %c0_265 = arith.constant 0 : index
    %412 = vector.load %arg2[%411, %c0_265] : memref<20x512xf32, #tpu.memory_space<vmem>>, vector<1x512xf32>
    %c45 = arith.constant 45 : index
    %c0_266 = arith.constant 0 : index
    %413 = vector.load %arg7[%c45, %c0_266] : memref<64x512xf32, #tpu.memory_space<vmem>>, vector<1x512xf32>
    tpu.vector_store %arg7[%c45, %c0_266], %412 {strides = array<i32>} : memref<64x512xf32, #tpu.memory_space<vmem>>, vector<1x512xf32>,
    %c8_i32_267 = arith.constant 8 : i32
    %414 = arith.muli %arg0, %c8_i32_267 : i32
    %c6_i32_268 = arith.constant 6 : i32
    %415 = arith.addi %414, %c6_i32_268 : i32
    %c8_i32_269 = arith.constant 8 : i32
    %416 = arith.muli %415, %c8_i32_269 : i32
    %c5_i32_270 = arith.constant 5 : i32
    %417 = arith.addi %416, %c5_i32_270 : i32
    %418 = arith.index_cast %417 : i32 to index
    %419 = memref.load %arg1[%418] : memref<128xi32, #tpu.memory_space<smem>>
    %420 = arith.index_cast %419 : i32 to index
    %c0_271 = arith.constant 0 : index
    %421 = vector.load %arg2[%420, %c0_271] : memref<20x512xf32, #tpu.memory_space<vmem>>, vector<1x512xf32>
    %c46 = arith.constant 46 : index
    %c0_272 = arith.constant 0 : index
    %422 = vector.load %arg7[%c46, %c0_272] : memref<64x512xf32, #tpu.memory_space<vmem>>, vector<1x512xf32>
    tpu.vector_store %arg7[%c46, %c0_272], %421 {strides = array<i32>} : memref<64x512xf32, #tpu.memory_space<vmem>>, vector<1x512xf32>,
    %c8_i32_273 = arith.constant 8 : i32
    %423 = arith.muli %arg0, %c8_i32_273 : i32
    %c7_i32_274 = arith.constant 7 : i32
    %424 = arith.addi %423, %c7_i32_274 : i32
    %c8_i32_275 = arith.constant 8 : i32
    %425 = arith.muli %424, %c8_i32_275 : i32
    %c5_i32_276 = arith.constant 5 : i32
    %426 = arith.addi %425, %c5_i32_276 : i32
    %427 = arith.index_cast %426 : i32 to index
    %428 = memref.load %arg1[%427] : memref<128xi32, #tpu.memory_space<smem>>
    %429 = arith.index_cast %428 : i32 to index
    %c0_277 = arith.constant 0 : index
    %430 = vector.load %arg2[%429, %c0_277] : memref<20x512xf32, #tpu.memory_space<vmem>>, vector<1x512xf32>
    %c47 = arith.constant 47 : index
    %c0_278 = arith.constant 0 : index
    %431 = vector.load %arg7[%c47, %c0_278] : memref<64x512xf32, #tpu.memory_space<vmem>>, vector<1x512xf32>
    tpu.vector_store %arg7[%c47, %c0_278], %430 {strides = array<i32>} : memref<64x512xf32, #tpu.memory_space<vmem>>, vector<1x512xf32>,
    %c8_i32_279 = arith.constant 8 : i32
    %432 = arith.muli %arg0, %c8_i32_279 : i32
    %c0_i32_280 = arith.constant 0 : i32
    %433 = arith.addi %432, %c0_i32_280 : i32
    %c8_i32_281 = arith.constant 8 : i32
    %434 = arith.muli %433, %c8_i32_281 : i32
    %c6_i32_282 = arith.constant 6 : i32
    %435 = arith.addi %434, %c6_i32_282 : i32
    %436 = arith.index_cast %435 : i32 to index
    %437 = memref.load %arg1[%436] : memref<128xi32, #tpu.memory_space<smem>>
    %438 = arith.index_cast %437 : i32 to index
    %c0_283 = arith.constant 0 : index
    %439 = vector.load %arg2[%438, %c0_283] : memref<20x512xf32, #tpu.memory_space<vmem>>, vector<1x512xf32>
    %c48 = arith.constant 48 : index
    %c0_284 = arith.constant 0 : index
    %440 = vector.load %arg7[%c48, %c0_284] : memref<64x512xf32, #tpu.memory_space<vmem>>, vector<1x512xf32>
    tpu.vector_store %arg7[%c48, %c0_284], %439 {strides = array<i32>} : memref<64x512xf32, #tpu.memory_space<vmem>>, vector<1x512xf32>,
    %c8_i32_285 = arith.constant 8 : i32
    %441 = arith.muli %arg0, %c8_i32_285 : i32
    %c1_i32_286 = arith.constant 1 : i32
    %442 = arith.addi %441, %c1_i32_286 : i32
    %c8_i32_287 = arith.constant 8 : i32
    %443 = arith.muli %442, %c8_i32_287 : i32
    %c6_i32_288 = arith.constant 6 : i32
    %444 = arith.addi %443, %c6_i32_288 : i32
    %445 = arith.index_cast %444 : i32 to index
    %446 = memref.load %arg1[%445] : memref<128xi32, #tpu.memory_space<smem>>
    %447 = arith.index_cast %446 : i32 to index
    %c0_289 = arith.constant 0 : index
    %448 = vector.load %arg2[%447, %c0_289] : memref<20x512xf32, #tpu.memory_space<vmem>>, vector<1x512xf32>
    %c49 = arith.constant 49 : index
    %c0_290 = arith.constant 0 : index
    %449 = vector.load %arg7[%c49, %c0_290] : memref<64x512xf32, #tpu.memory_space<vmem>>, vector<1x512xf32>
    tpu.vector_store %arg7[%c49, %c0_290], %448 {strides = array<i32>} : memref<64x512xf32, #tpu.memory_space<vmem>>, vector<1x512xf32>,
    %c8_i32_291 = arith.constant 8 : i32
    %450 = arith.muli %arg0, %c8_i32_291 : i32
    %c2_i32_292 = arith.constant 2 : i32
    %451 = arith.addi %450, %c2_i32_292 : i32
    %c8_i32_293 = arith.constant 8 : i32
    %452 = arith.muli %451, %c8_i32_293 : i32
    %c6_i32_294 = arith.constant 6 : i32
    %453 = arith.addi %452, %c6_i32_294 : i32
    %454 = arith.index_cast %453 : i32 to index
    %455 = memref.load %arg1[%454] : memref<128xi32, #tpu.memory_space<smem>>
    %456 = arith.index_cast %455 : i32 to index
    %c0_295 = arith.constant 0 : index
    %457 = vector.load %arg2[%456, %c0_295] : memref<20x512xf32, #tpu.memory_space<vmem>>, vector<1x512xf32>
    %c50 = arith.constant 50 : index
    %c0_296 = arith.constant 0 : index
    %458 = vector.load %arg7[%c50, %c0_296] : memref<64x512xf32, #tpu.memory_space<vmem>>, vector<1x512xf32>
    tpu.vector_store %arg7[%c50, %c0_296], %457 {strides = array<i32>} : memref<64x512xf32, #tpu.memory_space<vmem>>, vector<1x512xf32>,
    %c8_i32_297 = arith.constant 8 : i32
    %459 = arith.muli %arg0, %c8_i32_297 : i32
    %c3_i32_298 = arith.constant 3 : i32
    %460 = arith.addi %459, %c3_i32_298 : i32
    %c8_i32_299 = arith.constant 8 : i32
    %461 = arith.muli %460, %c8_i32_299 : i32
    %c6_i32_300 = arith.constant 6 : i32
    %462 = arith.addi %461, %c6_i32_300 : i32
    %463 = arith.index_cast %462 : i32 to index
    %464 = memref.load %arg1[%463] : memref<128xi32, #tpu.memory_space<smem>>
    %465 = arith.index_cast %464 : i32 to index
    %c0_301 = arith.constant 0 : index
    %466 = vector.load %arg2[%465, %c0_301] : memref<20x512xf32, #tpu.memory_space<vmem>>, vector<1x512xf32>
    %c51 = arith.constant 51 : index
    %c0_302 = arith.constant 0 : index
    %467 = vector.load %arg7[%c51, %c0_302] : memref<64x512xf32, #tpu.memory_space<vmem>>, vector<1x512xf32>
    tpu.vector_store %arg7[%c51, %c0_302], %466 {strides = array<i32>} : memref<64x512xf32, #tpu.memory_space<vmem>>, vector<1x512xf32>,
    %c8_i32_303 = arith.constant 8 : i32
    %468 = arith.muli %arg0, %c8_i32_303 : i32
    %c4_i32_304 = arith.constant 4 : i32
    %469 = arith.addi %468, %c4_i32_304 : i32
    %c8_i32_305 = arith.constant 8 : i32
    %470 = arith.muli %469, %c8_i32_305 : i32
    %c6_i32_306 = arith.constant 6 : i32
    %471 = arith.addi %470, %c6_i32_306 : i32
    %472 = arith.index_cast %471 : i32 to index
    %473 = memref.load %arg1[%472] : memref<128xi32, #tpu.memory_space<smem>>
    %474 = arith.index_cast %473 : i32 to index
    %c0_307 = arith.constant 0 : index
    %475 = vector.load %arg2[%474, %c0_307] : memref<20x512xf32, #tpu.memory_space<vmem>>, vector<1x512xf32>
    %c52 = arith.constant 52 : index
    %c0_308 = arith.constant 0 : index
    %476 = vector.load %arg7[%c52, %c0_308] : memref<64x512xf32, #tpu.memory_space<vmem>>, vector<1x512xf32>
    tpu.vector_store %arg7[%c52, %c0_308], %475 {strides = array<i32>} : memref<64x512xf32, #tpu.memory_space<vmem>>, vector<1x512xf32>,
    %c8_i32_309 = arith.constant 8 : i32
    %477 = arith.muli %arg0, %c8_i32_309 : i32
    %c5_i32_310 = arith.constant 5 : i32
    %478 = arith.addi %477, %c5_i32_310 : i32
    %c8_i32_311 = arith.constant 8 : i32
    %479 = arith.muli %478, %c8_i32_311 : i32
    %c6_i32_312 = arith.constant 6 : i32
    %480 = arith.addi %479, %c6_i32_312 : i32
    %481 = arith.index_cast %480 : i32 to index
    %482 = memref.load %arg1[%481] : memref<128xi32, #tpu.memory_space<smem>>
    %483 = arith.index_cast %482 : i32 to index
    %c0_313 = arith.constant 0 : index
    %484 = vector.load %arg2[%483, %c0_313] : memref<20x512xf32, #tpu.memory_space<vmem>>, vector<1x512xf32>
    %c53 = arith.constant 53 : index
    %c0_314 = arith.constant 0 : index
    %485 = vector.load %arg7[%c53, %c0_314] : memref<64x512xf32, #tpu.memory_space<vmem>>, vector<1x512xf32>
    tpu.vector_store %arg7[%c53, %c0_314], %484 {strides = array<i32>} : memref<64x512xf32, #tpu.memory_space<vmem>>, vector<1x512xf32>,
    %c8_i32_315 = arith.constant 8 : i32
    %486 = arith.muli %arg0, %c8_i32_315 : i32
    %c6_i32_316 = arith.constant 6 : i32
    %487 = arith.addi %486, %c6_i32_316 : i32
    %c8_i32_317 = arith.constant 8 : i32
    %488 = arith.muli %487, %c8_i32_317 : i32
    %c6_i32_318 = arith.constant 6 : i32
    %489 = arith.addi %488, %c6_i32_318 : i32
    %490 = arith.index_cast %489 : i32 to index
    %491 = memref.load %arg1[%490] : memref<128xi32, #tpu.memory_space<smem>>
    %492 = arith.index_cast %491 : i32 to index
    %c0_319 = arith.constant 0 : index
    %493 = vector.load %arg2[%492, %c0_319] : memref<20x512xf32, #tpu.memory_space<vmem>>, vector<1x512xf32>
    %c54 = arith.constant 54 : index
    %c0_320 = arith.constant 0 : index
    %494 = vector.load %arg7[%c54, %c0_320] : memref<64x512xf32, #tpu.memory_space<vmem>>, vector<1x512xf32>
    tpu.vector_store %arg7[%c54, %c0_320], %493 {strides = array<i32>} : memref<64x512xf32, #tpu.memory_space<vmem>>, vector<1x512xf32>,
    %c8_i32_321 = arith.constant 8 : i32
    %495 = arith.muli %arg0, %c8_i32_321 : i32
    %c7_i32_322 = arith.constant 7 : i32
    %496 = arith.addi %495, %c7_i32_322 : i32
    %c8_i32_323 = arith.constant 8 : i32
    %497 = arith.muli %496, %c8_i32_323 : i32
    %c6_i32_324 = arith.constant 6 : i32
    %498 = arith.addi %497, %c6_i32_324 : i32
    %499 = arith.index_cast %498 : i32 to index
    %500 = memref.load %arg1[%499] : memref<128xi32, #tpu.memory_space<smem>>
    %501 = arith.index_cast %500 : i32 to index
    %c0_325 = arith.constant 0 : index
    %502 = vector.load %arg2[%501, %c0_325] : memref<20x512xf32, #tpu.memory_space<vmem>>, vector<1x512xf32>
    %c55 = arith.constant 55 : index
    %c0_326 = arith.constant 0 : index
    %503 = vector.load %arg7[%c55, %c0_326] : memref<64x512xf32, #tpu.memory_space<vmem>>, vector<1x512xf32>
    tpu.vector_store %arg7[%c55, %c0_326], %502 {strides = array<i32>} : memref<64x512xf32, #tpu.memory_space<vmem>>, vector<1x512xf32>,
    %c8_i32_327 = arith.constant 8 : i32
    %504 = arith.muli %arg0, %c8_i32_327 : i32
    %c0_i32_328 = arith.constant 0 : i32
    %505 = arith.addi %504, %c0_i32_328 : i32
    %c8_i32_329 = arith.constant 8 : i32
    %506 = arith.muli %505, %c8_i32_329 : i32
    %c7_i32_330 = arith.constant 7 : i32
    %507 = arith.addi %506, %c7_i32_330 : i32
    %508 = arith.index_cast %507 : i32 to index
    %509 = memref.load %arg1[%508] : memref<128xi32, #tpu.memory_space<smem>>
    %510 = arith.index_cast %509 : i32 to index
    %c0_331 = arith.constant 0 : index
    %511 = vector.load %arg2[%510, %c0_331] : memref<20x512xf32, #tpu.memory_space<vmem>>, vector<1x512xf32>
    %c56 = arith.constant 56 : index
    %c0_332 = arith.constant 0 : index
    %512 = vector.load %arg7[%c56, %c0_332] : memref<64x512xf32, #tpu.memory_space<vmem>>, vector<1x512xf32>
    tpu.vector_store %arg7[%c56, %c0_332], %511 {strides = array<i32>} : memref<64x512xf32, #tpu.memory_space<vmem>>, vector<1x512xf32>,
    %c8_i32_333 = arith.constant 8 : i32
    %513 = arith.muli %arg0, %c8_i32_333 : i32
    %c1_i32_334 = arith.constant 1 : i32
    %514 = arith.addi %513, %c1_i32_334 : i32
    %c8_i32_335 = arith.constant 8 : i32
    %515 = arith.muli %514, %c8_i32_335 : i32
    %c7_i32_336 = arith.constant 7 : i32
    %516 = arith.addi %515, %c7_i32_336 : i32
    %517 = arith.index_cast %516 : i32 to index
    %518 = memref.load %arg1[%517] : memref<128xi32, #tpu.memory_space<smem>>
    %519 = arith.index_cast %518 : i32 to index
    %c0_337 = arith.constant 0 : index
    %520 = vector.load %arg2[%519, %c0_337] : memref<20x512xf32, #tpu.memory_space<vmem>>, vector<1x512xf32>
    %c57 = arith.constant 57 : index
    %c0_338 = arith.constant 0 : index
    %521 = vector.load %arg7[%c57, %c0_338] : memref<64x512xf32, #tpu.memory_space<vmem>>, vector<1x512xf32>
    tpu.vector_store %arg7[%c57, %c0_338], %520 {strides = array<i32>} : memref<64x512xf32, #tpu.memory_space<vmem>>, vector<1x512xf32>,
    %c8_i32_339 = arith.constant 8 : i32
    %522 = arith.muli %arg0, %c8_i32_339 : i32
    %c2_i32_340 = arith.constant 2 : i32
    %523 = arith.addi %522, %c2_i32_340 : i32
    %c8_i32_341 = arith.constant 8 : i32
    %524 = arith.muli %523, %c8_i32_341 : i32
    %c7_i32_342 = arith.constant 7 : i32
    %525 = arith.addi %524, %c7_i32_342 : i32
    %526 = arith.index_cast %525 : i32 to index
    %527 = memref.load %arg1[%526] : memref<128xi32, #tpu.memory_space<smem>>
    %528 = arith.index_cast %527 : i32 to index
    %c0_343 = arith.constant 0 : index
    %529 = vector.load %arg2[%528, %c0_343] : memref<20x512xf32, #tpu.memory_space<vmem>>, vector<1x512xf32>
    %c58 = arith.constant 58 : index
    %c0_344 = arith.constant 0 : index
    %530 = vector.load %arg7[%c58, %c0_344] : memref<64x512xf32, #tpu.memory_space<vmem>>, vector<1x512xf32>
    tpu.vector_store %arg7[%c58, %c0_344], %529 {strides = array<i32>} : memref<64x512xf32, #tpu.memory_space<vmem>>, vector<1x512xf32>,
    %c8_i32_345 = arith.constant 8 : i32
    %531 = arith.muli %arg0, %c8_i32_345 : i32
    %c3_i32_346 = arith.constant 3 : i32
    %532 = arith.addi %531, %c3_i32_346 : i32
    %c8_i32_347 = arith.constant 8 : i32
    %533 = arith.muli %532, %c8_i32_347 : i32
    %c7_i32_348 = arith.constant 7 : i32
    %534 = arith.addi %533, %c7_i32_348 : i32
    %535 = arith.index_cast %534 : i32 to index
    %536 = memref.load %arg1[%535] : memref<128xi32, #tpu.memory_space<smem>>
    %537 = arith.index_cast %536 : i32 to index
    %c0_349 = arith.constant 0 : index
    %538 = vector.load %arg2[%537, %c0_349] : memref<20x512xf32, #tpu.memory_space<vmem>>, vector<1x512xf32>
    %c59 = arith.constant 59 : index
    %c0_350 = arith.constant 0 : index
    %539 = vector.load %arg7[%c59, %c0_350] : memref<64x512xf32, #tpu.memory_space<vmem>>, vector<1x512xf32>
    tpu.vector_store %arg7[%c59, %c0_350], %538 {strides = array<i32>} : memref<64x512xf32, #tpu.memory_space<vmem>>, vector<1x512xf32>,
    %c8_i32_351 = arith.constant 8 : i32
    %540 = arith.muli %arg0, %c8_i32_351 : i32
    %c4_i32_352 = arith.constant 4 : i32
    %541 = arith.addi %540, %c4_i32_352 : i32
    %c8_i32_353 = arith.constant 8 : i32
    %542 = arith.muli %541, %c8_i32_353 : i32
    %c7_i32_354 = arith.constant 7 : i32
    %543 = arith.addi %542, %c7_i32_354 : i32
    %544 = arith.index_cast %543 : i32 to index
    %545 = memref.load %arg1[%544] : memref<128xi32, #tpu.memory_space<smem>>
    %546 = arith.index_cast %545 : i32 to index
    %c0_355 = arith.constant 0 : index
    %547 = vector.load %arg2[%546, %c0_355] : memref<20x512xf32, #tpu.memory_space<vmem>>, vector<1x512xf32>
    %c60 = arith.constant 60 : index
    %c0_356 = arith.constant 0 : index
    %548 = vector.load %arg7[%c60, %c0_356] : memref<64x512xf32, #tpu.memory_space<vmem>>, vector<1x512xf32>
    tpu.vector_store %arg7[%c60, %c0_356], %547 {strides = array<i32>} : memref<64x512xf32, #tpu.memory_space<vmem>>, vector<1x512xf32>,
    %c8_i32_357 = arith.constant 8 : i32
    %549 = arith.muli %arg0, %c8_i32_357 : i32
    %c5_i32_358 = arith.constant 5 : i32
    %550 = arith.addi %549, %c5_i32_358 : i32
    %c8_i32_359 = arith.constant 8 : i32
    %551 = arith.muli %550, %c8_i32_359 : i32
    %c7_i32_360 = arith.constant 7 : i32
    %552 = arith.addi %551, %c7_i32_360 : i32
    %553 = arith.index_cast %552 : i32 to index
    %554 = memref.load %arg1[%553] : memref<128xi32, #tpu.memory_space<smem>>
    %555 = arith.index_cast %554 : i32 to index
    %c0_361 = arith.constant 0 : index
    %556 = vector.load %arg2[%555, %c0_361] : memref<20x512xf32, #tpu.memory_space<vmem>>, vector<1x512xf32>
    %c61 = arith.constant 61 : index
    %c0_362 = arith.constant 0 : index
    %557 = vector.load %arg7[%c61, %c0_362] : memref<64x512xf32, #tpu.memory_space<vmem>>, vector<1x512xf32>
    tpu.vector_store %arg7[%c61, %c0_362], %556 {strides = array<i32>} : memref<64x512xf32, #tpu.memory_space<vmem>>, vector<1x512xf32>,
    %c8_i32_363 = arith.constant 8 : i32
    %558 = arith.muli %arg0, %c8_i32_363 : i32
    %c6_i32_364 = arith.constant 6 : i32
    %559 = arith.addi %558, %c6_i32_364 : i32
    %c8_i32_365 = arith.constant 8 : i32
    %560 = arith.muli %559, %c8_i32_365 : i32
    %c7_i32_366 = arith.constant 7 : i32
    %561 = arith.addi %560, %c7_i32_366 : i32
    %562 = arith.index_cast %561 : i32 to index
    %563 = memref.load %arg1[%562] : memref<128xi32, #tpu.memory_space<smem>>
    %564 = arith.index_cast %563 : i32 to index
    %c0_367 = arith.constant 0 : index
    %565 = vector.load %arg2[%564, %c0_367] : memref<20x512xf32, #tpu.memory_space<vmem>>, vector<1x512xf32>
    %c62 = arith.constant 62 : index
    %c0_368 = arith.constant 0 : index
    %566 = vector.load %arg7[%c62, %c0_368] : memref<64x512xf32, #tpu.memory_space<vmem>>, vector<1x512xf32>
    tpu.vector_store %arg7[%c62, %c0_368], %565 {strides = array<i32>} : memref<64x512xf32, #tpu.memory_space<vmem>>, vector<1x512xf32>,
    %c8_i32_369 = arith.constant 8 : i32
    %567 = arith.muli %arg0, %c8_i32_369 : i32
    %c7_i32_370 = arith.constant 7 : i32
    %568 = arith.addi %567, %c7_i32_370 : i32
    %c8_i32_371 = arith.constant 8 : i32
    %569 = arith.muli %568, %c8_i32_371 : i32
    %c7_i32_372 = arith.constant 7 : i32
    %570 = arith.addi %569, %c7_i32_372 : i32
    %571 = arith.index_cast %570 : i32 to index
    %572 = memref.load %arg1[%571] : memref<128xi32, #tpu.memory_space<smem>>
    %573 = arith.index_cast %572 : i32 to index
    %c0_373 = arith.constant 0 : index
    %574 = vector.load %arg2[%573, %c0_373] : memref<20x512xf32, #tpu.memory_space<vmem>>, vector<1x512xf32>
    %c63 = arith.constant 63 : index
    %c0_374 = arith.constant 0 : index
    %575 = vector.load %arg7[%c63, %c0_374] : memref<64x512xf32, #tpu.memory_space<vmem>>, vector<1x512xf32>
    tpu.vector_store %arg7[%c63, %c0_374], %574 {strides = array<i32>} : memref<64x512xf32, #tpu.memory_space<vmem>>, vector<1x512xf32>,
    %cst = arith.constant 0.000000e+00 : f32
    %576 = vector.broadcast %cst : f32 to vector<8x128xf32>
    %cst_375 = arith.constant 0.000000e+00 : f32
    %577 = vector.broadcast %cst_375 : f32 to vector<8x128xf32>
    %c0_376 = arith.constant 0 : index
    %c0_377 = arith.constant 0 : index
    %578 = vector.load %arg7[%c0_376, %c0_377] : memref<64x512xf32, #tpu.memory_space<vmem>>, vector<8x512xf32>
    %579 = arith.truncf %576 : vector<8x128xf32> to vector<8x128xbf16>
    %c0_378 = arith.constant 0 : index
    %c0_379 = arith.constant 0 : index
    %580 = vector.load %arg3[%c0_378, %c0_379] : memref<128x512xbf16, #tpu.memory_space<vmem>>, vector<128x512xbf16>
    %cst_380 = arith.constant dense<0.000000e+00> : vector<8x512xf32>
    %581 = tpu.matmul %579, %580, %cst_380 {dimension_numbers = #tpu.dot_dimension_numbers<[1], [0], [0], [1], [0, 0, 1, 1], [], []>} : vector<8x128xbf16>, vector<128x512xbf16>, vector<8x512xf32> -> vector<8x512xf32>
    %582 = arith.addf %578, %581 : vector<8x512xf32>
    %583 = vector.extract_strided_slice %582 {offsets = [0, 0], sizes = [8, 128], strides = [1, 1]} : vector<8x512xf32> to vector<8x128xf32>
    %584 = arith.negf %583 : vector<8x128xf32>
    %585 = math.exp %584 : vector<8x128xf32>
    %cst_381 = arith.constant 1.000000e+00 : f32
    %586 = vector.broadcast %cst_381 : f32 to vector<8x128xf32>
    %587 = arith.addf %586, %585 : vector<8x128xf32>
    %588 = arith.divf %586, %587 : vector<8x128xf32>
    %589 = vector.extract_strided_slice %582 {offsets = [0, 128], sizes = [8, 128], strides = [1, 1]} : vector<8x512xf32> to vector<8x128xf32>
    %590 = arith.negf %589 : vector<8x128xf32>
    %591 = math.exp %590 : vector<8x128xf32>
    %cst_382 = arith.constant 1.000000e+00 : f32
    %592 = vector.broadcast %cst_382 : f32 to vector<8x128xf32>
    %593 = arith.addf %592, %591 : vector<8x128xf32>
    %594 = arith.divf %592, %593 : vector<8x128xf32>
    %595 = vector.extract_strided_slice %582 {offsets = [0, 256], sizes = [8, 128], strides = [1, 1]} : vector<8x512xf32> to vector<8x128xf32>
    %596 = math.tanh %595 : vector<8x128xf32>
    %597 = vector.extract_strided_slice %582 {offsets = [0, 384], sizes = [8, 128], strides = [1, 1]} : vector<8x512xf32> to vector<8x128xf32>
    %598 = arith.negf %597 : vector<8x128xf32>
    %599 = math.exp %598 : vector<8x128xf32>
    %cst_383 = arith.constant 1.000000e+00 : f32
    %600 = vector.broadcast %cst_383 : f32 to vector<8x128xf32>
    %601 = arith.addf %600, %599 : vector<8x128xf32>
    %602 = arith.divf %600, %601 : vector<8x128xf32>
    %603 = arith.mulf %594, %577 : vector<8x128xf32>
    %604 = arith.mulf %588, %596 : vector<8x128xf32>
    %605 = arith.addf %603, %604 : vector<8x128xf32>
    %606 = math.tanh %605 : vector<8x128xf32>
    %607 = arith.mulf %602, %606 : vector<8x128xf32>
    %c8_384 = arith.constant 8 : index
    %c0_385 = arith.constant 0 : index
    %608 = vector.load %arg7[%c8_384, %c0_385] : memref<64x512xf32, #tpu.memory_space<vmem>>, vector<8x512xf32>
    %609 = arith.truncf %607 : vector<8x128xf32> to vector<8x128xbf16>
    %c0_386 = arith.constant 0 : index
    %c0_387 = arith.constant 0 : index
    %610 = vector.load %arg3[%c0_386, %c0_387] : memref<128x512xbf16, #tpu.memory_space<vmem>>, vector<128x512xbf16>
    %cst_388 = arith.constant dense<0.000000e+00> : vector<8x512xf32>
    %611 = tpu.matmul %609, %610, %cst_388 {dimension_numbers = #tpu.dot_dimension_numbers<[1], [0], [0], [1], [0, 0, 1, 1], [], []>} : vector<8x128xbf16>, vector<128x512xbf16>, vector<8x512xf32> -> vector<8x512xf32>
    %612 = arith.addf %608, %611 : vector<8x512xf32>
    %613 = vector.extract_strided_slice %612 {offsets = [0, 0], sizes = [8, 128], strides = [1, 1]} : vector<8x512xf32> to vector<8x128xf32>
    %614 = arith.negf %613 : vector<8x128xf32>
    %615 = math.exp %614 : vector<8x128xf32>
    %cst_389 = arith.constant 1.000000e+00 : f32
    %616 = vector.broadcast %cst_389 : f32 to vector<8x128xf32>
    %617 = arith.addf %616, %615 : vector<8x128xf32>
    %618 = arith.divf %616, %617 : vector<8x128xf32>
    %619 = vector.extract_strided_slice %612 {offsets = [0, 128], sizes = [8, 128], strides = [1, 1]} : vector<8x512xf32> to vector<8x128xf32>
    %620 = arith.negf %619 : vector<8x128xf32>
    %621 = math.exp %620 : vector<8x128xf32>
    %cst_390 = arith.constant 1.000000e+00 : f32
    %622 = vector.broadcast %cst_390 : f32 to vector<8x128xf32>
    %623 = arith.addf %622, %621 : vector<8x128xf32>
    %624 = arith.divf %622, %623 : vector<8x128xf32>
    %625 = vector.extract_strided_slice %612 {offsets = [0, 256], sizes = [8, 128], strides = [1, 1]} : vector<8x512xf32> to vector<8x128xf32>
    %626 = math.tanh %625 : vector<8x128xf32>
    %627 = vector.extract_strided_slice %612 {offsets = [0, 384], sizes = [8, 128], strides = [1, 1]} : vector<8x512xf32> to vector<8x128xf32>
    %628 = arith.negf %627 : vector<8x128xf32>
    %629 = math.exp %628 : vector<8x128xf32>
    %cst_391 = arith.constant 1.000000e+00 : f32
    %630 = vector.broadcast %cst_391 : f32 to vector<8x128xf32>
    %631 = arith.addf %630, %629 : vector<8x128xf32>
    %632 = arith.divf %630, %631 : vector<8x128xf32>
    %633 = arith.mulf %624, %605 : vector<8x128xf32>
    %634 = arith.mulf %618, %626 : vector<8x128xf32>
    %635 = arith.addf %633, %634 : vector<8x128xf32>
    %636 = math.tanh %635 : vector<8x128xf32>
    %637 = arith.mulf %632, %636 : vector<8x128xf32>
    %c16_392 = arith.constant 16 : index
    %c0_393 = arith.constant 0 : index
    %638 = vector.load %arg7[%c16_392, %c0_393] : memref<64x512xf32, #tpu.memory_space<vmem>>, vector<8x512xf32>
    %639 = arith.truncf %637 : vector<8x128xf32> to vector<8x128xbf16>
    %c0_394 = arith.constant 0 : index
    %c0_395 = arith.constant 0 : index
    %640 = vector.load %arg3[%c0_394, %c0_395] : memref<128x512xbf16, #tpu.memory_space<vmem>>, vector<128x512xbf16>
    %cst_396 = arith.constant dense<0.000000e+00> : vector<8x512xf32>
    %641 = tpu.matmul %639, %640, %cst_396 {dimension_numbers = #tpu.dot_dimension_numbers<[1], [0], [0], [1], [0, 0, 1, 1], [], []>} : vector<8x128xbf16>, vector<128x512xbf16>, vector<8x512xf32> -> vector<8x512xf32>
    %642 = arith.addf %638, %641 : vector<8x512xf32>
    %643 = vector.extract_strided_slice %642 {offsets = [0, 0], sizes = [8, 128], strides = [1, 1]} : vector<8x512xf32> to vector<8x128xf32>
    %644 = arith.negf %643 : vector<8x128xf32>
    %645 = math.exp %644 : vector<8x128xf32>
    %cst_397 = arith.constant 1.000000e+00 : f32
    %646 = vector.broadcast %cst_397 : f32 to vector<8x128xf32>
    %647 = arith.addf %646, %645 : vector<8x128xf32>
    %648 = arith.divf %646, %647 : vector<8x128xf32>
    %649 = vector.extract_strided_slice %642 {offsets = [0, 128], sizes = [8, 128], strides = [1, 1]} : vector<8x512xf32> to vector<8x128xf32>
    %650 = arith.negf %649 : vector<8x128xf32>
    %651 = math.exp %650 : vector<8x128xf32>
    %cst_398 = arith.constant 1.000000e+00 : f32
    %652 = vector.broadcast %cst_398 : f32 to vector<8x128xf32>
    %653 = arith.addf %652, %651 : vector<8x128xf32>
    %654 = arith.divf %652, %653 : vector<8x128xf32>
    %655 = vector.extract_strided_slice %642 {offsets = [0, 256], sizes = [8, 128], strides = [1, 1]} : vector<8x512xf32> to vector<8x128xf32>
    %656 = math.tanh %655 : vector<8x128xf32>
    %657 = vector.extract_strided_slice %642 {offsets = [0, 384], sizes = [8, 128], strides = [1, 1]} : vector<8x512xf32> to vector<8x128xf32>
    %658 = arith.negf %657 : vector<8x128xf32>
    %659 = math.exp %658 : vector<8x128xf32>
    %cst_399 = arith.constant 1.000000e+00 : f32
    %660 = vector.broadcast %cst_399 : f32 to vector<8x128xf32>
    %661 = arith.addf %660, %659 : vector<8x128xf32>
    %662 = arith.divf %660, %661 : vector<8x128xf32>
    %663 = arith.mulf %654, %635 : vector<8x128xf32>
    %664 = arith.mulf %648, %656 : vector<8x128xf32>
    %665 = arith.addf %663, %664 : vector<8x128xf32>
    %666 = math.tanh %665 : vector<8x128xf32>
    %667 = arith.mulf %662, %666 : vector<8x128xf32>
    %c24_400 = arith.constant 24 : index
    %c0_401 = arith.constant 0 : index
    %668 = vector.load %arg7[%c24_400, %c0_401] : memref<64x512xf32, #tpu.memory_space<vmem>>, vector<8x512xf32>
    %669 = arith.truncf %667 : vector<8x128xf32> to vector<8x128xbf16>
    %c0_402 = arith.constant 0 : index
    %c0_403 = arith.constant 0 : index
    %670 = vector.load %arg3[%c0_402, %c0_403] : memref<128x512xbf16, #tpu.memory_space<vmem>>, vector<128x512xbf16>
    %cst_404 = arith.constant dense<0.000000e+00> : vector<8x512xf32>
    %671 = tpu.matmul %669, %670, %cst_404 {dimension_numbers = #tpu.dot_dimension_numbers<[1], [0], [0], [1], [0, 0, 1, 1], [], []>} : vector<8x128xbf16>, vector<128x512xbf16>, vector<8x512xf32> -> vector<8x512xf32>
    %672 = arith.addf %668, %671 : vector<8x512xf32>
    %673 = vector.extract_strided_slice %672 {offsets = [0, 0], sizes = [8, 128], strides = [1, 1]} : vector<8x512xf32> to vector<8x128xf32>
    %674 = arith.negf %673 : vector<8x128xf32>
    %675 = math.exp %674 : vector<8x128xf32>
    %cst_405 = arith.constant 1.000000e+00 : f32
    %676 = vector.broadcast %cst_405 : f32 to vector<8x128xf32>
    %677 = arith.addf %676, %675 : vector<8x128xf32>
    %678 = arith.divf %676, %677 : vector<8x128xf32>
    %679 = vector.extract_strided_slice %672 {offsets = [0, 128], sizes = [8, 128], strides = [1, 1]} : vector<8x512xf32> to vector<8x128xf32>
    %680 = arith.negf %679 : vector<8x128xf32>
    %681 = math.exp %680 : vector<8x128xf32>
    %cst_406 = arith.constant 1.000000e+00 : f32
    %682 = vector.broadcast %cst_406 : f32 to vector<8x128xf32>
    %683 = arith.addf %682, %681 : vector<8x128xf32>
    %684 = arith.divf %682, %683 : vector<8x128xf32>
    %685 = vector.extract_strided_slice %672 {offsets = [0, 256], sizes = [8, 128], strides = [1, 1]} : vector<8x512xf32> to vector<8x128xf32>
    %686 = math.tanh %685 : vector<8x128xf32>
    %687 = vector.extract_strided_slice %672 {offsets = [0, 384], sizes = [8, 128], strides = [1, 1]} : vector<8x512xf32> to vector<8x128xf32>
    %688 = arith.negf %687 : vector<8x128xf32>
    %689 = math.exp %688 : vector<8x128xf32>
    %cst_407 = arith.constant 1.000000e+00 : f32
    %690 = vector.broadcast %cst_407 : f32 to vector<8x128xf32>
    %691 = arith.addf %690, %689 : vector<8x128xf32>
    %692 = arith.divf %690, %691 : vector<8x128xf32>
    %693 = arith.mulf %684, %665 : vector<8x128xf32>
    %694 = arith.mulf %678, %686 : vector<8x128xf32>
    %695 = arith.addf %693, %694 : vector<8x128xf32>
    %696 = math.tanh %695 : vector<8x128xf32>
    %697 = arith.mulf %692, %696 : vector<8x128xf32>
    %c32_408 = arith.constant 32 : index
    %c0_409 = arith.constant 0 : index
    %698 = vector.load %arg7[%c32_408, %c0_409] : memref<64x512xf32, #tpu.memory_space<vmem>>, vector<8x512xf32>
    %699 = arith.truncf %697 : vector<8x128xf32> to vector<8x128xbf16>
    %c0_410 = arith.constant 0 : index
    %c0_411 = arith.constant 0 : index
    %700 = vector.load %arg3[%c0_410, %c0_411] : memref<128x512xbf16, #tpu.memory_space<vmem>>, vector<128x512xbf16>
    %cst_412 = arith.constant dense<0.000000e+00> : vector<8x512xf32>
    %701 = tpu.matmul %699, %700, %cst_412 {dimension_numbers = #tpu.dot_dimension_numbers<[1], [0], [0], [1], [0, 0, 1, 1], [], []>} : vector<8x128xbf16>, vector<128x512xbf16>, vector<8x512xf32> -> vector<8x512xf32>
    %702 = arith.addf %698, %701 : vector<8x512xf32>
    %703 = vector.extract_strided_slice %702 {offsets = [0, 0], sizes = [8, 128], strides = [1, 1]} : vector<8x512xf32> to vector<8x128xf32>
    %704 = arith.negf %703 : vector<8x128xf32>
    %705 = math.exp %704 : vector<8x128xf32>
    %cst_413 = arith.constant 1.000000e+00 : f32
    %706 = vector.broadcast %cst_413 : f32 to vector<8x128xf32>
    %707 = arith.addf %706, %705 : vector<8x128xf32>
    %708 = arith.divf %706, %707 : vector<8x128xf32>
    %709 = vector.extract_strided_slice %702 {offsets = [0, 128], sizes = [8, 128], strides = [1, 1]} : vector<8x512xf32> to vector<8x128xf32>
    %710 = arith.negf %709 : vector<8x128xf32>
    %711 = math.exp %710 : vector<8x128xf32>
    %cst_414 = arith.constant 1.000000e+00 : f32
    %712 = vector.broadcast %cst_414 : f32 to vector<8x128xf32>
    %713 = arith.addf %712, %711 : vector<8x128xf32>
    %714 = arith.divf %712, %713 : vector<8x128xf32>
    %715 = vector.extract_strided_slice %702 {offsets = [0, 256], sizes = [8, 128], strides = [1, 1]} : vector<8x512xf32> to vector<8x128xf32>
    %716 = math.tanh %715 : vector<8x128xf32>
    %717 = vector.extract_strided_slice %702 {offsets = [0, 384], sizes = [8, 128], strides = [1, 1]} : vector<8x512xf32> to vector<8x128xf32>
    %718 = arith.negf %717 : vector<8x128xf32>
    %719 = math.exp %718 : vector<8x128xf32>
    %cst_415 = arith.constant 1.000000e+00 : f32
    %720 = vector.broadcast %cst_415 : f32 to vector<8x128xf32>
    %721 = arith.addf %720, %719 : vector<8x128xf32>
    %722 = arith.divf %720, %721 : vector<8x128xf32>
    %723 = arith.mulf %714, %695 : vector<8x128xf32>
    %724 = arith.mulf %708, %716 : vector<8x128xf32>
    %725 = arith.addf %723, %724 : vector<8x128xf32>
    %726 = math.tanh %725 : vector<8x128xf32>
    %727 = arith.mulf %722, %726 : vector<8x128xf32>
    %c40_416 = arith.constant 40 : index
    %c0_417 = arith.constant 0 : index
    %728 = vector.load %arg7[%c40_416, %c0_417] : memref<64x512xf32, #tpu.memory_space<vmem>>, vector<8x512xf32>
    %729 = arith.truncf %727 : vector<8x128xf32> to vector<8x128xbf16>
    %c0_418 = arith.constant 0 : index
    %c0_419 = arith.constant 0 : index
    %730 = vector.load %arg3[%c0_418, %c0_419] : memref<128x512xbf16, #tpu.memory_space<vmem>>, vector<128x512xbf16>
    %cst_420 = arith.constant dense<0.000000e+00> : vector<8x512xf32>
    %731 = tpu.matmul %729, %730, %cst_420 {dimension_numbers = #tpu.dot_dimension_numbers<[1], [0], [0], [1], [0, 0, 1, 1], [], []>} : vector<8x128xbf16>, vector<128x512xbf16>, vector<8x512xf32> -> vector<8x512xf32>
    %732 = arith.addf %728, %731 : vector<8x512xf32>
    %733 = vector.extract_strided_slice %732 {offsets = [0, 0], sizes = [8, 128], strides = [1, 1]} : vector<8x512xf32> to vector<8x128xf32>
    %734 = arith.negf %733 : vector<8x128xf32>
    %735 = math.exp %734 : vector<8x128xf32>
    %cst_421 = arith.constant 1.000000e+00 : f32
    %736 = vector.broadcast %cst_421 : f32 to vector<8x128xf32>
    %737 = arith.addf %736, %735 : vector<8x128xf32>
    %738 = arith.divf %736, %737 : vector<8x128xf32>
    %739 = vector.extract_strided_slice %732 {offsets = [0, 128], sizes = [8, 128], strides = [1, 1]} : vector<8x512xf32> to vector<8x128xf32>
    %740 = arith.negf %739 : vector<8x128xf32>
    %741 = math.exp %740 : vector<8x128xf32>
    %cst_422 = arith.constant 1.000000e+00 : f32
    %742 = vector.broadcast %cst_422 : f32 to vector<8x128xf32>
    %743 = arith.addf %742, %741 : vector<8x128xf32>
    %744 = arith.divf %742, %743 : vector<8x128xf32>
    %745 = vector.extract_strided_slice %732 {offsets = [0, 256], sizes = [8, 128], strides = [1, 1]} : vector<8x512xf32> to vector<8x128xf32>
    %746 = math.tanh %745 : vector<8x128xf32>
    %747 = vector.extract_strided_slice %732 {offsets = [0, 384], sizes = [8, 128], strides = [1, 1]} : vector<8x512xf32> to vector<8x128xf32>
    %748 = arith.negf %747 : vector<8x128xf32>
    %749 = math.exp %748 : vector<8x128xf32>
    %cst_423 = arith.constant 1.000000e+00 : f32
    %750 = vector.broadcast %cst_423 : f32 to vector<8x128xf32>
    %751 = arith.addf %750, %749 : vector<8x128xf32>
    %752 = arith.divf %750, %751 : vector<8x128xf32>
    %753 = arith.mulf %744, %725 : vector<8x128xf32>
    %754 = arith.mulf %738, %746 : vector<8x128xf32>
    %755 = arith.addf %753, %754 : vector<8x128xf32>
    %756 = math.tanh %755 : vector<8x128xf32>
    %757 = arith.mulf %752, %756 : vector<8x128xf32>
    %c48_424 = arith.constant 48 : index
    %c0_425 = arith.constant 0 : index
    %758 = vector.load %arg7[%c48_424, %c0_425] : memref<64x512xf32, #tpu.memory_space<vmem>>, vector<8x512xf32>
    %759 = arith.truncf %757 : vector<8x128xf32> to vector<8x128xbf16>
    %c0_426 = arith.constant 0 : index
    %c0_427 = arith.constant 0 : index
    %760 = vector.load %arg3[%c0_426, %c0_427] : memref<128x512xbf16, #tpu.memory_space<vmem>>, vector<128x512xbf16>
    %cst_428 = arith.constant dense<0.000000e+00> : vector<8x512xf32>
    %761 = tpu.matmul %759, %760, %cst_428 {dimension_numbers = #tpu.dot_dimension_numbers<[1], [0], [0], [1], [0, 0, 1, 1], [], []>} : vector<8x128xbf16>, vector<128x512xbf16>, vector<8x512xf32> -> vector<8x512xf32>
    %762 = arith.addf %758, %761 : vector<8x512xf32>
    %763 = vector.extract_strided_slice %762 {offsets = [0, 0], sizes = [8, 128], strides = [1, 1]} : vector<8x512xf32> to vector<8x128xf32>
    %764 = arith.negf %763 : vector<8x128xf32>
    %765 = math.exp %764 : vector<8x128xf32>
    %cst_429 = arith.constant 1.000000e+00 : f32
    %766 = vector.broadcast %cst_429 : f32 to vector<8x128xf32>
    %767 = arith.addf %766, %765 : vector<8x128xf32>
    %768 = arith.divf %766, %767 : vector<8x128xf32>
    %769 = vector.extract_strided_slice %762 {offsets = [0, 128], sizes = [8, 128], strides = [1, 1]} : vector<8x512xf32> to vector<8x128xf32>
    %770 = arith.negf %769 : vector<8x128xf32>
    %771 = math.exp %770 : vector<8x128xf32>
    %cst_430 = arith.constant 1.000000e+00 : f32
    %772 = vector.broadcast %cst_430 : f32 to vector<8x128xf32>
    %773 = arith.addf %772, %771 : vector<8x128xf32>
    %774 = arith.divf %772, %773 : vector<8x128xf32>
    %775 = vector.extract_strided_slice %762 {offsets = [0, 256], sizes = [8, 128], strides = [1, 1]} : vector<8x512xf32> to vector<8x128xf32>
    %776 = math.tanh %775 : vector<8x128xf32>
    %777 = vector.extract_strided_slice %762 {offsets = [0, 384], sizes = [8, 128], strides = [1, 1]} : vector<8x512xf32> to vector<8x128xf32>
    %778 = arith.negf %777 : vector<8x128xf32>
    %779 = math.exp %778 : vector<8x128xf32>
    %cst_431 = arith.constant 1.000000e+00 : f32
    %780 = vector.broadcast %cst_431 : f32 to vector<8x128xf32>
    %781 = arith.addf %780, %779 : vector<8x128xf32>
    %782 = arith.divf %780, %781 : vector<8x128xf32>
    %783 = arith.mulf %774, %755 : vector<8x128xf32>
    %784 = arith.mulf %768, %776 : vector<8x128xf32>
    %785 = arith.addf %783, %784 : vector<8x128xf32>
    %786 = math.tanh %785 : vector<8x128xf32>
    %787 = arith.mulf %782, %786 : vector<8x128xf32>
    %c56_432 = arith.constant 56 : index
    %c0_433 = arith.constant 0 : index
    %788 = vector.load %arg7[%c56_432, %c0_433] : memref<64x512xf32, #tpu.memory_space<vmem>>, vector<8x512xf32>
    %789 = arith.truncf %787 : vector<8x128xf32> to vector<8x128xbf16>
    %c0_434 = arith.constant 0 : index
    %c0_435 = arith.constant 0 : index
    %790 = vector.load %arg3[%c0_434, %c0_435] : memref<128x512xbf16, #tpu.memory_space<vmem>>, vector<128x512xbf16>
    %cst_436 = arith.constant dense<0.000000e+00> : vector<8x512xf32>
    %791 = tpu.matmul %789, %790, %cst_436 {dimension_numbers = #tpu.dot_dimension_numbers<[1], [0], [0], [1], [0, 0, 1, 1], [], []>} : vector<8x128xbf16>, vector<128x512xbf16>, vector<8x512xf32> -> vector<8x512xf32>
    %792 = arith.addf %788, %791 : vector<8x512xf32>
    %793 = vector.extract_strided_slice %792 {offsets = [0, 0], sizes = [8, 128], strides = [1, 1]} : vector<8x512xf32> to vector<8x128xf32>
    %794 = arith.negf %793 : vector<8x128xf32>
    %795 = math.exp %794 : vector<8x128xf32>
    %cst_437 = arith.constant 1.000000e+00 : f32
    %796 = vector.broadcast %cst_437 : f32 to vector<8x128xf32>
    %797 = arith.addf %796, %795 : vector<8x128xf32>
    %798 = arith.divf %796, %797 : vector<8x128xf32>
    %799 = vector.extract_strided_slice %792 {offsets = [0, 128], sizes = [8, 128], strides = [1, 1]} : vector<8x512xf32> to vector<8x128xf32>
    %800 = arith.negf %799 : vector<8x128xf32>
    %801 = math.exp %800 : vector<8x128xf32>
    %cst_438 = arith.constant 1.000000e+00 : f32
    %802 = vector.broadcast %cst_438 : f32 to vector<8x128xf32>
    %803 = arith.addf %802, %801 : vector<8x128xf32>
    %804 = arith.divf %802, %803 : vector<8x128xf32>
    %805 = vector.extract_strided_slice %792 {offsets = [0, 256], sizes = [8, 128], strides = [1, 1]} : vector<8x512xf32> to vector<8x128xf32>
    %806 = math.tanh %805 : vector<8x128xf32>
    %807 = vector.extract_strided_slice %792 {offsets = [0, 384], sizes = [8, 128], strides = [1, 1]} : vector<8x512xf32> to vector<8x128xf32>
    %808 = arith.negf %807 : vector<8x128xf32>
    %809 = math.exp %808 : vector<8x128xf32>
    %cst_439 = arith.constant 1.000000e+00 : f32
    %810 = vector.broadcast %cst_439 : f32 to vector<8x128xf32>
    %811 = arith.addf %810, %809 : vector<8x128xf32>
    %812 = arith.divf %810, %811 : vector<8x128xf32>
    %813 = arith.mulf %804, %785 : vector<8x128xf32>
    %814 = arith.mulf %798, %806 : vector<8x128xf32>
    %815 = arith.addf %813, %814 : vector<8x128xf32>
    %816 = math.tanh %815 : vector<8x128xf32>
    %817 = arith.mulf %812, %816 : vector<8x128xf32>
    %818 = arith.truncf %817 : vector<8x128xf32> to vector<8x128xbf16>
    %c0_440 = arith.constant 0 : index
    %c0_441 = arith.constant 0 : index
    %819 = vector.load %arg4[%c0_440, %c0_441] : memref<128x128xbf16, #tpu.memory_space<vmem>>, vector<128x128xbf16>
    %cst_442 = arith.constant dense<0.000000e+00> : vector<8x128xf32>
    %820 = tpu.matmul %818, %819, %cst_442 {dimension_numbers = #tpu.dot_dimension_numbers<[1], [0], [0], [1], [0, 0, 1, 1], [], []>} : vector<8x128xbf16>, vector<128x128xbf16>, vector<8x128xf32> -> vector<8x128xf32>
    %c0_443 = arith.constant 0 : index
    %c0_444 = arith.constant 0 : index
    %821 = vector.load %arg5[%c0_443, %c0_444] : memref<1x128xf32, #tpu.memory_space<vmem>>, vector<1x128xf32>
    %822 = vector.broadcast %821 : vector<1x128xf32> to vector<8x128xf32>
    %823 = arith.addf %820, %822 : vector<8x128xf32>
    %cst_445 = arith.constant dense<0xFF800000> : vector<8xf32>
    %824 = vector.multi_reduction <maximumf>, %823, %cst_445 [1] : vector<8x128xf32> to vector<8xf32>
    %825 = vector.shape_cast %824 : vector<8xf32> to vector<8x1xf32>
    %826 = vector.broadcast %825 : vector<8x1xf32> to vector<8x128xf32>
    %827 = arith.subf %823, %826 : vector<8x128xf32>
    %828 = math.exp %827 : vector<8x128xf32>
    %cst_446 = arith.constant dense<0.000000e+00> : vector<8xf32>
    %829 = vector.multi_reduction <add>, %828, %cst_446 [1] : vector<8x128xf32> to vector<8xf32>
    %830 = vector.shape_cast %829 : vector<8xf32> to vector<8x1xf32>
    %831 = math.log %830 : vector<8x1xf32>
    %832 = arith.addf %825, %831 : vector<8x1xf32>
    %833 = vector.broadcast %832 : vector<8x1xf32> to vector<8x128xf32>
    %834 = arith.subf %823, %833 : vector<8x128xf32>
    %c0_447 = arith.constant 0 : index
    %c0_448 = arith.constant 0 : index
    %835 = vector.load %arg6[%c0_447, %c0_448] : memref<8x128xf32, #tpu.memory_space<vmem>>, vector<8x128xf32>
    tpu.vector_store %arg6[%c0_447, %c0_448], %834 {strides = array<i32>} : memref<8x128xf32, #tpu.memory_space<vmem>>, vector<8x128xf32>,
    return
  }
  func.func @transform_0(%arg0: i32, %arg1: memref<128xi32, #tpu.memory_space<smem>>) -> (i32, i32) {
    %c0_i32 = arith.constant 0 : i32
    %c0_i32_0 = arith.constant 0 : i32
    %c0_i32_1 = arith.constant 0 : i32
    return %c0_i32, %c0_i32_0 : i32, i32
  }
  func.func @transform_1(%arg0: i32, %arg1: memref<128xi32, #tpu.memory_space<smem>>) -> (i32, i32) {
    %c0_i32 = arith.constant 0 : i32
    %c0_i32_0 = arith.constant 0 : i32
    %c0_i32_1 = arith.constant 0 : i32
    return %c0_i32, %c0_i32_0 : i32, i32
  }
  func.func @transform_2(%arg0: i32, %arg1: memref<128xi32, #tpu.memory_space<smem>>) -> (i32, i32) {
    %c0_i32 = arith.constant 0 : i32
    %c0_i32_0 = arith.constant 0 : i32
    %c0_i32_1 = arith.constant 0 : i32
    return %c0_i32, %c0_i32_0 : i32, i32
  }
  func.func @transform_3(%arg0: i32, %arg1: memref<128xi32, #tpu.memory_space<smem>>) -> (i32, i32) {
    %c0_i32 = arith.constant 0 : i32
    %c0_i32_0 = arith.constant 0 : i32
    %c0_i32_1 = arith.constant 0 : i32
    return %c0_i32, %c0_i32_0 : i32, i32
  }
  func.func @transform_4(%arg0: i32, %arg1: memref<128xi32, #tpu.memory_space<smem>>) -> (i32, i32) {
    %c0_i32 = arith.constant 0 : i32
    %c0_i32_0 = arith.constant 0 : i32
    return %arg0, %c0_i32 : i32, i32
  }
}

</mosaic_0001>

<llo_original>
// kernel: lstm_classifier_forward_batch.1
$region0: #{lstm_classifier_forward_batch.1}
  #allocation0 [shape = 'u32[]', space=smem, size = 0x4, offset = 0x4, fixed_abs, tag = 'smem constant byte address 0x4 - core index']
  #allocation1 [shape = 'u32[72,128]{1,0:T(1,128)}', space=vmem, size = 0x9000, scoped, tag = 'internal scratch']
  #allocation2 [shape = 'f32[64,512]{1,0:T(8,128)}', space=vmem, size = 0x20000, scoped, tag = 'scratch operand']
  #allocation3 [shape = 's32[1]{0}', space=sflag, size = 0x4, scoped, tag = 'scoped memory for lstm_classifier_forward_batch.1']
  #allocation4 [shape = 'u8[512]{0}', space=smem, size = 0x200, scoped, tag = 'prefetched SMEM operand 0']
  %s0 = inlined_call_operand.vmem [shape: s32[128], index: 0, kind: input, shape index: {}]
  %s1 = inlined_call_operand.hbm [shape: f32[20,512], index: 1, kind: input, shape index: {}]
  %s2 = inlined_call_operand.hbm [shape: bf16[128,512], index: 2, kind: input, shape index: {}]
  %s3 = inlined_call_operand.hbm [shape: bf16[128,128], index: 3, kind: input, shape index: {}]
  %s4 = inlined_call_operand.vmem [shape: f32[1,128], index: 4, kind: input, shape index: {}]
  %s5 = inlined_call_operand.vmem [shape: f32[16,128], index: 5, kind: output, shape index: {}]
  %s6 = sld [smem:[#allocation0]]
  $region61: #{lstm_classifier_forward_batch.1} parent=0
    _
  %s8 = ssub.s32 1, %s6
  %s9 = scalar_select 0, %s8, %s6
  %s11 = sshll.u32 %s0, 4
  %s12 = int_to_ptr.vmem [resolvable:$true] %s11
  %14 = dma.vmem_to_smem %s12, 16, [#allocation4], [#allocation3]
  %16 = dma.done [#allocation3], 16
  %17 = sfence
  $region1: #{lstm_classifier_forward_batch.1} parent=0
    #allocation5 [shape = 'u8[49152]{0}', space=vmem, size = 0xc000, scoped, tag = 'input window, operand 1, single buffered']
    #allocation6 [shape = 's32[2]{0}', space=sflag, size = 0x8, scoped, tag = 'scoped memory for lstm_classifier_forward_batch.1']
    #allocation7 [shape = 'u8[131072]{0}', space=vmem, size = 0x20000, scoped, tag = 'input window, operand 2, single buffered']
    #allocation8 [shape = 's32[1]{0}', space=sflag, size = 0x4, scoped, tag = 'scoped memory for lstm_classifier_forward_batch.1']
    #allocation9 [shape = 'u8[32768]{0}', space=vmem, size = 0x8000, scoped, tag = 'input window, operand 3, single buffered']
    %18 = vsyncpa [#allocation6], 0
    %19 = vsyncpa [#allocation8], 0
    loop: start=0, step=1, limit=4
    $region2: #{lstm_classifier_forward_batch.1} parent=1 // loop_pre_header
      _
    $region3: #{lstm_classifier_forward_batch.1} parent=1 // loop_header
      %s21 = sphi 0, %s25
      %p22 = scmp.ge.s32.totalorder %s21, 4
      %s29 = sphi 0, %s29
      %s31 = sphi 0, %s29
      %s32 = sphi 0, %s31
      %s46 = sphi 0, %s32
      %s50 = sphi 0, %s50
      %s52 = sphi 0, %s50
      %s53 = sphi 0, %s52
      %s67 = sphi 0, %s53
      %s71 = sphi 0, %s71
      %s73 = sphi 0, %s71
      %s74 = sphi 0, %s73
      %s88 = sphi 0, %s74
      %s92 = sphi 0, %s92
      %s94 = sphi 0, %s92
      %s95 = sphi 0, %s94
      %s109 = sphi 0, %s95
      %s115 = sphi 0, %s117
      %s118 = sphi 0, %s115
      %s119 = sphi 0, %s118
      %s135 = sphi 0, %s119
    $region4: #{lstm_classifier_forward_batch.1} parent=1 // loop_header_branch
      %24 = sbr.rel (%p22) target = $region8
    $region5: #{lstm_classifier_forward_batch.1} parent=1 // loop_body
      %s26 = ssub.s32 %s21, 1
      %s27 = ssub.s32 %s21, 2
      %s28 = sadd.s32 %s21, 1
      %s30 = sadd.s32 %s29, 1
      %p33 = scmp.eq.s32.totalorder %s21, 1
      %p34 = scmp.ne.s32.totalorder %s29, %s31
      %p35 = scmp.eq.s32.totalorder %s21, 0
      %p36 = por %p34, %p35
      %p37 = scmp.ne.s32.totalorder %s29, %s31
      %p38 = scmp.eq.s32.totalorder %s26, 1
      %p39 = por %p37, %p38
      %p40 = scmp.ne.s32.totalorder %s31, %s32
      %p41 = scmp.eq.s32.totalorder %s26, 0
      %p42 = por %p40, %p41
      %p43 = scmp.ne.s32.totalorder %s31, %s32
      %p44 = scmp.eq.s32.totalorder %s27, 1
      %p45 = por %p43, %p44
      %p47 = scmp.ne.s32.totalorder %s32, %s46
      %p48 = scmp.eq.s32.totalorder %s27, 0
      %p49 = por %p47, %p48
      %s51 = sadd.s32 %s50, 1
      %p54 = scmp.eq.s32.totalorder %s21, 1
      %p55 = scmp.ne.s32.totalorder %s50, %s52
      %p56 = scmp.eq.s32.totalorder %s21, 0
      %p57 = por %p55, %p56
      %p58 = scmp.ne.s32.totalorder %s50, %s52
      %p59 = scmp.eq.s32.totalorder %s26, 1
      %p60 = por %p58, %p59
      %p61 = scmp.ne.s32.totalorder %s52, %s53
      %p62 = scmp.eq.s32.totalorder %s26, 0
      %p63 = por %p61, %p62
      %p64 = scmp.ne.s32.totalorder %s52, %s53
      %p65 = scmp.eq.s32.totalorder %s27, 1
      %p66 = por %p64, %p65
      %p68 = scmp.ne.s32.totalorder %s53, %s67
      %p69 = scmp.eq.s32.totalorder %s27, 0
      %p70 = por %p68, %p69
      %s72 = sadd.s32 %s71, 1
      %p75 = scmp.eq.s32.totalorder %s21, 1
      %p76 = scmp.ne.s32.totalorder %s71, %s73
      %p77 = scmp.eq.s32.totalorder %s21, 0
      %p78 = por %p76, %p77
      %p79 = scmp.ne.s32.totalorder %s71, %s73
      %p80 = scmp.eq.s32.totalorder %s26, 1
      %p81 = por %p79, %p80
      %p82 = scmp.ne.s32.totalorder %s73, %s74
      %p83 = scmp.eq.s32.totalorder %s26, 0
      %p84 = por %p82, %p83
      %p85 = scmp.ne.s32.totalorder %s73, %s74
      %p86 = scmp.eq.s32.totalorder %s27, 1
      %p87 = por %p85, %p86
      %p89 = scmp.ne.s32.totalorder %s74, %s88
      %p90 = scmp.eq.s32.totalorder %s27, 0
      %p91 = por %p89, %p90
      %s93 = sadd.s32 %s92, 1
      %p96 = scmp.eq.s32.totalorder %s21, 1
      %p97 = scmp.ne.s32.totalorder %s92, %s94
      %p98 = scmp.eq.s32.totalorder %s21, 0
      %p99 = por %p97, %p98
      %p100 = scmp.ne.s32.totalorder %s92, %s94
      %p101 = scmp.eq.s32.totalorder %s26, 1
      %p102 = por %p100, %p101
      %p103 = scmp.ne.s32.totalorder %s94, %s95
      %p104 = scmp.eq.s32.totalorder %s26, 0
      %p105 = por %p103, %p104
      %p106 = scmp.ne.s32.totalorder %s94, %s95
      %p107 = scmp.eq.s32.totalorder %s27, 1
      %p108 = por %p106, %p107
      %p110 = scmp.ne.s32.totalorder %s95, %s109
      %p111 = scmp.eq.s32.totalorder %s27, 0
      %p112 = por %p110, %p111
      %s113 = ssub.s32 %s21, %s28
      %p114 = scmp.eq.s32.totalorder %s113, 0
      %s116 = sadd.s32 %s115, 1
      %s117 = scalar_select %p114, %s115, %s116
      %p120 = pneg %p114
      %p121 = scmp.eq.s32.totalorder %s21, 1
      %p122 = por %p120, %p121
      %p123 = scmp.ne.s32.totalorder %s115, %s118
      %p124 = scmp.eq.s32.totalorder %s21, 0
      %p125 = por %p123, %p124
      %p126 = scmp.ne.s32.totalorder %s115, %s118
      %p127 = scmp.eq.s32.totalorder %s26, 1
      %p128 = por %p126, %p127
      %p129 = scmp.ne.s32.totalorder %s118, %s119
      %p130 = scmp.eq.s32.totalorder %s26, 0
      %p131 = por %p129, %p130
      %p132 = scmp.ne.s32.totalorder %s118, %s119
      %p133 = scmp.eq.s32.totalorder %s27, 1
      %p134 = por %p132, %p133
      %p136 = scmp.ne.s32.totalorder %s119, %s135
      %p137 = scmp.eq.s32.totalorder %s27, 0
      %p138 = por %p136, %p137
      %p139 = scmp.le.s32.totalorder 1, %s21
      %p140 = scmp.lt.s32.totalorder %s21, 3
      %p141 = pnand %p139, %p140
      %p142 = pneg %p141
      // Predicated region
      $region9: #{lstm_classifier_forward_batch.1} parent=5 // pred_check
        _
      $region10: #{lstm_classifier_forward_batch.1} parent=5 // pred_check_branch
        %144 = sbr.rel (%p141) target = $region12
      $region11: #{lstm_classifier_forward_batch.1} parent=5 // pred_region
        %s145 = ssub.s32 %s21, 1
        // Predicated region
        $region13: #{lstm_classifier_forward_batch.1} parent=11 // pred_check
          %p146 = pneg %p42
        $region14: #{lstm_classifier_forward_batch.1} parent=11 // pred_check_branch
          %148 = sbr.rel (%p146) target = $region16
        $region15: #{lstm_classifier_forward_batch.1} parent=11 // pred_region
          %150 = vsyncadd [#allocation6], 0
          %s151 = sshll.u32 %s1, 4
          %s152 = int_to_ptr.hbm [resolvable:$true] %s151
          %s153 = sshll.u32 [#allocation5], 4
          %s154 = int_to_ptr.vmem [resolvable:$true] %s153
          %159 = dma.hbm_to_vmem [thread:$0]  %s152, 1536, %s154, [#allocation6], 512, 512, 32
        $region16: #{lstm_classifier_forward_batch.1} parent=11 // pred_fallthru
          _
        // Predicated region
        $region17: #{lstm_classifier_forward_batch.1} parent=11 // pred_check
          %p160 = pneg %p63
        $region18: #{lstm_classifier_forward_batch.1} parent=11 // pred_check_branch
          %162 = sbr.rel (%p160) target = $region20
        $region19: #{lstm_classifier_forward_batch.1} parent=11 // pred_region
          %164 = vsyncadd [#allocation8], 0
          %s165 = sshll.u32 %s2, 4
          %s166 = int_to_ptr.hbm [resolvable:$true] %s165
          %s167 = sshll.u32 [#allocation7], 4
          %s168 = int_to_ptr.vmem [resolvable:$true] %s167
          %173 = dma.hbm_to_vmem [thread:$0]  %s166, 4096, %s168, [#allocation8], 256, 256, 16
        $region20: #{lstm_classifier_forward_batch.1} parent=11 // pred_fallthru
          _
        // Predicated region
        $region21: #{lstm_classifier_forward_batch.1} parent=11 // pred_check
          %p174 = pneg %p84
        $region22: #{lstm_classifier_forward_batch.1} parent=11 // pred_check_branch
          %176 = sbr.rel (%p174) target = $region24
        $region23: #{lstm_classifier_forward_batch.1} parent=11 // pred_region
          %178 = vsyncadd [#allocation8], 0
          %s179 = sshll.u32 %s3, 4
          %s180 = int_to_ptr.hbm [resolvable:$true] %s179
          %s181 = sshll.u32 [#allocation9], 4
          %s182 = int_to_ptr.vmem [resolvable:$true] %s181
          %187 = dma.hbm_to_vmem [thread:$0]  %s180, 1024, %s182, [#allocation8], 64, 64, 4
        $region24: #{lstm_classifier_forward_batch.1} parent=11 // pred_fallthru
          _
        // Predicated region
        $region25: #{lstm_classifier_forward_batch.1} parent=11 // pred_check
          %p188 = pneg %p105
        $region26: #{lstm_classifier_forward_batch.1} parent=11 // pred_check_branch
          %190 = sbr.rel (%p188) target = $region28
        $region27: #{lstm_classifier_forward_batch.1} parent=11 // pred_region
          _
        $region28: #{lstm_classifier_forward_batch.1} parent=11 // pred_fallthru
          _
      $region12: #{lstm_classifier_forward_batch.1} parent=5 // pred_fallthru
        _
      %p191 = scmp.lt.s32.totalorder %s21, 2
      // Predicated region
      $region29: #{lstm_classifier_forward_batch.1} parent=5 // pred_check
        %p192 = pneg %p191
      $region30: #{lstm_classifier_forward_batch.1} parent=5 // pred_check_branch
        %194 = sbr.rel (%p192) target = $region32
      $region31: #{lstm_classifier_forward_batch.1} parent=5 // pred_region
        _
      $region32: #{lstm_classifier_forward_batch.1} parent=5 // pred_fallthru
        _
      %p195 = scmp.le.s32.totalorder 1, %s21
      %p196 = scmp.lt.s32.totalorder %s21, 3
      %p197 = pnand %p195, %p196
      %p198 = pneg %p197
      // Predicated region
      $region33: #{lstm_classifier_forward_batch.1} parent=5 // pred_check
        _
      $region34: #{lstm_classifier_forward_batch.1} parent=5 // pred_check_branch
        %200 = sbr.rel (%p197) target = $region36
      $region35: #{lstm_classifier_forward_batch.1} parent=5 // pred_region
        %s201 = ssub.s32 %s21, 1
        // Predicated region
        $region37: #{lstm_classifier_forward_batch.1} parent=35 // pred_check
          %p202 = pneg %p42
        $region38: #{lstm_classifier_forward_batch.1} parent=35 // pred_check_branch
          %204 = sbr.rel (%p202) target = $region40
        $region39: #{lstm_classifier_forward_batch.1} parent=35 // pred_region
          %206 = dma.done [#allocation6], 1536
        $region40: #{lstm_classifier_forward_batch.1} parent=35 // pred_fallthru
          _
        // Predicated region
        $region41: #{lstm_classifier_forward_batch.1} parent=35 // pred_check
          %p207 = pneg %p63
        $region42: #{lstm_classifier_forward_batch.1} parent=35 // pred_check_branch
          %209 = sbr.rel (%p207) target = $region44
        $region43: #{lstm_classifier_forward_batch.1} parent=35 // pred_region
          %211 = dma.done [#allocation8], 4096
        $region44: #{lstm_classifier_forward_batch.1} parent=35 // pred_fallthru
          _
        // Predicated region
        $region45: #{lstm_classifier_forward_batch.1} parent=35 // pred_check
          %p212 = pneg %p84
        $region46: #{lstm_classifier_forward_batch.1} parent=35 // pred_check_branch
          %214 = sbr.rel (%p212) target = $region48
        $region47: #{lstm_classifier_forward_batch.1} parent=35 // pred_region
          %216 = dma.done [#allocation8], 1024
        $region48: #{lstm_classifier_forward_batch.1} parent=35 // pred_fallthru
          _
        %p217 = pneg %p42
        %p218 = pneg %p39
        %p219 = pneg %p63
        %p220 = pneg %p60
        %p221 = pneg %p84
        %p222 = pneg %p81
        %p223 = pneg %p105
        %p224 = pneg %p102
        %p225 = pneg %p131
        %p226 = pneg %p128
        %p227 = scmp.lt.s32.totalorder %s26, 1
        %s228 = scalar_select %p227, %s26, 1
        %s229 = smul.addr %s228, 8
        %s230 = scalar_lea.vmem %s5, %s229
        %p231 = scmp.lt.s32.totalorder %s26, 1
        %s232 = scalar_select %p231, %s26, 1
        %s233 = smul.addr %s232, 8
        %s234 = scalar_lea.vmem %s5, %s233
        %s236 = smul.u32 %s26, 64
        %s237 = sld [smem:[#allocation4 + %s236]]
        %s238 = sshra.s32 %s237, 3
        %s239 = sand.u32 %s237, 7
        %s240 = sshra.s32 %s237, 3
        %s241 = sand.u32 %s237, 7
        %s242 = smul.u32 %s238, 4
        %s243 = smul.u32 %s242, 8
        %s244 = sadd.s32 %s243, %s241
        %s245 = scalar_lea.vmem [#allocation5], %s244
        %v246 = vld [vmem:[%s245] ss:$8 sm:$0xf]
        %v247 = vlaneseq
        %vm248 = vcmp.ge.s32.totalorder %v247, 0
        %vm249 = vcmp.lt.s32.totalorder %v247, 512
        %vm250 = vmand %vm248, %vm249
        %251 = vst.msk [vmem:[#allocation2] ss:$8 sm:$0xf] %vm250, %v246
        %252 = vst.msk [vmem:[#allocation2] ss:$8 sm:$0x0] %vm250, %v246
        %s253 = smul.u32 %s26, 8
        %s254 = sadd.s32 %s253, 1
        %s255 = smul.u32 %s254, 8
        %s256 = sld [smem:[#allocation4 + %s255]]
        %s257 = sshra.s32 %s256, 3
        %s258 = sand.u32 %s256, 7
        %s259 = sshra.s32 %s256, 3
        %s260 = sand.u32 %s256, 7
        %s261 = smul.u32 %s257, 4
        %s262 = smul.u32 %s261, 8
        %s263 = sadd.s32 %s262, %s260
        %s264 = scalar_lea.vmem [#allocation5], %s263
        %v265 = vld [vmem:[%s264] ss:$8 sm:$0xf]
        %s266 = scalar_lea.vmem [#allocation2], 1
        %267 = vst.msk [vmem:[%s266] ss:$8 sm:$0xf] %vm250, %v265
        %268 = vst.msk [vmem:[%s266] ss:$8 sm:$0x0] %vm250, %v265
        %s269 = sadd.s32 %s253, 2
        %s270 = smul.u32 %s269, 8
        %s271 = sld [smem:[#allocation4 + %s270]]
        %s272 = sshra.s32 %s271, 3
        %s273 = sand.u32 %s271, 7
        %s274 = sshra.s32 %s271, 3
        %s275 = sand.u32 %s271, 7
        %s276 = smul.u32 %s272, 4
        %s277 = smul.u32 %s276, 8
        %s278 = sadd.s32 %s277, %s275
        %s279 = scalar_lea.vmem [#allocation5], %s278
        %v280 = vld [vmem:[%s279] ss:$8 sm:$0xf]
        %s281 = scalar_lea.vmem [#allocation2], 2
        %282 = vst.msk [vmem:[%s281] ss:$8 sm:$0xf] %vm250, %v280
        %283 = vst.msk [vmem:[%s281] ss:$8 sm:$0x0] %vm250, %v280
        %s284 = sadd.s32 %s253, 3
        %s285 = smul.u32 %s284, 8
        %s286 = sld [smem:[#allocation4 + %s285]]
        %s287 = sshra.s32 %s286, 3
        %s288 = sand.u32 %s286, 7
        %s289 = sshra.s32 %s286, 3
        %s290 = sand.u32 %s286, 7
        %s291 = smul.u32 %s287, 4
        %s292 = smul.u32 %s291, 8
        %s293 = sadd.s32 %s292, %s290
        %s294 = scalar_lea.vmem [#allocation5], %s293
        %v295 = vld [vmem:[%s294] ss:$8 sm:$0xf]
        %s296 = scalar_lea.vmem [#allocation2], 3
        %297 = vst.msk [vmem:[%s296] ss:$8 sm:$0xf] %vm250, %v295
        %298 = vst.msk [vmem:[%s296] ss:$8 sm:$0x0] %vm250, %v295
        %s299 = sadd.s32 %s253, 4
        %s300 = smul.u32 %s299, 8
        %s301 = sld [smem:[#allocation4 + %s300]]
        %s302 = sshra.s32 %s301, 3
        %s303 = sand.u32 %s301, 7
        %s304 = sshra.s32 %s301, 3
        %s305 = sand.u32 %s301, 7
        %s306 = smul.u32 %s302, 4
        %s307 = smul.u32 %s306, 8
        %s308 = sadd.s32 %s307, %s305
        %s309 = scalar_lea.vmem [#allocation5], %s308
        %v310 = vld [vmem:[%s309] ss:$8 sm:$0xf]
        %s311 = scalar_lea.vmem [#allocation2], 4
        %312 = vst.msk [vmem:[%s311] ss:$8 sm:$0xf] %vm250, %v310
        %313 = vst.msk [vmem:[%s311] ss:$8 sm:$0x0] %vm250, %v310
        %s314 = sadd.s32 %s253, 5
        %s315 = smul.u32 %s314, 8
        %s316 = sld [smem:[#allocation4 + %s315]]
        %s317 = sshra.s32 %s316, 3
        %s318 = sand.u32 %s316, 7
        %s319 = sshra.s32 %s316, 3
        %s320 = sand.u32 %s316, 7
        %s321 = smul.u32 %s317, 4
        %s322 = smul.u32 %s321, 8
        %s323 = sadd.s32 %s322, %s320
        %s324 = scalar_lea.vmem [#allocation5], %s323
        %v325 = vld [vmem:[%s324] ss:$8 sm:$0xf]
        %s326 = scalar_lea.vmem [#allocation2], 5
        %327 = vst.msk [vmem:[%s326] ss:$8 sm:$0xf] %vm250, %v325
        %328 = vst.msk [vmem:[%s326] ss:$8 sm:$0x0] %vm250, %v325
        %s329 = sadd.s32 %s253, 6
        %s330 = smul.u32 %s329, 8
        %s331 = sld [smem:[#allocation4 + %s330]]
        %s332 = sshra.s32 %s331, 3
        %s333 = sand.u32 %s331, 7
        %s334 = sshra.s32 %s331, 3
        %s335 = sand.u32 %s331, 7
        %s336 = smul.u32 %s332, 4
        %s337 = smul.u32 %s336, 8
        %s338 = sadd.s32 %s337, %s335
        %s339 = scalar_lea.vmem [#allocation5], %s338
        %v340 = vld [vmem:[%s339] ss:$8 sm:$0xf]
        %s341 = scalar_lea.vmem [#allocation2], 6
        %342 = vst.msk [vmem:[%s341] ss:$8 sm:$0xf] %vm250, %v340
        %343 = vst.msk [vmem:[%s341] ss:$8 sm:$0x0] %vm250, %v340
        %s344 = sadd.s32 %s253, 7
        %s345 = smul.u32 %s344, 8
        %s346 = sld [smem:[#allocation4 + %s345]]
        %s347 = sshra.s32 %s346, 3
        %s348 = sand.u32 %s346, 7
        %s349 = sshra.s32 %s346, 3
        %s350 = sand.u32 %s346, 7
        %s351 = smul.u32 %s347, 4
        %s352 = smul.u32 %s351, 8
        %s353 = sadd.s32 %s352, %s350
        %s354 = scalar_lea.vmem [#allocation5], %s353
        %v355 = vld [vmem:[%s354] ss:$8 sm:$0xf]
        %s356 = scalar_lea.vmem [#allocation2], 7
        %357 = vst.msk [vmem:[%s356] ss:$8 sm:$0xf] %vm250, %v355
        %358 = vst.msk [vmem:[%s356] ss:$8 sm:$0x0] %vm250, %v355
        %s359 = sadd.s32 %s236, 1
        %s360 = sld [smem:[#allocation4 + %s359]]
        %s361 = sshra.s32 %s360, 3
        %s362 = sand.u32 %s360, 7
        %s363 = sshra.s32 %s360, 3
        %s364 = sand.u32 %s360, 7
        %s365 = smul.u32 %s361, 4
        %s366 = smul.u32 %s365, 8
        %s367 = sadd.s32 %s366, %s364
        %s368 = scalar_lea.vmem [#allocation5], %s367
        %v369 = vld [vmem:[%s368] ss:$8 sm:$0xf]
        %s370 = scalar_lea.vmem [#allocation2], 32
        %371 = vst.msk [vmem:[%s370] ss:$8 sm:$0xf] %vm250, %v369
        %372 = vst.msk [vmem:[%s370] ss:$8 sm:$0x0] %vm250, %v369
        %s373 = sadd.s32 %s255, 1
        %s374 = sld [smem:[#allocation4 + %s373]]
        %s375 = sshra.s32 %s374, 3
        %s376 = sand.u32 %s374, 7
        %s377 = sshra.s32 %s374, 3
        %s378 = sand.u32 %s374, 7
        %s379 = smul.u32 %s375, 4
        %s380 = smul.u32 %s379, 8
        %s381 = sadd.s32 %s380, %s378
        %s382 = scalar_lea.vmem [#allocation5], %s381
        %v383 = vld [vmem:[%s382] ss:$8 sm:$0xf]
        %s384 = scalar_lea.vmem [#allocation2], 33
        %385 = vst.msk [vmem:[%s384] ss:$8 sm:$0xf] %vm250, %v383
        %386 = vst.msk [vmem:[%s384] ss:$8 sm:$0x0] %vm250, %v383
        %s387 = sadd.s32 %s270, 1
        %s388 = sld [smem:[#allocation4 + %s387]]
        %s389 = sshra.s32 %s388, 3
        %s390 = sand.u32 %s388, 7
        %s391 = sshra.s32 %s388, 3
        %s392 = sand.u32 %s388, 7
        %s393 = smul.u32 %s389, 4
        %s394 = smul.u32 %s393, 8
        %s395 = sadd.s32 %s394, %s392
        %s396 = scalar_lea.vmem [#allocation5], %s395
        %v397 = vld [vmem:[%s396] ss:$8 sm:$0xf]
        %s398 = scalar_lea.vmem [#allocation2], 34
        %399 = vst.msk [vmem:[%s398] ss:$8 sm:$0xf] %vm250, %v397
        %400 = vst.msk [vmem:[%s398] ss:$8 sm:$0x0] %vm250, %v397
        %s401 = sadd.s32 %s285, 1
        %s402 = sld [smem:[#allocation4 + %s401]]
        %s403 = sshra.s32 %s402, 3
        %s404 = sand.u32 %s402, 7
        %s405 = sshra.s32 %s402, 3
        %s406 = sand.u32 %s402, 7
        %s407 = smul.u32 %s403, 4
        %s408 = smul.u32 %s407, 8
        %s409 = sadd.s32 %s408, %s406
        %s410 = scalar_lea.vmem [#allocation5], %s409
        %v411 = vld [vmem:[%s410] ss:$8 sm:$0xf]
        %s412 = scalar_lea.vmem [#allocation2], 35
        %413 = vst.msk [vmem:[%s412] ss:$8 sm:$0xf] %vm250, %v411
        %414 = vst.msk [vmem:[%s412] ss:$8 sm:$0x0] %vm250, %v411
        %s415 = sadd.s32 %s300, 1
        %s416 = sld [smem:[#allocation4 + %s415]]
        %s417 = sshra.s32 %s416, 3
        %s418 = sand.u32 %s416, 7
        %s419 = sshra.s32 %s416, 3
        %s420 = sand.u32 %s416, 7
        %s421 = smul.u32 %s417, 4
        %s422 = smul.u32 %s421, 8
        %s423 = sadd.s32 %s422, %s420
        %s424 = scalar_lea.vmem [#allocation5], %s423
        %v425 = vld [vmem:[%s424] ss:$8 sm:$0xf]
        %s426 = scalar_lea.vmem [#allocation2], 36
        %427 = vst.msk [vmem:[%s426] ss:$8 sm:$0xf] %vm250, %v425
        %428 = vst.msk [vmem:[%s426] ss:$8 sm:$0x0] %vm250, %v425
        %s429 = sadd.s32 %s315, 1
        %s430 = sld [smem:[#allocation4 + %s429]]
        %s431 = sshra.s32 %s430, 3
        %s432 = sand.u32 %s430, 7
        %s433 = sshra.s32 %s430, 3
        %s434 = sand.u32 %s430, 7
        %s435 = smul.u32 %s431, 4
        %s436 = smul.u32 %s435, 8
        %s437 = sadd.s32 %s436, %s434
        %s438 = scalar_lea.vmem [#allocation5], %s437
        %v439 = vld [vmem:[%s438] ss:$8 sm:$0xf]
        %s440 = scalar_lea.vmem [#allocation2], 37
        %441 = vst.msk [vmem:[%s440] ss:$8 sm:$0xf] %vm250, %v439
        %442 = vst.msk [vmem:[%s440] ss:$8 sm:$0x0] %vm250, %v439
        %s443 = sadd.s32 %s330, 1
        %s444 = sld [smem:[#allocation4 + %s443]]
        %s445 = sshra.s32 %s444, 3
        %s446 = sand.u32 %s444, 7
        %s447 = sshra.s32 %s444, 3
        %s448 = sand.u32 %s444, 7
        %s449 = smul.u32 %s445, 4
        %s450 = smul.u32 %s449, 8
        %s451 = sadd.s32 %s450, %s448
        %s452 = scalar_lea.vmem [#allocation5], %s451
        %v453 = vld [vmem:[%s452] ss:$8 sm:$0xf]
        %s454 = scalar_lea.vmem [#allocation2], 38
        %455 = vst.msk [vmem:[%s454] ss:$8 sm:$0xf] %vm250, %v453
        %456 = vst.msk [vmem:[%s454] ss:$8 sm:$0x0] %vm250, %v453
        %s457 = sadd.s32 %s345, 1
        %s458 = sld [smem:[#allocation4 + %s457]]
        %s459 = sshra.s32 %s458, 3
        %s460 = sand.u32 %s458, 7
        %s461 = sshra.s32 %s458, 3
        %s462 = sand.u32 %s458, 7
        %s463 = smul.u32 %s459, 4
        %s464 = smul.u32 %s463, 8
        %s465 = sadd.s32 %s464, %s462
        %s466 = scalar_lea.vmem [#allocation5], %s465
        %v467 = vld [vmem:[%s466] ss:$8 sm:$0xf]
        %s468 = scalar_lea.vmem [#allocation2], 39
        %469 = vst.msk [vmem:[%s468] ss:$8 sm:$0xf] %vm250, %v467
        %470 = vst.msk [vmem:[%s468] ss:$8 sm:$0x0] %vm250, %v467
        %s471 = sadd.s32 %s236, 2
        %s472 = sld [smem:[#allocation4 + %s471]]
        %s473 = sshra.s32 %s472, 3
        %s474 = sand.u32 %s472, 7
        %s475 = sshra.s32 %s472, 3
        %s476 = sand.u32 %s472, 7
        %s477 = smul.u32 %s473, 4
        %s478 = smul.u32 %s477, 8
        %s479 = sadd.s32 %s478, %s476
        %s480 = scalar_lea.vmem [#allocation5], %s479
        %v481 = vld [vmem:[%s480] ss:$8 sm:$0xf]
        %s482 = scalar_lea.vmem [#allocation2], 64
        %483 = vst.msk [vmem:[%s482] ss:$8 sm:$0xf] %vm250, %v481
        %484 = vst.msk [vmem:[%s482] ss:$8 sm:$0x0] %vm250, %v481
        %s485 = sadd.s32 %s255, 2
        %s486 = sld [smem:[#allocation4 + %s485]]
        %s487 = sshra.s32 %s486, 3
        %s488 = sand.u32 %s486, 7
        %s489 = sshra.s32 %s486, 3
        %s490 = sand.u32 %s486, 7
        %s491 = smul.u32 %s487, 4
        %s492 = smul.u32 %s491, 8
        %s493 = sadd.s32 %s492, %s490
        %s494 = scalar_lea.vmem [#allocation5], %s493
        %v495 = vld [vmem:[%s494] ss:$8 sm:$0xf]
        %s496 = scalar_lea.vmem [#allocation2], 65
        %497 = vst.msk [vmem:[%s496] ss:$8 sm:$0xf] %vm250, %v495
        %498 = vst.msk [vmem:[%s496] ss:$8 sm:$0x0] %vm250, %v495
        %s499 = sadd.s32 %s270, 2
        %s500 = sld [smem:[#allocation4 + %s499]]
        %s501 = sshra.s32 %s500, 3
        %s502 = sand.u32 %s500, 7
        %s503 = sshra.s32 %s500, 3
        %s504 = sand.u32 %s500, 7
        %s505 = smul.u32 %s501, 4
        %s506 = smul.u32 %s505, 8
        %s507 = sadd.s32 %s506, %s504
        %s508 = scalar_lea.vmem [#allocation5], %s507
        %v509 = vld [vmem:[%s508] ss:$8 sm:$0xf]
        %s510 = scalar_lea.vmem [#allocation2], 66
        %511 = vst.msk [vmem:[%s510] ss:$8 sm:$0xf] %vm250, %v509
        %512 = vst.msk [vmem:[%s510] ss:$8 sm:$0x0] %vm250, %v509
        %s513 = sadd.s32 %s285, 2
        %s514 = sld [smem:[#allocation4 + %s513]]
        %s515 = sshra.s32 %s514, 3
        %s516 = sand.u32 %s514, 7
        %s517 = sshra.s32 %s514, 3
        %s518 = sand.u32 %s514, 7
        %s519 = smul.u32 %s515, 4
        %s520 = smul.u32 %s519, 8
        %s521 = sadd.s32 %s520, %s518
        %s522 = scalar_lea.vmem [#allocation5], %s521
        %v523 = vld [vmem:[%s522] ss:$8 sm:$0xf]
        %s524 = scalar_lea.vmem [#allocation2], 67
        %525 = vst.msk [vmem:[%s524] ss:$8 sm:$0xf] %vm250, %v523
        %526 = vst.msk [vmem:[%s524] ss:$8 sm:$0x0] %vm250, %v523
        %s527 = sadd.s32 %s300, 2
        %s528 = sld [smem:[#allocation4 + %s527]]
        %s529 = sshra.s32 %s528, 3
        %s530 = sand.u32 %s528, 7
        %s531 = sshra.s32 %s528, 3
        %s532 = sand.u32 %s528, 7
        %s533 = smul.u32 %s529, 4
        %s534 = smul.u32 %s533, 8
        %s535 = sadd.s32 %s534, %s532
        %s536 = scalar_lea.vmem [#allocation5], %s535
        %v537 = vld [vmem:[%s536] ss:$8 sm:$0xf]
        %s538 = scalar_lea.vmem [#allocation2], 68
        %539 = vst.msk [vmem:[%s538] ss:$8 sm:$0xf] %vm250, %v537
        %540 = vst.msk [vmem:[%s538] ss:$8 sm:$0x0] %vm250, %v537
        %s541 = sadd.s32 %s315, 2
        %s542 = sld [smem:[#allocation4 + %s541]]
        %s543 = sshra.s32 %s542, 3
        %s544 = sand.u32 %s542, 7
        %s545 = sshra.s32 %s542, 3
        %s546 = sand.u32 %s542, 7
        %s547 = smul.u32 %s543, 4
        %s548 = smul.u32 %s547, 8
        %s549 = sadd.s32 %s548, %s546
        %s550 = scalar_lea.vmem [#allocation5], %s549
        %v551 = vld [vmem:[%s550] ss:$8 sm:$0xf]
        %s552 = scalar_lea.vmem [#allocation2], 69
        %553 = vst.msk [vmem:[%s552] ss:$8 sm:$0xf] %vm250, %v551
        %554 = vst.msk [vmem:[%s552] ss:$8 sm:$0x0] %vm250, %v551
        %s555 = sadd.s32 %s330, 2
        %s556 = sld [smem:[#allocation4 + %s555]]
        %s557 = sshra.s32 %s556, 3
        %s558 = sand.u32 %s556, 7
        %s559 = sshra.s32 %s556, 3
        %s560 = sand.u32 %s556, 7
        %s561 = smul.u32 %s557, 4
        %s562 = smul.u32 %s561, 8
        %s563 = sadd.s32 %s562, %s560
        %s564 = scalar_lea.vmem [#allocation5], %s563
        %v565 = vld [vmem:[%s564] ss:$8 sm:$0xf]
        %s566 = scalar_lea.vmem [#allocation2], 70
        %567 = vst.msk [vmem:[%s566] ss:$8 sm:$0xf] %vm250, %v565
        %568 = vst.msk [vmem:[%s566] ss:$8 sm:$0x0] %vm250, %v565
        %s569 = sadd.s32 %s345, 2
        %s570 = sld [smem:[#allocation4 + %s569]]
        %s571 = sshra.s32 %s570, 3
        %s572 = sand.u32 %s570, 7
        %s573 = sshra.s32 %s570, 3
        %s574 = sand.u32 %s570, 7
        %s575 = smul.u32 %s571, 4
        %s576 = smul.u32 %s575, 8
        %s577 = sadd.s32 %s576, %s574
        %s578 = scalar_lea.vmem [#allocation5], %s577
        %v579 = vld [vmem:[%s578] ss:$8 sm:$0xf]
        %s580 = scalar_lea.vmem [#allocation2], 71
        %581 = vst.msk [vmem:[%s580] ss:$8 sm:$0xf] %vm250, %v579
        %582 = vst.msk [vmem:[%s580] ss:$8 sm:$0x0] %vm250, %v579
        %s583 = sadd.s32 %s236, 3
        %s584 = sld [smem:[#allocation4 + %s583]]
        %s585 = sshra.s32 %s584, 3
        %s586 = sand.u32 %s584, 7
        %s587 = sshra.s32 %s584, 3
        %s588 = sand.u32 %s584, 7
        %s589 = smul.u32 %s585, 4
        %s590 = smul.u32 %s589, 8
        %s591 = sadd.s32 %s590, %s588
        %s592 = scalar_lea.vmem [#allocation5], %s591
        %v593 = vld [vmem:[%s592] ss:$8 sm:$0xf]
        %s594 = scalar_lea.vmem [#allocation2], 96
        %595 = vst.msk [vmem:[%s594] ss:$8 sm:$0xf] %vm250, %v593
        %596 = vst.msk [vmem:[%s594] ss:$8 sm:$0x0] %vm250, %v593
        %s597 = sadd.s32 %s255, 3
        %s598 = sld [smem:[#allocation4 + %s597]]
        %s599 = sshra.s32 %s598, 3
        %s600 = sand.u32 %s598, 7
        %s601 = sshra.s32 %s598, 3
        %s602 = sand.u32 %s598, 7
        %s603 = smul.u32 %s599, 4
        %s604 = smul.u32 %s603, 8
        %s605 = sadd.s32 %s604, %s602
        %s606 = scalar_lea.vmem [#allocation5], %s605
        %v607 = vld [vmem:[%s606] ss:$8 sm:$0xf]
        %s608 = scalar_lea.vmem [#allocation2], 97
        %609 = vst.msk [vmem:[%s608] ss:$8 sm:$0xf] %vm250, %v607
        %610 = vst.msk [vmem:[%s608] ss:$8 sm:$0x0] %vm250, %v607
        %s611 = sadd.s32 %s270, 3
        %s612 = sld [smem:[#allocation4 + %s611]]
        %s613 = sshra.s32 %s612, 3
        %s614 = sand.u32 %s612, 7
        %s615 = sshra.s32 %s612, 3
        %s616 = sand.u32 %s612, 7
        %s617 = smul.u32 %s613, 4
        %s618 = smul.u32 %s617, 8
        %s619 = sadd.s32 %s618, %s616
        %s620 = scalar_lea.vmem [#allocation5], %s619
        %v621 = vld [vmem:[%s620] ss:$8 sm:$0xf]
        %s622 = scalar_lea.vmem [#allocation2], 98
        %623 = vst.msk [vmem:[%s622] ss:$8 sm:$0xf] %vm250, %v621
        %624 = vst.msk [vmem:[%s622] ss:$8 sm:$0x0] %vm250, %v621
        %s625 = sadd.s32 %s285, 3
        %s626 = sld [smem:[#allocation4 + %s625]]
        %s627 = sshra.s32 %s626, 3
        %s628 = sand.u32 %s626, 7
        %s629 = sshra.s32 %s626, 3
        %s630 = sand.u32 %s626, 7
        %s631 = smul.u32 %s627, 4
        %s632 = smul.u32 %s631, 8
        %s633 = sadd.s32 %s632, %s630
        %s634 = scalar_lea.vmem [#allocation5], %s633
        %v635 = vld [vmem:[%s634] ss:$8 sm:$0xf]
        %s636 = scalar_lea.vmem [#allocation2], 99
        %637 = vst.msk [vmem:[%s636] ss:$8 sm:$0xf] %vm250, %v635
        %638 = vst.msk [vmem:[%s636] ss:$8 sm:$0x0] %vm250, %v635
        %s639 = sadd.s32 %s300, 3
        %s640 = sld [smem:[#allocation4 + %s639]]
        %s641 = sshra.s32 %s640, 3
        %s642 = sand.u32 %s640, 7
        %s643 = sshra.s32 %s640, 3
        %s644 = sand.u32 %s640, 7
        %s645 = smul.u32 %s641, 4
        %s646 = smul.u32 %s645, 8
        %s647 = sadd.s32 %s646, %s644
        %s648 = scalar_lea.vmem [#allocation5], %s647
        %v649 = vld [vmem:[%s648] ss:$8 sm:$0xf]
        %s650 = scalar_lea.vmem [#allocation2], 100
        %651 = vst.msk [vmem:[%s650] ss:$8 sm:$0xf] %vm250, %v649
        %652 = vst.msk [vmem:[%s650] ss:$8 sm:$0x0] %vm250, %v649
        %s653 = sadd.s32 %s315, 3
        %s654 = sld [smem:[#allocation4 + %s653]]
        %s655 = sshra.s32 %s654, 3
        %s656 = sand.u32 %s654, 7
        %s657 = sshra.s32 %s654, 3
        %s658 = sand.u32 %s654, 7
        %s659 = smul.u32 %s655, 4
        %s660 = smul.u32 %s659, 8
        %s661 = sadd.s32 %s660, %s658
        %s662 = scalar_lea.vmem [#allocation5], %s661
        %v663 = vld [vmem:[%s662] ss:$8 sm:$0xf]
        %s664 = scalar_lea.vmem [#allocation2], 101
        %665 = vst.msk [vmem:[%s664] ss:$8 sm:$0xf] %vm250, %v663
        %666 = vst.msk [vmem:[%s664] ss:$8 sm:$0x0] %vm250, %v663
        %s667 = sadd.s32 %s330, 3
        %s668 = sld [smem:[#allocation4 + %s667]]
        %s669 = sshra.s32 %s668, 3
        %s670 = sand.u32 %s668, 7
        %s671 = sshra.s32 %s668, 3
        %s672 = sand.u32 %s668, 7
        %s673 = smul.u32 %s669, 4
        %s674 = smul.u32 %s673, 8
        %s675 = sadd.s32 %s674, %s672
        %s676 = scalar_lea.vmem [#allocation5], %s675
        %v677 = vld [vmem:[%s676] ss:$8 sm:$0xf]
        %s678 = scalar_lea.vmem [#allocation2], 102
        %679 = vst.msk [vmem:[%s678] ss:$8 sm:$0xf] %vm250, %v677
        %680 = vst.msk [vmem:[%s678] ss:$8 sm:$0x0] %vm250, %v677
        %s681 = sadd.s32 %s345, 3
        %s682 = sld [smem:[#allocation4 + %s681]]
        %s683 = sshra.s32 %s682, 3
        %s684 = sand.u32 %s682, 7
        %s685 = sshra.s32 %s682, 3
        %s686 = sand.u32 %s682, 7
        %s687 = smul.u32 %s683, 4
        %s688 = smul.u32 %s687, 8
        %s689 = sadd.s32 %s688, %s686
        %s690 = scalar_lea.vmem [#allocation5], %s689
        %v691 = vld [vmem:[%s690] ss:$8 sm:$0xf]
        %s692 = scalar_lea.vmem [#allocation2], 103
        %693 = vst.msk [vmem:[%s692] ss:$8 sm:$0xf] %vm250, %v691
        %694 = vst.msk [vmem:[%s692] ss:$8 sm:$0x0] %vm250, %v691
        %s695 = sadd.s32 %s236, 4
        %s696 = sld [smem:[#allocation4 + %s695]]
        %s697 = sshra.s32 %s696, 3
        %s698 = sand.u32 %s696, 7
        %s699 = sshra.s32 %s696, 3
        %s700 = sand.u32 %s696, 7
        %s701 = smul.u32 %s697, 4
        %s702 = smul.u32 %s701, 8
        %s703 = sadd.s32 %s702, %s700
        %s704 = scalar_lea.vmem [#allocation5], %s703
        %v705 = vld [vmem:[%s704] ss:$8 sm:$0xf]
        %s706 = scalar_lea.vmem [#allocation2], 128
        %707 = vst.msk [vmem:[%s706] ss:$8 sm:$0xf] %vm250, %v705
        %708 = vst.msk [vmem:[%s706] ss:$8 sm:$0x0] %vm250, %v705
        %s709 = sadd.s32 %s255, 4
        %s710 = sld [smem:[#allocation4 + %s709]]
        %s711 = sshra.s32 %s710, 3
        %s712 = sand.u32 %s710, 7
        %s713 = sshra.s32 %s710, 3
        %s714 = sand.u32 %s710, 7
        %s715 = smul.u32 %s711, 4
        %s716 = smul.u32 %s715, 8
        %s717 = sadd.s32 %s716, %s714
        %s718 = scalar_lea.vmem [#allocation5], %s717
        %v719 = vld [vmem:[%s718] ss:$8 sm:$0xf]
        %s720 = scalar_lea.vmem [#allocation2], 129
        %721 = vst.msk [vmem:[%s720] ss:$8 sm:$0xf] %vm250, %v719
        %722 = vst.msk [vmem:[%s720] ss:$8 sm:$0x0] %vm250, %v719
        %s723 = sadd.s32 %s270, 4
        %s724 = sld [smem:[#allocation4 + %s723]]
        %s725 = sshra.s32 %s724, 3
        %s726 = sand.u32 %s724, 7
        %s727 = sshra.s32 %s724, 3
        %s728 = sand.u32 %s724, 7
        %s729 = smul.u32 %s725, 4
        %s730 = smul.u32 %s729, 8
        %s731 = sadd.s32 %s730, %s728
        %s732 = scalar_lea.vmem [#allocation5], %s731
        %v733 = vld [vmem:[%s732] ss:$8 sm:$0xf]
        %s734 = scalar_lea.vmem [#allocation2], 130
        %735 = vst.msk [vmem:[%s734] ss:$8 sm:$0xf] %vm250, %v733
        %736 = vst.msk [vmem:[%s734] ss:$8 sm:$0x0] %vm250, %v733
        %s737 = sadd.s32 %s285, 4
        %s738 = sld [smem:[#allocation4 + %s737]]
        %s739 = sshra.s32 %s738, 3
        %s740 = sand.u32 %s738, 7
        %s741 = sshra.s32 %s738, 3
        %s742 = sand.u32 %s738, 7
        %s743 = smul.u32 %s739, 4
        %s744 = smul.u32 %s743, 8
        %s745 = sadd.s32 %s744, %s742
        %s746 = scalar_lea.vmem [#allocation5], %s745
        %v747 = vld [vmem:[%s746] ss:$8 sm:$0xf]
        %s748 = scalar_lea.vmem [#allocation2], 131
        %749 = vst.msk [vmem:[%s748] ss:$8 sm:$0xf] %vm250, %v747
        %750 = vst.msk [vmem:[%s748] ss:$8 sm:$0x0] %vm250, %v747
        %s751 = sadd.s32 %s300, 4
        %s752 = sld [smem:[#allocation4 + %s751]]
        %s753 = sshra.s32 %s752, 3
        %s754 = sand.u32 %s752, 7
        %s755 = sshra.s32 %s752, 3
        %s756 = sand.u32 %s752, 7
        %s757 = smul.u32 %s753, 4
        %s758 = smul.u32 %s757, 8
        %s759 = sadd.s32 %s758, %s756
        %s760 = scalar_lea.vmem [#allocation5], %s759
        %v761 = vld [vmem:[%s760] ss:$8 sm:$0xf]
        %s762 = scalar_lea.vmem [#allocation2], 132
        %763 = vst.msk [vmem:[%s762] ss:$8 sm:$0xf] %vm250, %v761
        %764 = vst.msk [vmem:[%s762] ss:$8 sm:$0x0] %vm250, %v761
        %s765 = sadd.s32 %s315, 4
        %s766 = sld [smem:[#allocation4 + %s765]]
        %s767 = sshra.s32 %s766, 3
        %s768 = sand.u32 %s766, 7
        %s769 = sshra.s32 %s766, 3
        %s770 = sand.u32 %s766, 7
        %s771 = smul.u32 %s767, 4
        %s772 = smul.u32 %s771, 8
        %s773 = sadd.s32 %s772, %s770
        %s774 = scalar_lea.vmem [#allocation5], %s773
        %v775 = vld [vmem:[%s774] ss:$8 sm:$0xf]
        %s776 = scalar_lea.vmem [#allocation2], 133
        %777 = vst.msk [vmem:[%s776] ss:$8 sm:$0xf] %vm250, %v775
        %778 = vst.msk [vmem:[%s776] ss:$8 sm:$0x0] %vm250, %v775
        %s779 = sadd.s32 %s330, 4
        %s780 = sld [smem:[#allocation4 + %s779]]
        %s781 = sshra.s32 %s780, 3
        %s782 = sand.u32 %s780, 7
        %s783 = sshra.s32 %s780, 3
        %s784 = sand.u32 %s780, 7
        %s785 = smul.u32 %s781, 4
        %s786 = smul.u32 %s785, 8
        %s787 = sadd.s32 %s786, %s784
        %s788 = scalar_lea.vmem [#allocation5], %s787
        %v789 = vld [vmem:[%s788] ss:$8 sm:$0xf]
        %s790 = scalar_lea.vmem [#allocation2], 134
        %791 = vst.msk [vmem:[%s790] ss:$8 sm:$0xf] %vm250, %v789
        %792 = vst.msk [vmem:[%s790] ss:$8 sm:$0x0] %vm250, %v789
        %s793 = sadd.s32 %s345, 4
        %s794 = sld [smem:[#allocation4 + %s793]]
        %s795 = sshra.s32 %s794, 3
        %s796 = sand.u32 %s794, 7
        %s797 = sshra.s32 %s794, 3
        %s798 = sand.u32 %s794, 7
        %s799 = smul.u32 %s795, 4
        %s800 = smul.u32 %s799, 8
        %s801 = sadd.s32 %s800, %s798
        %s802 = scalar_lea.vmem [#allocation5], %s801
        %v803 = vld [vmem:[%s802] ss:$8 sm:$0xf]
        %s804 = scalar_lea.vmem [#allocation2], 135
        %805 = vst.msk [vmem:[%s804] ss:$8 sm:$0xf] %vm250, %v803
        %806 = vst.msk [vmem:[%s804] ss:$8 sm:$0x0] %vm250, %v803
        %s807 = sadd.s32 %s236, 5
        %s808 = sld [smem:[#allocation4 + %s807]]
        %s809 = sshra.s32 %s808, 3
        %s810 = sand.u32 %s808, 7
        %s811 = sshra.s32 %s808, 3
        %s812 = sand.u32 %s808, 7
        %s813 = smul.u32 %s809, 4
        %s814 = smul.u32 %s813, 8
        %s815 = sadd.s32 %s814, %s812
        %s816 = scalar_lea.vmem [#allocation5], %s815
        %v817 = vld [vmem:[%s816] ss:$8 sm:$0xf]
        %s818 = scalar_lea.vmem [#allocation2], 160
        %819 = vst.msk [vmem:[%s818] ss:$8 sm:$0xf] %vm250, %v817
        %820 = vst.msk [vmem:[%s818] ss:$8 sm:$0x0] %vm250, %v817
        %s821 = sadd.s32 %s255, 5
        %s822 = sld [smem:[#allocation4 + %s821]]
        %s823 = sshra.s32 %s822, 3
        %s824 = sand.u32 %s822, 7
        %s825 = sshra.s32 %s822, 3
        %s826 = sand.u32 %s822, 7
        %s827 = smul.u32 %s823, 4
        %s828 = smul.u32 %s827, 8
        %s829 = sadd.s32 %s828, %s826
        %s830 = scalar_lea.vmem [#allocation5], %s829
        %v831 = vld [vmem:[%s830] ss:$8 sm:$0xf]
        %s832 = scalar_lea.vmem [#allocation2], 161
        %833 = vst.msk [vmem:[%s832] ss:$8 sm:$0xf] %vm250, %v831
        %834 = vst.msk [vmem:[%s832] ss:$8 sm:$0x0] %vm250, %v831
        %s835 = sadd.s32 %s270, 5
        %s836 = sld [smem:[#allocation4 + %s835]]
        %s837 = sshra.s32 %s836, 3
        %s838 = sand.u32 %s836, 7
        %s839 = sshra.s32 %s836, 3
        %s840 = sand.u32 %s836, 7
        %s841 = smul.u32 %s837, 4
        %s842 = smul.u32 %s841, 8
        %s843 = sadd.s32 %s842, %s840
        %s844 = scalar_lea.vmem [#allocation5], %s843
        %v845 = vld [vmem:[%s844] ss:$8 sm:$0xf]
        %s846 = scalar_lea.vmem [#allocation2], 162
        %847 = vst.msk [vmem:[%s846] ss:$8 sm:$0xf] %vm250, %v845
        %848 = vst.msk [vmem:[%s846] ss:$8 sm:$0x0] %vm250, %v845
        %s849 = sadd.s32 %s285, 5
        %s850 = sld [smem:[#allocation4 + %s849]]
        %s851 = sshra.s32 %s850, 3
        %s852 = sand.u32 %s850, 7
        %s853 = sshra.s32 %s850, 3
        %s854 = sand.u32 %s850, 7
        %s855 = smul.u32 %s851, 4
        %s856 = smul.u32 %s855, 8
        %s857 = sadd.s32 %s856, %s854
        %s858 = scalar_lea.vmem [#allocation5], %s857
        %v859 = vld [vmem:[%s858] ss:$8 sm:$0xf]
        %s860 = scalar_lea.vmem [#allocation2], 163
        %861 = vst.msk [vmem:[%s860] ss:$8 sm:$0xf] %vm250, %v859
        %862 = vst.msk [vmem:[%s860] ss:$8 sm:$0x0] %vm250, %v859
        %s863 = sadd.s32 %s300, 5
        %s864 = sld [smem:[#allocation4 + %s863]]
        %s865 = sshra.s32 %s864, 3
        %s866 = sand.u32 %s864, 7
        %s867 = sshra.s32 %s864, 3
        %s868 = sand.u32 %s864, 7
        %s869 = smul.u32 %s865, 4
        %s870 = smul.u32 %s869, 8
        %s871 = sadd.s32 %s870, %s868
        %s872 = scalar_lea.vmem [#allocation5], %s871
        %v873 = vld [vmem:[%s872] ss:$8 sm:$0xf]
        %s874 = scalar_lea.vmem [#allocation2], 164
        %875 = vst.msk [vmem:[%s874] ss:$8 sm:$0xf] %vm250, %v873
        %876 = vst.msk [vmem:[%s874] ss:$8 sm:$0x0] %vm250, %v873
        %s877 = sadd.s32 %s315, 5
        %s878 = sld [smem:[#allocation4 + %s877]]
        %s879 = sshra.s32 %s878, 3
        %s880 = sand.u32 %s878, 7
        %s881 = sshra.s32 %s878, 3
        %s882 = sand.u32 %s878, 7
        %s883 = smul.u32 %s879, 4
        %s884 = smul.u32 %s883, 8
        %s885 = sadd.s32 %s884, %s882
        %s886 = scalar_lea.vmem [#allocation5], %s885
        %v887 = vld [vmem:[%s886] ss:$8 sm:$0xf]
        %s888 = scalar_lea.vmem [#allocation2], 165
        %889 = vst.msk [vmem:[%s888] ss:$8 sm:$0xf] %vm250, %v887
        %890 = vst.msk [vmem:[%s888] ss:$8 sm:$0x0] %vm250, %v887
        %s891 = sadd.s32 %s330, 5
        %s892 = sld [smem:[#allocation4 + %s891]]
        %s893 = sshra.s32 %s892, 3
        %s894 = sand.u32 %s892, 7
        %s895 = sshra.s32 %s892, 3
        %s896 = sand.u32 %s892, 7
        %s897 = smul.u32 %s893, 4
        %s898 = smul.u32 %s897, 8
        %s899 = sadd.s32 %s898, %s896
        %s900 = scalar_lea.vmem [#allocation5], %s899
        %v901 = vld [vmem:[%s900] ss:$8 sm:$0xf]
        %s902 = scalar_lea.vmem [#allocation2], 166
        %903 = vst.msk [vmem:[%s902] ss:$8 sm:$0xf] %vm250, %v901
        %904 = vst.msk [vmem:[%s902] ss:$8 sm:$0x0] %vm250, %v901
        %s905 = sadd.s32 %s345, 5
        %s906 = sld [smem:[#allocation4 + %s905]]
        %s907 = sshra.s32 %s906, 3
        %s908 = sand.u32 %s906, 7
        %s909 = sshra.s32 %s906, 3
        %s910 = sand.u32 %s906, 7
        %s911 = smul.u32 %s907, 4
        %s912 = smul.u32 %s911, 8
        %s913 = sadd.s32 %s912, %s910
        %s914 = scalar_lea.vmem [#allocation5], %s913
        %v915 = vld [vmem:[%s914] ss:$8 sm:$0xf]
        %s916 = scalar_lea.vmem [#allocation2], 167
        %917 = vst.msk [vmem:[%s916] ss:$8 sm:$0xf] %vm250, %v915
        %918 = vst.msk [vmem:[%s916] ss:$8 sm:$0x0] %vm250, %v915
        %s919 = sadd.s32 %s236, 6
        %s920 = sld [smem:[#allocation4 + %s919]]
        %s921 = sshra.s32 %s920, 3
        %s922 = sand.u32 %s920, 7
        %s923 = sshra.s32 %s920, 3
        %s924 = sand.u32 %s920, 7
        %s925 = smul.u32 %s921, 4
        %s926 = smul.u32 %s925, 8
        %s927 = sadd.s32 %s926, %s924
        %s928 = scalar_lea.vmem [#allocation5], %s927
        %v929 = vld [vmem:[%s928] ss:$8 sm:$0xf]
        %s930 = scalar_lea.vmem [#allocation2], 192
        %931 = vst.msk [vmem:[%s930] ss:$8 sm:$0xf] %vm250, %v929
        %932 = vst.msk [vmem:[%s930] ss:$8 sm:$0x0] %vm250, %v929
        %s933 = sadd.s32 %s255, 6
        %s934 = sld [smem:[#allocation4 + %s933]]
        %s935 = sshra.s32 %s934, 3
        %s936 = sand.u32 %s934, 7
        %s937 = sshra.s32 %s934, 3
        %s938 = sand.u32 %s934, 7
        %s939 = smul.u32 %s935, 4
        %s940 = smul.u32 %s939, 8
        %s941 = sadd.s32 %s940, %s938
        %s942 = scalar_lea.vmem [#allocation5], %s941
        %v943 = vld [vmem:[%s942] ss:$8 sm:$0xf]
        %s944 = scalar_lea.vmem [#allocation2], 193
        %945 = vst.msk [vmem:[%s944] ss:$8 sm:$0xf] %vm250, %v943
        %946 = vst.msk [vmem:[%s944] ss:$8 sm:$0x0] %vm250, %v943
        %s947 = sadd.s32 %s270, 6
        %s948 = sld [smem:[#allocation4 + %s947]]
        %s949 = sshra.s32 %s948, 3
        %s950 = sand.u32 %s948, 7
        %s951 = sshra.s32 %s948, 3
        %s952 = sand.u32 %s948, 7
        %s953 = smul.u32 %s949, 4
        %s954 = smul.u32 %s953, 8
        %s955 = sadd.s32 %s954, %s952
        %s956 = scalar_lea.vmem [#allocation5], %s955
        %v957 = vld [vmem:[%s956] ss:$8 sm:$0xf]
        %s958 = scalar_lea.vmem [#allocation2], 194
        %959 = vst.msk [vmem:[%s958] ss:$8 sm:$0xf] %vm250, %v957
        %960 = vst.msk [vmem:[%s958] ss:$8 sm:$0x0] %vm250, %v957
        %s961 = sadd.s32 %s285, 6
        %s962 = sld [smem:[#allocation4 + %s961]]
        %s963 = sshra.s32 %s962, 3
        %s964 = sand.u32 %s962, 7
        %s965 = sshra.s32 %s962, 3
        %s966 = sand.u32 %s962, 7
        %s967 = smul.u32 %s963, 4
        %s968 = smul.u32 %s967, 8
        %s969 = sadd.s32 %s968, %s966
        %s970 = scalar_lea.vmem [#allocation5], %s969
        %v971 = vld [vmem:[%s970] ss:$8 sm:$0xf]
        %s972 = scalar_lea.vmem [#allocation2], 195
        %973 = vst.msk [vmem:[%s972] ss:$8 sm:$0xf] %vm250, %v971
        %974 = vst.msk [vmem:[%s972] ss:$8 sm:$0x0] %vm250, %v971
        %s975 = sadd.s32 %s300, 6
        %s976 = sld [smem:[#allocation4 + %s975]]
        %s977 = sshra.s32 %s976, 3
        %s978 = sand.u32 %s976, 7
        %s979 = sshra.s32 %s976, 3
        %s980 = sand.u32 %s976, 7
        %s981 = smul.u32 %s977, 4
        %s982 = smul.u32 %s981, 8
        %s983 = sadd.s32 %s982, %s980
        %s984 = scalar_lea.vmem [#allocation5], %s983
        %v985 = vld [vmem:[%s984] ss:$8 sm:$0xf]
        %s986 = scalar_lea.vmem [#allocation2], 196
        %987 = vst.msk [vmem:[%s986] ss:$8 sm:$0xf] %vm250, %v985
        %988 = vst.msk [vmem:[%s986] ss:$8 sm:$0x0] %vm250, %v985
        %s989 = sadd.s32 %s315, 6
        %s990 = sld [smem:[#allocation4 + %s989]]
        %s991 = sshra.s32 %s990, 3
        %s992 = sand.u32 %s990, 7
        %s993 = sshra.s32 %s990, 3
        %s994 = sand.u32 %s990, 7
        %s995 = smul.u32 %s991, 4
        %s996 = smul.u32 %s995, 8
        %s997 = sadd.s32 %s996, %s994
        %s998 = scalar_lea.vmem [#allocation5], %s997
        %v999 = vld [vmem:[%s998] ss:$8 sm:$0xf]
        %s1000 = scalar_lea.vmem [#allocation2], 197
        %1001 = vst.msk [vmem:[%s1000] ss:$8 sm:$0xf] %vm250, %v999
        %1002 = vst.msk [vmem:[%s1000] ss:$8 sm:$0x0] %vm250, %v999
        %s1003 = sadd.s32 %s330, 6
        %s1004 = sld [smem:[#allocation4 + %s1003]]
        %s1005 = sshra.s32 %s1004, 3
        %s1006 = sand.u32 %s1004, 7
        %s1007 = sshra.s32 %s1004, 3
        %s1008 = sand.u32 %s1004, 7
        %s1009 = smul.u32 %s1005, 4
        %s1010 = smul.u32 %s1009, 8
        %s1011 = sadd.s32 %s1010, %s1008
        %s1012 = scalar_lea.vmem [#allocation5], %s1011
        %v1013 = vld [vmem:[%s1012] ss:$8 sm:$0xf]
        %s1014 = scalar_lea.vmem [#allocation2], 198
        %1015 = vst.msk [vmem:[%s1014] ss:$8 sm:$0xf] %vm250, %v1013
        %1016 = vst.msk [vmem:[%s1014] ss:$8 sm:$0x0] %vm250, %v1013
        %s1017 = sadd.s32 %s345, 6
        %s1018 = sld [smem:[#allocation4 + %s1017]]
        %s1019 = sshra.s32 %s1018, 3
        %s1020 = sand.u32 %s1018, 7
        %s1021 = sshra.s32 %s1018, 3
        %s1022 = sand.u32 %s1018, 7
        %s1023 = smul.u32 %s1019, 4
        %s1024 = smul.u32 %s1023, 8
        %s1025 = sadd.s32 %s1024, %s1022
        %s1026 = scalar_lea.vmem [#allocation5], %s1025
        %v1027 = vld [vmem:[%s1026] ss:$8 sm:$0xf]
        %s1028 = scalar_lea.vmem [#allocation2], 199
        %1029 = vst.msk [vmem:[%s1028] ss:$8 sm:$0xf] %vm250, %v1027
        %1030 = vst.msk [vmem:[%s1028] ss:$8 sm:$0x0] %vm250, %v1027
        %s1031 = sadd.s32 %s236, 7
        %s1032 = sld [smem:[#allocation4 + %s1031]]
        %s1033 = sshra.s32 %s1032, 3
        %s1034 = sand.u32 %s1032, 7
        %s1035 = sshra.s32 %s1032, 3
        %s1036 = sand.u32 %s1032, 7
        %s1037 = smul.u32 %s1033, 4
        %s1038 = smul.u32 %s1037, 8
        %s1039 = sadd.s32 %s1038, %s1036
        %s1040 = scalar_lea.vmem [#allocation5], %s1039
        %v1041 = vld [vmem:[%s1040] ss:$8 sm:$0xf]
        %s1042 = scalar_lea.vmem [#allocation2], 224
        %1043 = vst.msk [vmem:[%s1042] ss:$8 sm:$0xf] %vm250, %v1041
        %1044 = vst.msk [vmem:[%s1042] ss:$8 sm:$0x0] %vm250, %v1041
        %s1045 = sadd.s32 %s255, 7
        %s1046 = sld [smem:[#allocation4 + %s1045]]
        %s1047 = sshra.s32 %s1046, 3
        %s1048 = sand.u32 %s1046, 7
        %s1049 = sshra.s32 %s1046, 3
        %s1050 = sand.u32 %s1046, 7
        %s1051 = smul.u32 %s1047, 4
        %s1052 = smul.u32 %s1051, 8
        %s1053 = sadd.s32 %s1052, %s1050
        %s1054 = scalar_lea.vmem [#allocation5], %s1053
        %v1055 = vld [vmem:[%s1054] ss:$8 sm:$0xf]
        %s1056 = scalar_lea.vmem [#allocation2], 225
        %1057 = vst.msk [vmem:[%s1056] ss:$8 sm:$0xf] %vm250, %v1055
        %1058 = vst.msk [vmem:[%s1056] ss:$8 sm:$0x0] %vm250, %v1055
        %s1059 = sadd.s32 %s270, 7
        %s1060 = sld [smem:[#allocation4 + %s1059]]
        %s1061 = sshra.s32 %s1060, 3
        %s1062 = sand.u32 %s1060, 7
        %s1063 = sshra.s32 %s1060, 3
        %s1064 = sand.u32 %s1060, 7
        %s1065 = smul.u32 %s1061, 4
        %s1066 = smul.u32 %s1065, 8
        %s1067 = sadd.s32 %s1066, %s1064
        %s1068 = scalar_lea.vmem [#allocation5], %s1067
        %v1069 = vld [vmem:[%s1068] ss:$8 sm:$0xf]
        %s1070 = scalar_lea.vmem [#allocation2], 226
        %1071 = vst.msk [vmem:[%s1070] ss:$8 sm:$0xf] %vm250, %v1069
        %1072 = vst.msk [vmem:[%s1070] ss:$8 sm:$0x0] %vm250, %v1069
        %s1073 = sadd.s32 %s285, 7
        %s1074 = sld [smem:[#allocation4 + %s1073]]
        %s1075 = sshra.s32 %s1074, 3
        %s1076 = sand.u32 %s1074, 7
        %s1077 = sshra.s32 %s1074, 3
        %s1078 = sand.u32 %s1074, 7
        %s1079 = smul.u32 %s1075, 4
        %s1080 = smul.u32 %s1079, 8
        %s1081 = sadd.s32 %s1080, %s1078
        %s1082 = scalar_lea.vmem [#allocation5], %s1081
        %v1083 = vld [vmem:[%s1082] ss:$8 sm:$0xf]
        %s1084 = scalar_lea.vmem [#allocation2], 227
        %1085 = vst.msk [vmem:[%s1084] ss:$8 sm:$0xf] %vm250, %v1083
        %1086 = vst.msk [vmem:[%s1084] ss:$8 sm:$0x0] %vm250, %v1083
        %s1087 = sadd.s32 %s300, 7
        %s1088 = sld [smem:[#allocation4 + %s1087]]
        %s1089 = sshra.s32 %s1088, 3
        %s1090 = sand.u32 %s1088, 7
        %s1091 = sshra.s32 %s1088, 3
        %s1092 = sand.u32 %s1088, 7
        %s1093 = smul.u32 %s1089, 4
        %s1094 = smul.u32 %s1093, 8
        %s1095 = sadd.s32 %s1094, %s1092
        %s1096 = scalar_lea.vmem [#allocation5], %s1095
        %v1097 = vld [vmem:[%s1096] ss:$8 sm:$0xf]
        %s1098 = scalar_lea.vmem [#allocation2], 228
        %1099 = vst.msk [vmem:[%s1098] ss:$8 sm:$0xf] %vm250, %v1097
        %1100 = vst.msk [vmem:[%s1098] ss:$8 sm:$0x0] %vm250, %v1097
        %s1101 = sadd.s32 %s315, 7
        %s1102 = sld [smem:[#allocation4 + %s1101]]
        %s1103 = sshra.s32 %s1102, 3
        %s1104 = sand.u32 %s1102, 7
        %s1105 = sshra.s32 %s1102, 3
        %s1106 = sand.u32 %s1102, 7
        %s1107 = smul.u32 %s1103, 4
        %s1108 = smul.u32 %s1107, 8
        %s1109 = sadd.s32 %s1108, %s1106
        %s1110 = scalar_lea.vmem [#allocation5], %s1109
        %v1111 = vld [vmem:[%s1110] ss:$8 sm:$0xf]
        %s1112 = scalar_lea.vmem [#allocation2], 229
        %1113 = vst.msk [vmem:[%s1112] ss:$8 sm:$0xf] %vm250, %v1111
        %1114 = vst.msk [vmem:[%s1112] ss:$8 sm:$0x0] %vm250, %v1111
        %s1115 = sadd.s32 %s330, 7
        %s1116 = sld [smem:[#allocation4 + %s1115]]
        %s1117 = sshra.s32 %s1116, 3
        %s1118 = sand.u32 %s1116, 7
        %s1119 = sshra.s32 %s1116, 3
        %s1120 = sand.u32 %s1116, 7
        %s1121 = smul.u32 %s1117, 4
        %s1122 = smul.u32 %s1121, 8
        %s1123 = sadd.s32 %s1122, %s1120
        %s1124 = scalar_lea.vmem [#allocation5], %s1123
        %v1125 = vld [vmem:[%s1124] ss:$8 sm:$0xf]
        %s1126 = scalar_lea.vmem [#allocation2], 230
        %1127 = vst.msk [vmem:[%s1126] ss:$8 sm:$0xf] %vm250, %v1125
        %1128 = vst.msk [vmem:[%s1126] ss:$8 sm:$0x0] %vm250, %v1125
        %s1129 = sadd.s32 %s345, 7
        %s1130 = sld [smem:[#allocation4 + %s1129]]
        %s1131 = sshra.s32 %s1130, 3
        %s1132 = sand.u32 %s1130, 7
        %s1133 = sshra.s32 %s1130, 3
        %s1134 = sand.u32 %s1130, 7
        %s1135 = smul.u32 %s1131, 4
        %s1136 = smul.u32 %s1135, 8
        %s1137 = sadd.s32 %s1136, %s1134
        %s1138 = scalar_lea.vmem [#allocation5], %s1137
        %v1139 = vld [vmem:[%s1138] ss:$8 sm:$0xf]
        %s1140 = scalar_lea.vmem [#allocation2], 231
        %1141 = vst.msk [vmem:[%s1140] ss:$8 sm:$0xf] %vm250, %v1139
        %1142 = vst.msk [vmem:[%s1140] ss:$8 sm:$0x0] %vm250, %v1139
        %v1143 = vld [vmem:[#allocation2] sm:$0xff]
        %v1144 = vld [vmem:[#allocation2 + $0x8] sm:$0xff]
        %v1145 = vld [vmem:[#allocation2 + $0x10] sm:$0xff]
        %v1146 = vld [vmem:[#allocation2 + $0x18] sm:$0xff]
        %v1147 = vld [vmem:[#allocation7] sm:$0xff]
        %v1148 = vld [vmem:[#allocation7 + $0x8] sm:$0xff]
        %v1149 = vld [vmem:[#allocation7 + $0x10] sm:$0xff]
        %v1150 = vld [vmem:[#allocation7 + $0x18] sm:$0xff]
        %v1151 = vld [vmem:[#allocation7 + $0x20] sm:$0xff]
        %v1152 = vld [vmem:[#allocation7 + $0x28] sm:$0xff]
        %v1153 = vld [vmem:[#allocation7 + $0x30] sm:$0xff]
        %v1154 = vld [vmem:[#allocation7 + $0x38] sm:$0xff]
        %v1155 = vld [vmem:[#allocation7 + $0x40] sm:$0xff]
        %v1156 = vld [vmem:[#allocation7 + $0x48] sm:$0xff]
        %v1157 = vld [vmem:[#allocation7 + $0x50] sm:$0xff]
        %v1158 = vld [vmem:[#allocation7 + $0x58] sm:$0xff]
        %v1159 = vld [vmem:[#allocation7 + $0x60] sm:$0xff]
        %v1160 = vld [vmem:[#allocation7 + $0x68] sm:$0xff]
        %v1161 = vld [vmem:[#allocation7 + $0x70] sm:$0xff]
        %v1162 = vld [vmem:[#allocation7 + $0x78] sm:$0xff]
        %v1163 = vld [vmem:[#allocation7 + $0x80] sm:$0xff]
        %v1164 = vld [vmem:[#allocation7 + $0x88] sm:$0xff]
        %v1165 = vld [vmem:[#allocation7 + $0x90] sm:$0xff]
        %v1166 = vld [vmem:[#allocation7 + $0x98] sm:$0xff]
        %v1167 = vld [vmem:[#allocation7 + $0xa0] sm:$0xff]
        %v1168 = vld [vmem:[#allocation7 + $0xa8] sm:$0xff]
        %v1169 = vld [vmem:[#allocation7 + $0xb0] sm:$0xff]
        %v1170 = vld [vmem:[#allocation7 + $0xb8] sm:$0xff]
        %v1171 = vld [vmem:[#allocation7 + $0xc0] sm:$0xff]
        %v1172 = vld [vmem:[#allocation7 + $0xc8] sm:$0xff]
        %v1173 = vld [vmem:[#allocation7 + $0xd0] sm:$0xff]
        %v1174 = vld [vmem:[#allocation7 + $0xd8] sm:$0xff]
        %v1175 = vld [vmem:[#allocation7 + $0xe0] sm:$0xff]
        %v1176 = vld [vmem:[#allocation7 + $0xe8] sm:$0xff]
        %v1177 = vld [vmem:[#allocation7 + $0xf0] sm:$0xff]
        %v1178 = vld [vmem:[#allocation7 + $0xf8] sm:$0xff]
        %v1211 = vunpack.c.l.b16 %v1147
        %v1212 = vunpack.c.h.b16 %v1147
        %v1213 = vunpack.c.l.b16 %v1148
        %v1214 = vunpack.c.h.b16 %v1148
        %v1215 = vunpack.c.l.b16 %v1149
        %v1216 = vunpack.c.h.b16 %v1149
        %v1217 = vunpack.c.l.b16 %v1150
        %v1218 = vunpack.c.h.b16 %v1150
        %v1219 = vunpack.c.l.b16 %v1151
        %v1220 = vunpack.c.h.b16 %v1151
        %v1221 = vunpack.c.l.b16 %v1152
        %v1222 = vunpack.c.h.b16 %v1152
        %v1223 = vunpack.c.l.b16 %v1153
        %v1224 = vunpack.c.h.b16 %v1153
        %v1225 = vunpack.c.l.b16 %v1154
        %v1226 = vunpack.c.h.b16 %v1154
        %v1227 = vunpack.c.l.b16 %v1155
        %v1228 = vunpack.c.h.b16 %v1155
        %v1229 = vunpack.c.l.b16 %v1156
        %v1230 = vunpack.c.h.b16 %v1156
        %v1231 = vunpack.c.l.b16 %v1157
        %v1232 = vunpack.c.h.b16 %v1157
        %v1233 = vunpack.c.l.b16 %v1158
        %v1234 = vunpack.c.h.b16 %v1158
        %v1235 = vunpack.c.l.b16 %v1159
        %v1236 = vunpack.c.h.b16 %v1159
        %v1237 = vunpack.c.l.b16 %v1160
        %v1238 = vunpack.c.h.b16 %v1160
        %v1239 = vunpack.c.l.b16 %v1161
        %v1240 = vunpack.c.h.b16 %v1161
        %v1241 = vunpack.c.l.b16 %v1162
        %v1242 = vunpack.c.h.b16 %v1162
        %v1243 = vunpack.c.l.b16 %v1163
        %v1244 = vunpack.c.h.b16 %v1163
        %v1245 = vunpack.c.l.b16 %v1164
        %v1246 = vunpack.c.h.b16 %v1164
        %v1247 = vunpack.c.l.b16 %v1165
        %v1248 = vunpack.c.h.b16 %v1165
        %v1249 = vunpack.c.l.b16 %v1166
        %v1250 = vunpack.c.h.b16 %v1166
        %v1251 = vunpack.c.l.b16 %v1167
        %v1252 = vunpack.c.h.b16 %v1167
        %v1253 = vunpack.c.l.b16 %v1168
        %v1254 = vunpack.c.h.b16 %v1168
        %v1255 = vunpack.c.l.b16 %v1169
        %v1256 = vunpack.c.h.b16 %v1169
        %v1257 = vunpack.c.l.b16 %v1170
        %v1258 = vunpack.c.h.b16 %v1170
        %v1259 = vunpack.c.l.b16 %v1171
        %v1260 = vunpack.c.h.b16 %v1171
        %v1261 = vunpack.c.l.b16 %v1172
        %v1262 = vunpack.c.h.b16 %v1172
        %v1263 = vunpack.c.l.b16 %v1173
        %v1264 = vunpack.c.h.b16 %v1173
        %v1265 = vunpack.c.l.b16 %v1174
        %v1266 = vunpack.c.h.b16 %v1174
        %v1267 = vunpack.c.l.b16 %v1175
        %v1268 = vunpack.c.h.b16 %v1175
        %v1269 = vunpack.c.l.b16 %v1176
        %v1270 = vunpack.c.h.b16 %v1176
        %v1271 = vunpack.c.l.b16 %v1177
        %v1272 = vunpack.c.h.b16 %v1177
        %v1273 = vunpack.c.l.b16 %v1178
        %v1274 = vunpack.c.h.b16 %v1178
        %v1275 = vpack.c.b16 %v1215, %v1211
        %v1276 = vpack.c.b16 %v1216, %v1212
        %v1277 = vpack.c.b16 %v1217, %v1213
        %v1278 = vpack.c.b16 %v1218, %v1214
        %v1279 = vpack.c.b16 %v1223, %v1219
        %v1280 = vpack.c.b16 %v1224, %v1220
        %v1281 = vpack.c.b16 %v1225, %v1221
        %v1282 = vpack.c.b16 %v1226, %v1222
        %v1283 = vpack.c.b16 %v1231, %v1227
        %v1284 = vpack.c.b16 %v1232, %v1228
        %v1285 = vpack.c.b16 %v1233, %v1229
        %v1286 = vpack.c.b16 %v1234, %v1230
        %v1287 = vpack.c.b16 %v1239, %v1235
        %v1288 = vpack.c.b16 %v1240, %v1236
        %v1289 = vpack.c.b16 %v1241, %v1237
        %v1290 = vpack.c.b16 %v1242, %v1238
        %v1291 = vpack.c.b16 %v1247, %v1243
        %v1292 = vpack.c.b16 %v1248, %v1244
        %v1293 = vpack.c.b16 %v1249, %v1245
        %v1294 = vpack.c.b16 %v1250, %v1246
        %v1295 = vpack.c.b16 %v1255, %v1251
        %v1296 = vpack.c.b16 %v1256, %v1252
        %v1297 = vpack.c.b16 %v1257, %v1253
        %v1298 = vpack.c.b16 %v1258, %v1254
        %v1299 = vpack.c.b16 %v1263, %v1259
        %v1300 = vpack.c.b16 %v1264, %v1260
        %v1301 = vpack.c.b16 %v1265, %v1261
        %v1302 = vpack.c.b16 %v1266, %v1262
        %v1303 = vpack.c.b16 %v1271, %v1267
        %v1304 = vpack.c.b16 %v1272, %v1268
        %v1305 = vpack.c.b16 %v1273, %v1269
        %v1306 = vpack.c.b16 %v1274, %v1270
        %1339 = vmatpush.bf16.msra.mxu0 %v1303
        %1340 = vmatpush.bf16.msra.mxu0 %v1299
        %1341 = vmatpush.bf16.msra.mxu0 %v1295
        %1342 = vmatpush.bf16.msra.mxu0 %v1291
        %1343 = vmatpush.bf16.msra.mxu0 %v1287
        %1344 = vmatpush.bf16.msra.mxu0 %v1283
        %1345 = vmatpush.bf16.msra.mxu0 %v1279
        %1346 = vmatpush.bf16.msra.mxu0 %v1275
        %1347 = vmatmul.bf16.gmra.mxu0 0
        %v1348 = vpop.f32.mrf.mxu0
        %v1349 = vadd.f32 0.0, %v1348
        %v1350 = vpop.f32.mrf.mxu0
        %1351 = vdwg.mxu0
        %1352 = vmatpush.bf16.msra.mxu0 %v1304
        %1353 = vmatpush.bf16.msra.mxu0 %v1300
        %1354 = vmatpush.bf16.msra.mxu0 %v1296
        %1355 = vmatpush.bf16.msra.mxu0 %v1292
        %1356 = vmatpush.bf16.msra.mxu0 %v1288
        %1357 = vmatpush.bf16.msra.mxu0 %v1284
        %1358 = vmatpush.bf16.msra.mxu0 %v1280
        %1359 = vmatpush.bf16.msra.mxu0 %v1276
        %1360 = vmatmul.bf16.gmra.mxu0 0
        %v1361 = vpop.f32.mrf.mxu0
        %v1362 = vadd.f32 0.0, %v1361
        %v1363 = vpop.f32.mrf.mxu0
        %1364 = vdwg.mxu0
        %1365 = vmatpush.bf16.msra.mxu0 %v1305
        %1366 = vmatpush.bf16.msra.mxu0 %v1301
        %1367 = vmatpush.bf16.msra.mxu0 %v1297
        %1368 = vmatpush.bf16.msra.mxu0 %v1293
        %1369 = vmatpush.bf16.msra.mxu0 %v1289
        %1370 = vmatpush.bf16.msra.mxu0 %v1285
        %1371 = vmatpush.bf16.msra.mxu0 %v1281
        %1372 = vmatpush.bf16.msra.mxu0 %v1277
        %1373 = vmatmul.bf16.gmra.mxu0 0
        %v1374 = vpop.f32.mrf.mxu0
        %v1375 = vadd.f32 0.0, %v1374
        %v1376 = vpop.f32.mrf.mxu0
        %1377 = vdwg.mxu0
        %1378 = vmatpush.bf16.msra.mxu0 %v1306
        %1379 = vmatpush.bf16.msra.mxu0 %v1302
        %1380 = vmatpush.bf16.msra.mxu0 %v1298
        %1381 = vmatpush.bf16.msra.mxu0 %v1294
        %1382 = vmatpush.bf16.msra.mxu0 %v1290
        %1383 = vmatpush.bf16.msra.mxu0 %v1286
        %1384 = vmatpush.bf16.msra.mxu0 %v1282
        %1385 = vmatpush.bf16.msra.mxu0 %v1278
        %1386 = vmatmul.bf16.gmra.mxu0 0
        %v1387 = vpop.f32.mrf.mxu0
        %v1388 = vadd.f32 0.0, %v1387
        %v1389 = vpop.f32.mrf.mxu0
        %1390 = vdwg.mxu0
        %v1391 = vadd.f32 %v1143, %v1349
        %v1392 = vadd.f32 %v1144, %v1362
        %v1393 = vadd.f32 %v1145, %v1375
        %v1394 = vadd.f32 %v1146, %v1388
        %v1395 = vxor.u32 %v1391, 2147483648
        %v1396 = vmul.f32 %v1395, 1.442695
        %v1397 = vpow.pop %v1396
        %v1398 = vadd.f32 %v1397, 1.0
        %v1399 = vrcp.pop %v1398
        %v1400 = vmul.f32 %v1398, %v1399
        %v1401 = vsub.f32 1.0, %v1400
        %v1402 = vmul.f32 %v1399, %v1401
        %v1403 = vadd.f32 %v1399, %v1402
        %vm1404 = vweird.f32 %v1398
        %vm1405 = vweird.f32 %v1399
        %vm1406 = vmor %vm1404, %vm1405
        %v1407 = vsel %vm1406, %v1399, %v1403
        %v1408 = vand.u32 2147483647, %v1398
        %vm1409 = vcmp.eq.f32.partialorder %v1408, 8.507059e+37
        %v1410 = vand.u32 %v1398, 2147483648
        %v1411 = vor.u32 1.1754944e-38, %v1410
        %v1412 = vsel %vm1409, %v1411, %v1407
        %v1413 = vmul.f32 1.0, %v1412
        %v1414 = vxor.u32 %v1392, 2147483648
        %v1415 = vmul.f32 %v1414, 1.442695
        %v1416 = vpow.pop %v1415
        %v1417 = vadd.f32 %v1416, 1.0
        %v1418 = vrcp.pop %v1417
        %v1419 = vmul.f32 %v1417, %v1418
        %v1420 = vsub.f32 1.0, %v1419
        %v1421 = vmul.f32 %v1418, %v1420
        %v1422 = vadd.f32 %v1418, %v1421
        %vm1423 = vweird.f32 %v1417
        %vm1424 = vweird.f32 %v1418
        %vm1425 = vmor %vm1423, %vm1424
        %v1426 = vsel %vm1425, %v1418, %v1422
        %v1427 = vand.u32 2147483647, %v1417
        %vm1428 = vcmp.eq.f32.partialorder %v1427, 8.507059e+37
        %v1429 = vand.u32 %v1417, 2147483648
        %v1430 = vor.u32 1.1754944e-38, %v1429
        %v1431 = vsel %vm1428, %v1430, %v1426
        %v1432 = vmul.f32 1.0, %v1431
        %v1433 = vtanh.pop %v1393
        %v1434 = vxor.u32 %v1394, 2147483648
        %v1435 = vmul.f32 %v1434, 1.442695
        %v1436 = vpow.pop %v1435
        %v1437 = vadd.f32 %v1436, 1.0
        %v1438 = vrcp.pop %v1437
        %v1439 = vmul.f32 %v1437, %v1438
        %v1440 = vsub.f32 1.0, %v1439
        %v1441 = vmul.f32 %v1438, %v1440
        %v1442 = vadd.f32 %v1438, %v1441
        %vm1443 = vweird.f32 %v1437
        %vm1444 = vweird.f32 %v1438
        %vm1445 = vmor %vm1443, %vm1444
        %v1446 = vsel %vm1445, %v1438, %v1442
        %v1447 = vand.u32 2147483647, %v1437
        %vm1448 = vcmp.eq.f32.partialorder %v1447, 8.507059e+37
        %v1449 = vand.u32 %v1437, 2147483648
        %v1450 = vor.u32 1.1754944e-38, %v1449
        %v1451 = vsel %vm1448, %v1450, %v1446
        %v1452 = vmul.f32 1.0, %v1451
        %v1453 = vmul.f32 %v1432, 0.0
        %v1454 = vmul.f32 %v1413, %v1433
        %v1455 = vadd.f32 %v1453, %v1454
        %v1456 = vtanh.pop %v1455
        %v1457 = vmul.f32 %v1452, %v1456
        %v1458 = vld [vmem:[#allocation2 + $0x20] sm:$0xff]
        %v1459 = vld [vmem:[#allocation2 + $0x28] sm:$0xff]
        %v1460 = vld [vmem:[#allocation2 + $0x30] sm:$0xff]
        %v1461 = vld [vmem:[#allocation2 + $0x38] sm:$0xff]
        %v1462 = vpack.c.bf16 %v1457, %v1457
        %1463 = vmatpush.bf16.msra.mxu0 %v1303
        %1464 = vmatpush.bf16.msra.mxu0 %v1299
        %1465 = vmatpush.bf16.msra.mxu0 %v1295
        %1466 = vmatpush.bf16.msra.mxu0 %v1291
        %1467 = vmatpush.bf16.msra.mxu0 %v1287
        %1468 = vmatpush.bf16.msra.mxu0 %v1283
        %1469 = vmatpush.bf16.msra.mxu0 %v1279
        %1470 = vmatpush.bf16.msra.mxu0 %v1275
        %1471 = vmatmul.bf16.gmra.mxu0 %v1462
        %v1472 = vpop.f32.mrf.mxu0
        %v1473 = vadd.f32 0.0, %v1472
        %v1474 = vpop.f32.mrf.mxu0
        %1475 = vdwg.mxu0
        %1476 = vmatpush.bf16.msra.mxu0 %v1304
        %1477 = vmatpush.bf16.msra.mxu0 %v1300
        %1478 = vmatpush.bf16.msra.mxu0 %v1296
        %1479 = vmatpush.bf16.msra.mxu0 %v1292
        %1480 = vmatpush.bf16.msra.mxu0 %v1288
        %1481 = vmatpush.bf16.msra.mxu0 %v1284
        %1482 = vmatpush.bf16.msra.mxu0 %v1280
        %1483 = vmatpush.bf16.msra.mxu0 %v1276
        %1484 = vmatmul.bf16.gmra.mxu0 %v1462
        %v1485 = vpop.f32.mrf.mxu0
        %v1486 = vadd.f32 0.0, %v1485
        %v1487 = vpop.f32.mrf.mxu0
        %1488 = vdwg.mxu0
        %1489 = vmatpush.bf16.msra.mxu0 %v1305
        %1490 = vmatpush.bf16.msra.mxu0 %v1301
        %1491 = vmatpush.bf16.msra.mxu0 %v1297
        %1492 = vmatpush.bf16.msra.mxu0 %v1293
        %1493 = vmatpush.bf16.msra.mxu0 %v1289
        %1494 = vmatpush.bf16.msra.mxu0 %v1285
        %1495 = vmatpush.bf16.msra.mxu0 %v1281
        %1496 = vmatpush.bf16.msra.mxu0 %v1277
        %1497 = vmatmul.bf16.gmra.mxu0 %v1462
        %v1498 = vpop.f32.mrf.mxu0
        %v1499 = vadd.f32 0.0, %v1498
        %v1500 = vpop.f32.mrf.mxu0
        %1501 = vdwg.mxu0
        %1502 = vmatpush.bf16.msra.mxu0 %v1306
        %1503 = vmatpush.bf16.msra.mxu0 %v1302
        %1504 = vmatpush.bf16.msra.mxu0 %v1298
        %1505 = vmatpush.bf16.msra.mxu0 %v1294
        %1506 = vmatpush.bf16.msra.mxu0 %v1290
        %1507 = vmatpush.bf16.msra.mxu0 %v1286
        %1508 = vmatpush.bf16.msra.mxu0 %v1282
        %1509 = vmatpush.bf16.msra.mxu0 %v1278
        %1510 = vmatmul.bf16.gmra.mxu0 %v1462
        %v1511 = vpop.f32.mrf.mxu0
        %v1512 = vadd.f32 0.0, %v1511
        %v1513 = vpop.f32.mrf.mxu0
        %1514 = vdwg.mxu0
        %v1515 = vadd.f32 %v1458, %v1473
        %v1516 = vadd.f32 %v1459, %v1486
        %v1517 = vadd.f32 %v1460, %v1499
        %v1518 = vadd.f32 %v1461, %v1512
        %v1519 = vxor.u32 %v1515, 2147483648
        %v1520 = vmul.f32 %v1519, 1.442695
        %v1521 = vpow.pop %v1520
        %v1522 = vadd.f32 %v1521, 1.0
        %v1523 = vrcp.pop %v1522
        %v1524 = vmul.f32 %v1522, %v1523
        %v1525 = vsub.f32 1.0, %v1524
        %v1526 = vmul.f32 %v1523, %v1525
        %v1527 = vadd.f32 %v1523, %v1526
        %vm1528 = vweird.f32 %v1522
        %vm1529 = vweird.f32 %v1523
        %vm1530 = vmor %vm1528, %vm1529
        %v1531 = vsel %vm1530, %v1523, %v1527
        %v1532 = vand.u32 2147483647, %v1522
        %vm1533 = vcmp.eq.f32.partialorder %v1532, 8.507059e+37
        %v1534 = vand.u32 %v1522, 2147483648
        %v1535 = vor.u32 1.1754944e-38, %v1534
        %v1536 = vsel %vm1533, %v1535, %v1531
        %v1537 = vmul.f32 1.0, %v1536
        %v1538 = vxor.u32 %v1516, 2147483648
        %v1539 = vmul.f32 %v1538, 1.442695
        %v1540 = vpow.pop %v1539
        %v1541 = vadd.f32 %v1540, 1.0
        %v1542 = vrcp.pop %v1541
        %v1543 = vmul.f32 %v1541, %v1542
        %v1544 = vsub.f32 1.0, %v1543
        %v1545 = vmul.f32 %v1542, %v1544
        %v1546 = vadd.f32 %v1542, %v1545
        %vm1547 = vweird.f32 %v1541
        %vm1548 = vweird.f32 %v1542
        %vm1549 = vmor %vm1547, %vm1548
        %v1550 = vsel %vm1549, %v1542, %v1546
        %v1551 = vand.u32 2147483647, %v1541
        %vm1552 = vcmp.eq.f32.partialorder %v1551, 8.507059e+37
        %v1553 = vand.u32 %v1541, 2147483648
        %v1554 = vor.u32 1.1754944e-38, %v1553
        %v1555 = vsel %vm1552, %v1554, %v1550
        %v1556 = vmul.f32 1.0, %v1555
        %v1557 = vtanh.pop %v1517
        %v1558 = vxor.u32 %v1518, 2147483648
        %v1559 = vmul.f32 %v1558, 1.442695
        %v1560 = vpow.pop %v1559
        %v1561 = vadd.f32 %v1560, 1.0
        %v1562 = vrcp.pop %v1561
        %v1563 = vmul.f32 %v1561, %v1562
        %v1564 = vsub.f32 1.0, %v1563
        %v1565 = vmul.f32 %v1562, %v1564
        %v1566 = vadd.f32 %v1562, %v1565
        %vm1567 = vweird.f32 %v1561
        %vm1568 = vweird.f32 %v1562
        %vm1569 = vmor %vm1567, %vm1568
        %v1570 = vsel %vm1569, %v1562, %v1566
        %v1571 = vand.u32 2147483647, %v1561
        %vm1572 = vcmp.eq.f32.partialorder %v1571, 8.507059e+37
        %v1573 = vand.u32 %v1561, 2147483648
        %v1574 = vor.u32 1.1754944e-38, %v1573
        %v1575 = vsel %vm1572, %v1574, %v1570
        %v1576 = vmul.f32 1.0, %v1575
        %v1577 = vmul.f32 %v1556, %v1455
        %v1578 = vmul.f32 %v1537, %v1557
        %v1579 = vadd.f32 %v1577, %v1578
        %v1580 = vtanh.pop %v1579
        %v1581 = vmul.f32 %v1576, %v1580
        %v1582 = vld [vmem:[#allocation2 + $0x40] sm:$0xff]
        %v1583 = vld [vmem:[#allocation2 + $0x48] sm:$0xff]
        %v1584 = vld [vmem:[#allocation2 + $0x50] sm:$0xff]
        %v1585 = vld [vmem:[#allocation2 + $0x58] sm:$0xff]
        %v1586 = vpack.c.bf16 %v1581, %v1581
        %1587 = vmatpush.bf16.msra.mxu0 %v1303
        %1588 = vmatpush.bf16.msra.mxu0 %v1299
        %1589 = vmatpush.bf16.msra.mxu0 %v1295
        %1590 = vmatpush.bf16.msra.mxu0 %v1291
        %1591 = vmatpush.bf16.msra.mxu0 %v1287
        %1592 = vmatpush.bf16.msra.mxu0 %v1283
        %1593 = vmatpush.bf16.msra.mxu0 %v1279
        %1594 = vmatpush.bf16.msra.mxu0 %v1275
        %1595 = vmatmul.bf16.gmra.mxu0 %v1586
        %v1596 = vpop.f32.mrf.mxu0
        %v1597 = vadd.f32 0.0, %v1596
        %v1598 = vpop.f32.mrf.mxu0
        %1599 = vdwg.mxu0
        %1600 = vmatpush.bf16.msra.mxu0 %v1304
        %1601 = vmatpush.bf16.msra.mxu0 %v1300
        %1602 = vmatpush.bf16.msra.mxu0 %v1296
        %1603 = vmatpush.bf16.msra.mxu0 %v1292
        %1604 = vmatpush.bf16.msra.mxu0 %v1288
        %1605 = vmatpush.bf16.msra.mxu0 %v1284
        %1606 = vmatpush.bf16.msra.mxu0 %v1280
        %1607 = vmatpush.bf16.msra.mxu0 %v1276
        %1608 = vmatmul.bf16.gmra.mxu0 %v1586
        %v1609 = vpop.f32.mrf.mxu0
        %v1610 = vadd.f32 0.0, %v1609
        %v1611 = vpop.f32.mrf.mxu0
        %1612 = vdwg.mxu0
        %1613 = vmatpush.bf16.msra.mxu0 %v1305
        %1614 = vmatpush.bf16.msra.mxu0 %v1301
        %1615 = vmatpush.bf16.msra.mxu0 %v1297
        %1616 = vmatpush.bf16.msra.mxu0 %v1293
        %1617 = vmatpush.bf16.msra.mxu0 %v1289
        %1618 = vmatpush.bf16.msra.mxu0 %v1285
        %1619 = vmatpush.bf16.msra.mxu0 %v1281
        %1620 = vmatpush.bf16.msra.mxu0 %v1277
        %1621 = vmatmul.bf16.gmra.mxu0 %v1586
        %v1622 = vpop.f32.mrf.mxu0
        %v1623 = vadd.f32 0.0, %v1622
        %v1624 = vpop.f32.mrf.mxu0
        %1625 = vdwg.mxu0
        %1626 = vmatpush.bf16.msra.mxu0 %v1306
        %1627 = vmatpush.bf16.msra.mxu0 %v1302
        %1628 = vmatpush.bf16.msra.mxu0 %v1298
        %1629 = vmatpush.bf16.msra.mxu0 %v1294
        %1630 = vmatpush.bf16.msra.mxu0 %v1290
        %1631 = vmatpush.bf16.msra.mxu0 %v1286
        %1632 = vmatpush.bf16.msra.mxu0 %v1282
        %1633 = vmatpush.bf16.msra.mxu0 %v1278
        %1634 = vmatmul.bf16.gmra.mxu0 %v1586
        %v1635 = vpop.f32.mrf.mxu0
        %v1636 = vadd.f32 0.0, %v1635
        %v1637 = vpop.f32.mrf.mxu0
        %1638 = vdwg.mxu0
        %v1639 = vadd.f32 %v1582, %v1597
        %v1640 = vadd.f32 %v1583, %v1610
        %v1641 = vadd.f32 %v1584, %v1623
        %v1642 = vadd.f32 %v1585, %v1636
        %v1643 = vxor.u32 %v1639, 2147483648
        %v1644 = vmul.f32 %v1643, 1.442695
        %v1645 = vpow.pop %v1644
        %v1646 = vadd.f32 %v1645, 1.0
        %v1647 = vrcp.pop %v1646
        %v1648 = vmul.f32 %v1646, %v1647
        %v1649 = vsub.f32 1.0, %v1648
        %v1650 = vmul.f32 %v1647, %v1649
        %v1651 = vadd.f32 %v1647, %v1650
        %vm1652 = vweird.f32 %v1646
        %vm1653 = vweird.f32 %v1647
        %vm1654 = vmor %vm1652, %vm1653
        %v1655 = vsel %vm1654, %v1647, %v1651
        %v1656 = vand.u32 2147483647, %v1646
        %vm1657 = vcmp.eq.f32.partialorder %v1656, 8.507059e+37
        %v1658 = vand.u32 %v1646, 2147483648
        %v1659 = vor.u32 1.1754944e-38, %v1658
        %v1660 = vsel %vm1657, %v1659, %v1655
        %v1661 = vmul.f32 1.0, %v1660
        %v1662 = vxor.u32 %v1640, 2147483648
        %v1663 = vmul.f32 %v1662, 1.442695
        %v1664 = vpow.pop %v1663
        %v1665 = vadd.f32 %v1664, 1.0
        %v1666 = vrcp.pop %v1665
        %v1667 = vmul.f32 %v1665, %v1666
        %v1668 = vsub.f32 1.0, %v1667
        %v1669 = vmul.f32 %v1666, %v1668
        %v1670 = vadd.f32 %v1666, %v1669
        %vm1671 = vweird.f32 %v1665
        %vm1672 = vweird.f32 %v1666
        %vm1673 = vmor %vm1671, %vm1672
        %v1674 = vsel %vm1673, %v1666, %v1670
        %v1675 = vand.u32 2147483647, %v1665
        %vm1676 = vcmp.eq.f32.partialorder %v1675, 8.507059e+37
        %v1677 = vand.u32 %v1665, 2147483648
        %v1678 = vor.u32 1.1754944e-38, %v1677
        %v1679 = vsel %vm1676, %v1678, %v1674
        %v1680 = vmul.f32 1.0, %v1679
        %v1681 = vtanh.pop %v1641
        %v1682 = vxor.u32 %v1642, 2147483648
        %v1683 = vmul.f32 %v1682, 1.442695
        %v1684 = vpow.pop %v1683
        %v1685 = vadd.f32 %v1684, 1.0
        %v1686 = vrcp.pop %v1685
        %v1687 = vmul.f32 %v1685, %v1686
        %v1688 = vsub.f32 1.0, %v1687
        %v1689 = vmul.f32 %v1686, %v1688
        %v1690 = vadd.f32 %v1686, %v1689
        %vm1691 = vweird.f32 %v1685
        %vm1692 = vweird.f32 %v1686
        %vm1693 = vmor %vm1691, %vm1692
        %v1694 = vsel %vm1693, %v1686, %v1690
        %v1695 = vand.u32 2147483647, %v1685
        %vm1696 = vcmp.eq.f32.partialorder %v1695, 8.507059e+37
        %v1697 = vand.u32 %v1685, 2147483648
        %v1698 = vor.u32 1.1754944e-38, %v1697
        %v1699 = vsel %vm1696, %v1698, %v1694
        %v1700 = vmul.f32 1.0, %v1699
        %v1701 = vmul.f32 %v1680, %v1579
        %v1702 = vmul.f32 %v1661, %v1681
        %v1703 = vadd.f32 %v1701, %v1702
        %v1704 = vtanh.pop %v1703
        %v1705 = vmul.f32 %v1700, %v1704
        %v1706 = vld [vmem:[#allocation2 + $0x60] sm:$0xff]
        %v1707 = vld [vmem:[#allocation2 + $0x68] sm:$0xff]
        %v1708 = vld [vmem:[#allocation2 + $0x70] sm:$0xff]
        %v1709 = vld [vmem:[#allocation2 + $0x78] sm:$0xff]
        %v1710 = vpack.c.bf16 %v1705, %v1705
        %1711 = vmatpush.bf16.msra.mxu0 %v1303
        %1712 = vmatpush.bf16.msra.mxu0 %v1299
        %1713 = vmatpush.bf16.msra.mxu0 %v1295
        %1714 = vmatpush.bf16.msra.mxu0 %v1291
        %1715 = vmatpush.bf16.msra.mxu0 %v1287
        %1716 = vmatpush.bf16.msra.mxu0 %v1283
        %1717 = vmatpush.bf16.msra.mxu0 %v1279
        %1718 = vmatpush.bf16.msra.mxu0 %v1275
        %1719 = vmatmul.bf16.gmra.mxu0 %v1710
        %v1720 = vpop.f32.mrf.mxu0
        %v1721 = vadd.f32 0.0, %v1720
        %v1722 = vpop.f32.mrf.mxu0
        %1723 = vdwg.mxu0
        %1724 = vmatpush.bf16.msra.mxu0 %v1304
        %1725 = vmatpush.bf16.msra.mxu0 %v1300
        %1726 = vmatpush.bf16.msra.mxu0 %v1296
        %1727 = vmatpush.bf16.msra.mxu0 %v1292
        %1728 = vmatpush.bf16.msra.mxu0 %v1288
        %1729 = vmatpush.bf16.msra.mxu0 %v1284
        %1730 = vmatpush.bf16.msra.mxu0 %v1280
        %1731 = vmatpush.bf16.msra.mxu0 %v1276
        %1732 = vmatmul.bf16.gmra.mxu0 %v1710
        %v1733 = vpop.f32.mrf.mxu0
        %v1734 = vadd.f32 0.0, %v1733
        %v1735 = vpop.f32.mrf.mxu0
        %1736 = vdwg.mxu0
        %1737 = vmatpush.bf16.msra.mxu0 %v1305
        %1738 = vmatpush.bf16.msra.mxu0 %v1301
        %1739 = vmatpush.bf16.msra.mxu0 %v1297
        %1740 = vmatpush.bf16.msra.mxu0 %v1293
        %1741 = vmatpush.bf16.msra.mxu0 %v1289
        %1742 = vmatpush.bf16.msra.mxu0 %v1285
        %1743 = vmatpush.bf16.msra.mxu0 %v1281
        %1744 = vmatpush.bf16.msra.mxu0 %v1277
        %1745 = vmatmul.bf16.gmra.mxu0 %v1710
        %v1746 = vpop.f32.mrf.mxu0
        %v1747 = vadd.f32 0.0, %v1746
        %v1748 = vpop.f32.mrf.mxu0
        %1749 = vdwg.mxu0
        %1750 = vmatpush.bf16.msra.mxu0 %v1306
        %1751 = vmatpush.bf16.msra.mxu0 %v1302
        %1752 = vmatpush.bf16.msra.mxu0 %v1298
        %1753 = vmatpush.bf16.msra.mxu0 %v1294
        %1754 = vmatpush.bf16.msra.mxu0 %v1290
        %1755 = vmatpush.bf16.msra.mxu0 %v1286
        %1756 = vmatpush.bf16.msra.mxu0 %v1282
        %1757 = vmatpush.bf16.msra.mxu0 %v1278
        %1758 = vmatmul.bf16.gmra.mxu0 %v1710
        %v1759 = vpop.f32.mrf.mxu0
        %v1760 = vadd.f32 0.0, %v1759
        %v1761 = vpop.f32.mrf.mxu0
        %1762 = vdwg.mxu0
        %v1763 = vadd.f32 %v1706, %v1721
        %v1764 = vadd.f32 %v1707, %v1734
        %v1765 = vadd.f32 %v1708, %v1747
        %v1766 = vadd.f32 %v1709, %v1760
        %v1767 = vxor.u32 %v1763, 2147483648
        %v1768 = vmul.f32 %v1767, 1.442695
        %v1769 = vpow.pop %v1768
        %v1770 = vadd.f32 %v1769, 1.0
        %v1771 = vrcp.pop %v1770
        %v1772 = vmul.f32 %v1770, %v1771
        %v1773 = vsub.f32 1.0, %v1772
        %v1774 = vmul.f32 %v1771, %v1773
        %v1775 = vadd.f32 %v1771, %v1774
        %vm1776 = vweird.f32 %v1770
        %vm1777 = vweird.f32 %v1771
        %vm1778 = vmor %vm1776, %vm1777
        %v1779 = vsel %vm1778, %v1771, %v1775
        %v1780 = vand.u32 2147483647, %v1770
        %vm1781 = vcmp.eq.f32.partialorder %v1780, 8.507059e+37
        %v1782 = vand.u32 %v1770, 2147483648
        %v1783 = vor.u32 1.1754944e-38, %v1782
        %v1784 = vsel %vm1781, %v1783, %v1779
        %v1785 = vmul.f32 1.0, %v1784
        %v1786 = vxor.u32 %v1764, 2147483648
        %v1787 = vmul.f32 %v1786, 1.442695
        %v1788 = vpow.pop %v1787
        %v1789 = vadd.f32 %v1788, 1.0
        %v1790 = vrcp.pop %v1789
        %v1791 = vmul.f32 %v1789, %v1790
        %v1792 = vsub.f32 1.0, %v1791
        %v1793 = vmul.f32 %v1790, %v1792
        %v1794 = vadd.f32 %v1790, %v1793
        %vm1795 = vweird.f32 %v1789
        %vm1796 = vweird.f32 %v1790
        %vm1797 = vmor %vm1795, %vm1796
        %v1798 = vsel %vm1797, %v1790, %v1794
        %v1799 = vand.u32 2147483647, %v1789
        %vm1800 = vcmp.eq.f32.partialorder %v1799, 8.507059e+37
        %v1801 = vand.u32 %v1789, 2147483648
        %v1802 = vor.u32 1.1754944e-38, %v1801
        %v1803 = vsel %vm1800, %v1802, %v1798
        %v1804 = vmul.f32 1.0, %v1803
        %v1805 = vtanh.pop %v1765
        %v1806 = vxor.u32 %v1766, 2147483648
        %v1807 = vmul.f32 %v1806, 1.442695
        %v1808 = vpow.pop %v1807
        %v1809 = vadd.f32 %v1808, 1.0
        %v1810 = vrcp.pop %v1809
        %v1811 = vmul.f32 %v1809, %v1810
        %v1812 = vsub.f32 1.0, %v1811
        %v1813 = vmul.f32 %v1810, %v1812
        %v1814 = vadd.f32 %v1810, %v1813
        %vm1815 = vweird.f32 %v1809
        %vm1816 = vweird.f32 %v1810
        %vm1817 = vmor %vm1815, %vm1816
        %v1818 = vsel %vm1817, %v1810, %v1814
        %v1819 = vand.u32 2147483647, %v1809
        %vm1820 = vcmp.eq.f32.partialorder %v1819, 8.507059e+37
        %v1821 = vand.u32 %v1809, 2147483648
        %v1822 = vor.u32 1.1754944e-38, %v1821
        %v1823 = vsel %vm1820, %v1822, %v1818
        %v1824 = vmul.f32 1.0, %v1823
        %v1825 = vmul.f32 %v1804, %v1703
        %v1826 = vmul.f32 %v1785, %v1805
        %v1827 = vadd.f32 %v1825, %v1826
        %v1828 = vtanh.pop %v1827
        %v1829 = vmul.f32 %v1824, %v1828
        %v1830 = vld [vmem:[#allocation2 + $0x80] sm:$0xff]
        %v1831 = vld [vmem:[#allocation2 + $0x88] sm:$0xff]
        %v1832 = vld [vmem:[#allocation2 + $0x90] sm:$0xff]
        %v1833 = vld [vmem:[#allocation2 + $0x98] sm:$0xff]
        %v1834 = vpack.c.bf16 %v1829, %v1829
        %1835 = vmatpush.bf16.msra.mxu0 %v1303
        %1836 = vmatpush.bf16.msra.mxu0 %v1299
        %1837 = vmatpush.bf16.msra.mxu0 %v1295
        %1838 = vmatpush.bf16.msra.mxu0 %v1291
        %1839 = vmatpush.bf16.msra.mxu0 %v1287
        %1840 = vmatpush.bf16.msra.mxu0 %v1283
        %1841 = vmatpush.bf16.msra.mxu0 %v1279
        %1842 = vmatpush.bf16.msra.mxu0 %v1275
        %1843 = vmatmul.bf16.gmra.mxu0 %v1834
        %v1844 = vpop.f32.mrf.mxu0
        %v1845 = vadd.f32 0.0, %v1844
        %v1846 = vpop.f32.mrf.mxu0
        %1847 = vdwg.mxu0
        %1848 = vmatpush.bf16.msra.mxu0 %v1304
        %1849 = vmatpush.bf16.msra.mxu0 %v1300
        %1850 = vmatpush.bf16.msra.mxu0 %v1296
        %1851 = vmatpush.bf16.msra.mxu0 %v1292
        %1852 = vmatpush.bf16.msra.mxu0 %v1288
        %1853 = vmatpush.bf16.msra.mxu0 %v1284
        %1854 = vmatpush.bf16.msra.mxu0 %v1280
        %1855 = vmatpush.bf16.msra.mxu0 %v1276
        %1856 = vmatmul.bf16.gmra.mxu0 %v1834
        %v1857 = vpop.f32.mrf.mxu0
        %v1858 = vadd.f32 0.0, %v1857
        %v1859 = vpop.f32.mrf.mxu0
        %1860 = vdwg.mxu0
        %1861 = vmatpush.bf16.msra.mxu0 %v1305
        %1862 = vmatpush.bf16.msra.mxu0 %v1301
        %1863 = vmatpush.bf16.msra.mxu0 %v1297
        %1864 = vmatpush.bf16.msra.mxu0 %v1293
        %1865 = vmatpush.bf16.msra.mxu0 %v1289
        %1866 = vmatpush.bf16.msra.mxu0 %v1285
        %1867 = vmatpush.bf16.msra.mxu0 %v1281
        %1868 = vmatpush.bf16.msra.mxu0 %v1277
        %1869 = vmatmul.bf16.gmra.mxu0 %v1834
        %v1870 = vpop.f32.mrf.mxu0
        %v1871 = vadd.f32 0.0, %v1870
        %v1872 = vpop.f32.mrf.mxu0
        %1873 = vdwg.mxu0
        %1874 = vmatpush.bf16.msra.mxu0 %v1306
        %1875 = vmatpush.bf16.msra.mxu0 %v1302
        %1876 = vmatpush.bf16.msra.mxu0 %v1298
        %1877 = vmatpush.bf16.msra.mxu0 %v1294
        %1878 = vmatpush.bf16.msra.mxu0 %v1290
        %1879 = vmatpush.bf16.msra.mxu0 %v1286
        %1880 = vmatpush.bf16.msra.mxu0 %v1282
        %1881 = vmatpush.bf16.msra.mxu0 %v1278
        %1882 = vmatmul.bf16.gmra.mxu0 %v1834
        %v1883 = vpop.f32.mrf.mxu0
        %v1884 = vadd.f32 0.0, %v1883
        %v1885 = vpop.f32.mrf.mxu0
        %1886 = vdwg.mxu0
        %v1887 = vadd.f32 %v1830, %v1845
        %v1888 = vadd.f32 %v1831, %v1858
        %v1889 = vadd.f32 %v1832, %v1871
        %v1890 = vadd.f32 %v1833, %v1884
        %v1891 = vxor.u32 %v1887, 2147483648
        %v1892 = vmul.f32 %v1891, 1.442695
        %v1893 = vpow.pop %v1892
        %v1894 = vadd.f32 %v1893, 1.0
        %v1895 = vrcp.pop %v1894
        %v1896 = vmul.f32 %v1894, %v1895
        %v1897 = vsub.f32 1.0, %v1896
        %v1898 = vmul.f32 %v1895, %v1897
        %v1899 = vadd.f32 %v1895, %v1898
        %vm1900 = vweird.f32 %v1894
        %vm1901 = vweird.f32 %v1895
        %vm1902 = vmor %vm1900, %vm1901
        %v1903 = vsel %vm1902, %v1895, %v1899
        %v1904 = vand.u32 2147483647, %v1894
        %vm1905 = vcmp.eq.f32.partialorder %v1904, 8.507059e+37
        %v1906 = vand.u32 %v1894, 2147483648
        %v1907 = vor.u32 1.1754944e-38, %v1906
        %v1908 = vsel %vm1905, %v1907, %v1903
        %v1909 = vmul.f32 1.0, %v1908
        %v1910 = vxor.u32 %v1888, 2147483648
        %v1911 = vmul.f32 %v1910, 1.442695
        %v1912 = vpow.pop %v1911
        %v1913 = vadd.f32 %v1912, 1.0
        %v1914 = vrcp.pop %v1913
        %v1915 = vmul.f32 %v1913, %v1914
        %v1916 = vsub.f32 1.0, %v1915
        %v1917 = vmul.f32 %v1914, %v1916
        %v1918 = vadd.f32 %v1914, %v1917
        %vm1919 = vweird.f32 %v1913
        %vm1920 = vweird.f32 %v1914
        %vm1921 = vmor %vm1919, %vm1920
        %v1922 = vsel %vm1921, %v1914, %v1918
        %v1923 = vand.u32 2147483647, %v1913
        %vm1924 = vcmp.eq.f32.partialorder %v1923, 8.507059e+37
        %v1925 = vand.u32 %v1913, 2147483648
        %v1926 = vor.u32 1.1754944e-38, %v1925
        %v1927 = vsel %vm1924, %v1926, %v1922
        %v1928 = vmul.f32 1.0, %v1927
        %v1929 = vtanh.pop %v1889
        %v1930 = vxor.u32 %v1890, 2147483648
        %v1931 = vmul.f32 %v1930, 1.442695
        %v1932 = vpow.pop %v1931
        %v1933 = vadd.f32 %v1932, 1.0
        %v1934 = vrcp.pop %v1933
        %v1935 = vmul.f32 %v1933, %v1934
        %v1936 = vsub.f32 1.0, %v1935
        %v1937 = vmul.f32 %v1934, %v1936
        %v1938 = vadd.f32 %v1934, %v1937
        %vm1939 = vweird.f32 %v1933
        %vm1940 = vweird.f32 %v1934
        %vm1941 = vmor %vm1939, %vm1940
        %v1942 = vsel %vm1941, %v1934, %v1938
        %v1943 = vand.u32 2147483647, %v1933
        %vm1944 = vcmp.eq.f32.partialorder %v1943, 8.507059e+37
        %v1945 = vand.u32 %v1933, 2147483648
        %v1946 = vor.u32 1.1754944e-38, %v1945
        %v1947 = vsel %vm1944, %v1946, %v1942
        %v1948 = vmul.f32 1.0, %v1947
        %v1949 = vmul.f32 %v1928, %v1827
        %v1950 = vmul.f32 %v1909, %v1929
        %v1951 = vadd.f32 %v1949, %v1950
        %v1952 = vtanh.pop %v1951
        %v1953 = vmul.f32 %v1948, %v1952
        %v1954 = vld [vmem:[#allocation2 + $0xa0] sm:$0xff]
        %v1955 = vld [vmem:[#allocation2 + $0xa8] sm:$0xff]
        %v1956 = vld [vmem:[#allocation2 + $0xb0] sm:$0xff]
        %v1957 = vld [vmem:[#allocation2 + $0xb8] sm:$0xff]
        %v1958 = vpack.c.bf16 %v1953, %v1953
        %1959 = vmatpush.bf16.msra.mxu0 %v1303
        %1960 = vmatpush.bf16.msra.mxu0 %v1299
        %1961 = vmatpush.bf16.msra.mxu0 %v1295
        %1962 = vmatpush.bf16.msra.mxu0 %v1291
        %1963 = vmatpush.bf16.msra.mxu0 %v1287
        %1964 = vmatpush.bf16.msra.mxu0 %v1283
        %1965 = vmatpush.bf16.msra.mxu0 %v1279
        %1966 = vmatpush.bf16.msra.mxu0 %v1275
        %1967 = vmatmul.bf16.gmra.mxu0 %v1958
        %v1968 = vpop.f32.mrf.mxu0
        %v1969 = vadd.f32 0.0, %v1968
        %v1970 = vpop.f32.mrf.mxu0
        %1971 = vdwg.mxu0
        %1972 = vmatpush.bf16.msra.mxu0 %v1304
        %1973 = vmatpush.bf16.msra.mxu0 %v1300
        %1974 = vmatpush.bf16.msra.mxu0 %v1296
        %1975 = vmatpush.bf16.msra.mxu0 %v1292
        %1976 = vmatpush.bf16.msra.mxu0 %v1288
        %1977 = vmatpush.bf16.msra.mxu0 %v1284
        %1978 = vmatpush.bf16.msra.mxu0 %v1280
        %1979 = vmatpush.bf16.msra.mxu0 %v1276
        %1980 = vmatmul.bf16.gmra.mxu0 %v1958
        %v1981 = vpop.f32.mrf.mxu0
        %v1982 = vadd.f32 0.0, %v1981
        %v1983 = vpop.f32.mrf.mxu0
        %1984 = vdwg.mxu0
        %1985 = vmatpush.bf16.msra.mxu0 %v1305
        %1986 = vmatpush.bf16.msra.mxu0 %v1301
        %1987 = vmatpush.bf16.msra.mxu0 %v1297
        %1988 = vmatpush.bf16.msra.mxu0 %v1293
        %1989 = vmatpush.bf16.msra.mxu0 %v1289
        %1990 = vmatpush.bf16.msra.mxu0 %v1285
        %1991 = vmatpush.bf16.msra.mxu0 %v1281
        %1992 = vmatpush.bf16.msra.mxu0 %v1277
        %1993 = vmatmul.bf16.gmra.mxu0 %v1958
        %v1994 = vpop.f32.mrf.mxu0
        %v1995 = vadd.f32 0.0, %v1994
        %v1996 = vpop.f32.mrf.mxu0
        %1997 = vdwg.mxu0
        %1998 = vmatpush.bf16.msra.mxu0 %v1306
        %1999 = vmatpush.bf16.msra.mxu0 %v1302
        %2000 = vmatpush.bf16.msra.mxu0 %v1298
        %2001 = vmatpush.bf16.msra.mxu0 %v1294
        %2002 = vmatpush.bf16.msra.mxu0 %v1290
        %2003 = vmatpush.bf16.msra.mxu0 %v1286
        %2004 = vmatpush.bf16.msra.mxu0 %v1282
        %2005 = vmatpush.bf16.msra.mxu0 %v1278
        %2006 = vmatmul.bf16.gmra.mxu0 %v1958
        %v2007 = vpop.f32.mrf.mxu0
        %v2008 = vadd.f32 0.0, %v2007
        %v2009 = vpop.f32.mrf.mxu0
        %2010 = vdwg.mxu0
        %v2011 = vadd.f32 %v1954, %v1969
        %v2012 = vadd.f32 %v1955, %v1982
        %v2013 = vadd.f32 %v1956, %v1995
        %v2014 = vadd.f32 %v1957, %v2008
        %v2015 = vxor.u32 %v2011, 2147483648
        %v2016 = vmul.f32 %v2015, 1.442695
        %v2017 = vpow.pop %v2016
        %v2018 = vadd.f32 %v2017, 1.0
        %v2019 = vrcp.pop %v2018
        %v2020 = vmul.f32 %v2018, %v2019
        %v2021 = vsub.f32 1.0, %v2020
        %v2022 = vmul.f32 %v2019, %v2021
        %v2023 = vadd.f32 %v2019, %v2022
        %vm2024 = vweird.f32 %v2018
        %vm2025 = vweird.f32 %v2019
        %vm2026 = vmor %vm2024, %vm2025
        %v2027 = vsel %vm2026, %v2019, %v2023
        %v2028 = vand.u32 2147483647, %v2018
        %vm2029 = vcmp.eq.f32.partialorder %v2028, 8.507059e+37
        %v2030 = vand.u32 %v2018, 2147483648
        %v2031 = vor.u32 1.1754944e-38, %v2030
        %v2032 = vsel %vm2029, %v2031, %v2027
        %v2033 = vmul.f32 1.0, %v2032
        %v2034 = vxor.u32 %v2012, 2147483648
        %v2035 = vmul.f32 %v2034, 1.442695
        %v2036 = vpow.pop %v2035
        %v2037 = vadd.f32 %v2036, 1.0
        %v2038 = vrcp.pop %v2037
        %v2039 = vmul.f32 %v2037, %v2038
        %v2040 = vsub.f32 1.0, %v2039
        %v2041 = vmul.f32 %v2038, %v2040
        %v2042 = vadd.f32 %v2038, %v2041
        %vm2043 = vweird.f32 %v2037
        %vm2044 = vweird.f32 %v2038
        %vm2045 = vmor %vm2043, %vm2044
        %v2046 = vsel %vm2045, %v2038, %v2042
        %v2047 = vand.u32 2147483647, %v2037
        %vm2048 = vcmp.eq.f32.partialorder %v2047, 8.507059e+37
        %v2049 = vand.u32 %v2037, 2147483648
        %v2050 = vor.u32 1.1754944e-38, %v2049
        %v2051 = vsel %vm2048, %v2050, %v2046
        %v2052 = vmul.f32 1.0, %v2051
        %v2053 = vtanh.pop %v2013
        %v2054 = vxor.u32 %v2014, 2147483648
        %v2055 = vmul.f32 %v2054, 1.442695
        %v2056 = vpow.pop %v2055
        %v2057 = vadd.f32 %v2056, 1.0
        %v2058 = vrcp.pop %v2057
        %v2059 = vmul.f32 %v2057, %v2058
        %v2060 = vsub.f32 1.0, %v2059
        %v2061 = vmul.f32 %v2058, %v2060
        %v2062 = vadd.f32 %v2058, %v2061
        %vm2063 = vweird.f32 %v2057
        %vm2064 = vweird.f32 %v2058
        %vm2065 = vmor %vm2063, %vm2064
        %v2066 = vsel %vm2065, %v2058, %v2062
        %v2067 = vand.u32 2147483647, %v2057
        %vm2068 = vcmp.eq.f32.partialorder %v2067, 8.507059e+37
        %v2069 = vand.u32 %v2057, 2147483648
        %v2070 = vor.u32 1.1754944e-38, %v2069
        %v2071 = vsel %vm2068, %v2070, %v2066
        %v2072 = vmul.f32 1.0, %v2071
        %v2073 = vmul.f32 %v2052, %v1951
        %v2074 = vmul.f32 %v2033, %v2053
        %v2075 = vadd.f32 %v2073, %v2074
        %v2076 = vtanh.pop %v2075
        %v2077 = vmul.f32 %v2072, %v2076
        %v2078 = vld [vmem:[#allocation2 + $0xc0] sm:$0xff]
        %v2079 = vld [vmem:[#allocation2 + $0xc8] sm:$0xff]
        %v2080 = vld [vmem:[#allocation2 + $0xd0] sm:$0xff]
        %v2081 = vld [vmem:[#allocation2 + $0xd8] sm:$0xff]
        %v2082 = vpack.c.bf16 %v2077, %v2077
        %2083 = vmatpush.bf16.msra.mxu0 %v1303
        %2084 = vmatpush.bf16.msra.mxu0 %v1299
        %2085 = vmatpush.bf16.msra.mxu0 %v1295
        %2086 = vmatpush.bf16.msra.mxu0 %v1291
        %2087 = vmatpush.bf16.msra.mxu0 %v1287
        %2088 = vmatpush.bf16.msra.mxu0 %v1283
        %2089 = vmatpush.bf16.msra.mxu0 %v1279
        %2090 = vmatpush.bf16.msra.mxu0 %v1275
        %2091 = vmatmul.bf16.gmra.mxu0 %v2082
        %v2092 = vpop.f32.mrf.mxu0
        %v2093 = vadd.f32 0.0, %v2092
        %v2094 = vpop.f32.mrf.mxu0
        %2095 = vdwg.mxu0
        %2096 = vmatpush.bf16.msra.mxu0 %v1304
        %2097 = vmatpush.bf16.msra.mxu0 %v1300
        %2098 = vmatpush.bf16.msra.mxu0 %v1296
        %2099 = vmatpush.bf16.msra.mxu0 %v1292
        %2100 = vmatpush.bf16.msra.mxu0 %v1288
        %2101 = vmatpush.bf16.msra.mxu0 %v1284
        %2102 = vmatpush.bf16.msra.mxu0 %v1280
        %2103 = vmatpush.bf16.msra.mxu0 %v1276
        %2104 = vmatmul.bf16.gmra.mxu0 %v2082
        %v2105 = vpop.f32.mrf.mxu0
        %v2106 = vadd.f32 0.0, %v2105
        %v2107 = vpop.f32.mrf.mxu0
        %2108 = vdwg.mxu0
        %2109 = vmatpush.bf16.msra.mxu0 %v1305
        %2110 = vmatpush.bf16.msra.mxu0 %v1301
        %2111 = vmatpush.bf16.msra.mxu0 %v1297
        %2112 = vmatpush.bf16.msra.mxu0 %v1293
        %2113 = vmatpush.bf16.msra.mxu0 %v1289
        %2114 = vmatpush.bf16.msra.mxu0 %v1285
        %2115 = vmatpush.bf16.msra.mxu0 %v1281
        %2116 = vmatpush.bf16.msra.mxu0 %v1277
        %2117 = vmatmul.bf16.gmra.mxu0 %v2082
        %v2118 = vpop.f32.mrf.mxu0
        %v2119 = vadd.f32 0.0, %v2118
        %v2120 = vpop.f32.mrf.mxu0
        %2121 = vdwg.mxu0
        %2122 = vmatpush.bf16.msra.mxu0 %v1306
        %2123 = vmatpush.bf16.msra.mxu0 %v1302
        %2124 = vmatpush.bf16.msra.mxu0 %v1298
        %2125 = vmatpush.bf16.msra.mxu0 %v1294
        %2126 = vmatpush.bf16.msra.mxu0 %v1290
        %2127 = vmatpush.bf16.msra.mxu0 %v1286
        %2128 = vmatpush.bf16.msra.mxu0 %v1282
        %2129 = vmatpush.bf16.msra.mxu0 %v1278
        %2130 = vmatmul.bf16.gmra.mxu0 %v2082
        %v2131 = vpop.f32.mrf.mxu0
        %v2132 = vadd.f32 0.0, %v2131
        %v2133 = vpop.f32.mrf.mxu0
        %2134 = vdwg.mxu0
        %v2135 = vadd.f32 %v2078, %v2093
        %v2136 = vadd.f32 %v2079, %v2106
        %v2137 = vadd.f32 %v2080, %v2119
        %v2138 = vadd.f32 %v2081, %v2132
        %v2139 = vxor.u32 %v2135, 2147483648
        %v2140 = vmul.f32 %v2139, 1.442695
        %v2141 = vpow.pop %v2140
        %v2142 = vadd.f32 %v2141, 1.0
        %v2143 = vrcp.pop %v2142
        %v2144 = vmul.f32 %v2142, %v2143
        %v2145 = vsub.f32 1.0, %v2144
        %v2146 = vmul.f32 %v2143, %v2145
        %v2147 = vadd.f32 %v2143, %v2146
        %vm2148 = vweird.f32 %v2142
        %vm2149 = vweird.f32 %v2143
        %vm2150 = vmor %vm2148, %vm2149
        %v2151 = vsel %vm2150, %v2143, %v2147
        %v2152 = vand.u32 2147483647, %v2142
        %vm2153 = vcmp.eq.f32.partialorder %v2152, 8.507059e+37
        %v2154 = vand.u32 %v2142, 2147483648
        %v2155 = vor.u32 1.1754944e-38, %v2154
        %v2156 = vsel %vm2153, %v2155, %v2151
        %v2157 = vmul.f32 1.0, %v2156
        %v2158 = vxor.u32 %v2136, 2147483648
        %v2159 = vmul.f32 %v2158, 1.442695
        %v2160 = vpow.pop %v2159
        %v2161 = vadd.f32 %v2160, 1.0
        %v2162 = vrcp.pop %v2161
        %v2163 = vmul.f32 %v2161, %v2162
        %v2164 = vsub.f32 1.0, %v2163
        %v2165 = vmul.f32 %v2162, %v2164
        %v2166 = vadd.f32 %v2162, %v2165
        %vm2167 = vweird.f32 %v2161
        %vm2168 = vweird.f32 %v2162
        %vm2169 = vmor %vm2167, %vm2168
        %v2170 = vsel %vm2169, %v2162, %v2166
        %v2171 = vand.u32 2147483647, %v2161
        %vm2172 = vcmp.eq.f32.partialorder %v2171, 8.507059e+37
        %v2173 = vand.u32 %v2161, 2147483648
        %v2174 = vor.u32 1.1754944e-38, %v2173
        %v2175 = vsel %vm2172, %v2174, %v2170
        %v2176 = vmul.f32 1.0, %v2175
        %v2177 = vtanh.pop %v2137
        %v2178 = vxor.u32 %v2138, 2147483648
        %v2179 = vmul.f32 %v2178, 1.442695
        %v2180 = vpow.pop %v2179
        %v2181 = vadd.f32 %v2180, 1.0
        %v2182 = vrcp.pop %v2181
        %v2183 = vmul.f32 %v2181, %v2182
        %v2184 = vsub.f32 1.0, %v2183
        %v2185 = vmul.f32 %v2182, %v2184
        %v2186 = vadd.f32 %v2182, %v2185
        %vm2187 = vweird.f32 %v2181
        %vm2188 = vweird.f32 %v2182
        %vm2189 = vmor %vm2187, %vm2188
        %v2190 = vsel %vm2189, %v2182, %v2186
        %v2191 = vand.u32 2147483647, %v2181
        %vm2192 = vcmp.eq.f32.partialorder %v2191, 8.507059e+37
        %v2193 = vand.u32 %v2181, 2147483648
        %v2194 = vor.u32 1.1754944e-38, %v2193
        %v2195 = vsel %vm2192, %v2194, %v2190
        %v2196 = vmul.f32 1.0, %v2195
        %v2197 = vmul.f32 %v2176, %v2075
        %v2198 = vmul.f32 %v2157, %v2177
        %v2199 = vadd.f32 %v2197, %v2198
        %v2200 = vtanh.pop %v2199
        %v2201 = vmul.f32 %v2196, %v2200
        %v2202 = vld [vmem:[#allocation2 + $0xe0] sm:$0xff]
        %v2203 = vld [vmem:[#allocation2 + $0xe8] sm:$0xff]
        %v2204 = vld [vmem:[#allocation2 + $0xf0] sm:$0xff]
        %v2205 = vld [vmem:[#allocation2 + $0xf8] sm:$0xff]
        %v2206 = vpack.c.bf16 %v2201, %v2201
        %2207 = vmatpush.bf16.msra.mxu0 %v1303
        %2208 = vmatpush.bf16.msra.mxu0 %v1299
        %2209 = vmatpush.bf16.msra.mxu0 %v1295
        %2210 = vmatpush.bf16.msra.mxu0 %v1291
        %2211 = vmatpush.bf16.msra.mxu0 %v1287
        %2212 = vmatpush.bf16.msra.mxu0 %v1283
        %2213 = vmatpush.bf16.msra.mxu0 %v1279
        %2214 = vmatpush.bf16.msra.mxu0 %v1275
        %2215 = vmatmul.bf16.gmra.mxu0 %v2206
        %v2216 = vpop.f32.mrf.mxu0
        %v2217 = vadd.f32 0.0, %v2216
        %v2218 = vpop.f32.mrf.mxu0
        %2219 = vdwg.mxu0
        %2220 = vmatpush.bf16.msra.mxu0 %v1304
        %2221 = vmatpush.bf16.msra.mxu0 %v1300
        %2222 = vmatpush.bf16.msra.mxu0 %v1296
        %2223 = vmatpush.bf16.msra.mxu0 %v1292
        %2224 = vmatpush.bf16.msra.mxu0 %v1288
        %2225 = vmatpush.bf16.msra.mxu0 %v1284
        %2226 = vmatpush.bf16.msra.mxu0 %v1280
        %2227 = vmatpush.bf16.msra.mxu0 %v1276
        %2228 = vmatmul.bf16.gmra.mxu0 %v2206
        %v2229 = vpop.f32.mrf.mxu0
        %v2230 = vadd.f32 0.0, %v2229
        %v2231 = vpop.f32.mrf.mxu0
        %2232 = vdwg.mxu0
        %2233 = vmatpush.bf16.msra.mxu0 %v1305
        %2234 = vmatpush.bf16.msra.mxu0 %v1301
        %2235 = vmatpush.bf16.msra.mxu0 %v1297
        %2236 = vmatpush.bf16.msra.mxu0 %v1293
        %2237 = vmatpush.bf16.msra.mxu0 %v1289
        %2238 = vmatpush.bf16.msra.mxu0 %v1285
        %2239 = vmatpush.bf16.msra.mxu0 %v1281
        %2240 = vmatpush.bf16.msra.mxu0 %v1277
        %2241 = vmatmul.bf16.gmra.mxu0 %v2206
        %v2242 = vpop.f32.mrf.mxu0
        %v2243 = vadd.f32 0.0, %v2242
        %v2244 = vpop.f32.mrf.mxu0
        %2245 = vdwg.mxu0
        %2246 = vmatpush.bf16.msra.mxu0 %v1306
        %2247 = vmatpush.bf16.msra.mxu0 %v1302
        %2248 = vmatpush.bf16.msra.mxu0 %v1298
        %2249 = vmatpush.bf16.msra.mxu0 %v1294
        %2250 = vmatpush.bf16.msra.mxu0 %v1290
        %2251 = vmatpush.bf16.msra.mxu0 %v1286
        %2252 = vmatpush.bf16.msra.mxu0 %v1282
        %2253 = vmatpush.bf16.msra.mxu0 %v1278
        %2254 = vmatmul.bf16.gmra.mxu0 %v2206
        %v2255 = vpop.f32.mrf.mxu0
        %v2256 = vadd.f32 0.0, %v2255
        %v2257 = vpop.f32.mrf.mxu0
        %2258 = vdwg.mxu0
        %v2259 = vadd.f32 %v2202, %v2217
        %v2260 = vadd.f32 %v2203, %v2230
        %v2261 = vadd.f32 %v2204, %v2243
        %v2262 = vadd.f32 %v2205, %v2256
        %v2263 = vxor.u32 %v2259, 2147483648
        %v2264 = vmul.f32 %v2263, 1.442695
        %v2265 = vpow.pop %v2264
        %v2266 = vadd.f32 %v2265, 1.0
        %v2267 = vrcp.pop %v2266
        %v2268 = vmul.f32 %v2266, %v2267
        %v2269 = vsub.f32 1.0, %v2268
        %v2270 = vmul.f32 %v2267, %v2269
        %v2271 = vadd.f32 %v2267, %v2270
        %vm2272 = vweird.f32 %v2266
        %vm2273 = vweird.f32 %v2267
        %vm2274 = vmor %vm2272, %vm2273
        %v2275 = vsel %vm2274, %v2267, %v2271
        %v2276 = vand.u32 2147483647, %v2266
        %vm2277 = vcmp.eq.f32.partialorder %v2276, 8.507059e+37
        %v2278 = vand.u32 %v2266, 2147483648
        %v2279 = vor.u32 1.1754944e-38, %v2278
        %v2280 = vsel %vm2277, %v2279, %v2275
        %v2281 = vmul.f32 1.0, %v2280
        %v2282 = vxor.u32 %v2260, 2147483648
        %v2283 = vmul.f32 %v2282, 1.442695
        %v2284 = vpow.pop %v2283
        %v2285 = vadd.f32 %v2284, 1.0
        %v2286 = vrcp.pop %v2285
        %v2287 = vmul.f32 %v2285, %v2286
        %v2288 = vsub.f32 1.0, %v2287
        %v2289 = vmul.f32 %v2286, %v2288
        %v2290 = vadd.f32 %v2286, %v2289
        %vm2291 = vweird.f32 %v2285
        %vm2292 = vweird.f32 %v2286
        %vm2293 = vmor %vm2291, %vm2292
        %v2294 = vsel %vm2293, %v2286, %v2290
        %v2295 = vand.u32 2147483647, %v2285
        %vm2296 = vcmp.eq.f32.partialorder %v2295, 8.507059e+37
        %v2297 = vand.u32 %v2285, 2147483648
        %v2298 = vor.u32 1.1754944e-38, %v2297
        %v2299 = vsel %vm2296, %v2298, %v2294
        %v2300 = vmul.f32 1.0, %v2299
        %v2301 = vtanh.pop %v2261
        %v2302 = vxor.u32 %v2262, 2147483648
        %v2303 = vmul.f32 %v2302, 1.442695
        %v2304 = vpow.pop %v2303
        %v2305 = vadd.f32 %v2304, 1.0
        %v2306 = vrcp.pop %v2305
        %v2307 = vmul.f32 %v2305, %v2306
        %v2308 = vsub.f32 1.0, %v2307
        %v2309 = vmul.f32 %v2306, %v2308
        %v2310 = vadd.f32 %v2306, %v2309
        %vm2311 = vweird.f32 %v2305
        %vm2312 = vweird.f32 %v2306
        %vm2313 = vmor %vm2311, %vm2312
        %v2314 = vsel %vm2313, %v2306, %v2310
        %v2315 = vand.u32 2147483647, %v2305
        %vm2316 = vcmp.eq.f32.partialorder %v2315, 8.507059e+37
        %v2317 = vand.u32 %v2305, 2147483648
        %v2318 = vor.u32 1.1754944e-38, %v2317
        %v2319 = vsel %vm2316, %v2318, %v2314
        %v2320 = vmul.f32 1.0, %v2319
        %v2321 = vmul.f32 %v2300, %v2199
        %v2322 = vmul.f32 %v2281, %v2301
        %v2323 = vadd.f32 %v2321, %v2322
        %v2324 = vtanh.pop %v2323
        %v2325 = vmul.f32 %v2320, %v2324
        %v2326 = vpack.c.bf16 %v2325, %v2325
        %v2327 = vld [vmem:[#allocation9] sm:$0xf]
        %v2328 = vld [vmem:[#allocation9 + $0x4] sm:$0xf]
        %v2329 = vld [vmem:[#allocation9 + $0x8] sm:$0xf]
        %v2330 = vld [vmem:[#allocation9 + $0xc] sm:$0xf]
        %v2331 = vld [vmem:[#allocation9 + $0x10] sm:$0xf]
        %v2332 = vld [vmem:[#allocation9 + $0x14] sm:$0xf]
        %v2333 = vld [vmem:[#allocation9 + $0x18] sm:$0xf]
        %v2334 = vld [vmem:[#allocation9 + $0x1c] sm:$0xf]
        %v2335 = vld [vmem:[#allocation9 + $0x20] sm:$0xf]
        %v2336 = vld [vmem:[#allocation9 + $0x24] sm:$0xf]
        %v2337 = vld [vmem:[#allocation9 + $0x28] sm:$0xf]
        %v2338 = vld [vmem:[#allocation9 + $0x2c] sm:$0xf]
        %v2339 = vld [vmem:[#allocation9 + $0x30] sm:$0xf]
        %v2340 = vld [vmem:[#allocation9 + $0x34] sm:$0xf]
        %v2341 = vld [vmem:[#allocation9 + $0x38] sm:$0xf]
        %v2342 = vld [vmem:[#allocation9 + $0x3c] sm:$0xf]
        %v2343 = vld [vmem:[%s4] sm:$0x1]
        %v2345 = vperm.slane %v2343, 0
        %v2363 = vunpack.c.l.b16 %v2327
        %v2364 = vunpack.c.l.b16 %v2328
        %v2365 = vunpack.c.l.b16 %v2329
        %v2366 = vunpack.c.l.b16 %v2330
        %v2367 = vunpack.c.l.b16 %v2331
        %v2368 = vunpack.c.l.b16 %v2332
        %v2369 = vunpack.c.l.b16 %v2333
        %v2370 = vunpack.c.l.b16 %v2334
        %v2371 = vunpack.c.l.b16 %v2335
        %v2372 = vunpack.c.l.b16 %v2336
        %v2373 = vunpack.c.l.b16 %v2337
        %v2374 = vunpack.c.l.b16 %v2338
        %v2375 = vunpack.c.l.b16 %v2339
        %v2376 = vunpack.c.l.b16 %v2340
        %v2377 = vunpack.c.l.b16 %v2341
        %v2378 = vunpack.c.l.b16 %v2342
        %v2379 = vpack.c.b16 %v2364, %v2363
        %v2380 = vpack.c.b16 %v2366, %v2365
        %v2381 = vpack.c.b16 %v2368, %v2367
        %v2382 = vpack.c.b16 %v2370, %v2369
        %v2383 = vpack.c.b16 %v2372, %v2371
        %v2384 = vpack.c.b16 %v2374, %v2373
        %v2385 = vpack.c.b16 %v2376, %v2375
        %v2386 = vpack.c.b16 %v2378, %v2377
        %2395 = vmatpush.bf16.msra.mxu0 %v2386
        %2396 = vmatpush.bf16.msra.mxu0 %v2385
        %2397 = vmatpush.bf16.msra.mxu0 %v2384
        %2398 = vmatpush.bf16.msra.mxu0 %v2383
        %2399 = vmatpush.bf16.msra.mxu0 %v2382
        %2400 = vmatpush.bf16.msra.mxu0 %v2381
        %2401 = vmatpush.bf16.msra.mxu0 %v2380
        %2402 = vmatpush.bf16.msra.mxu0 %v2379
        %2403 = vmatmul.bf16.gmra.mxu0 %v2326
        %v2404 = vpop.f32.mrf.mxu0
        %v2405 = vadd.f32 %v2345, %v2404
        %v2406 = vpop.f32.mrf.mxu0
        %2407 = vdwg.mxu0
        %2408 = vmax.xlane.f32.xlu0 %v2405
        %v2409 = vpop.xlane.xlu0 %2408
        %v2410 = vsub.f32 %v2405, %v2409
        %v2411 = vmul.f32 %v2410, 1.442695
        %v2412 = vpow.pop %v2411
        %2413 = vadd.xlane.f32.xlu0 %v2412
        %v2414 = vpop.xlane.xlu0 %2413
        %v2415 = vlog2.pop %v2414
        %v2416 = vmul.f32 %v2415, 0.6931472
        %v2417 = vadd.f32 %v2409, %v2416
        %v2418 = vsub.f32 %v2405, %v2417
        %2419 = vst [vmem:[%s234] sm:$0xff] %v2418
        %p2420 = scmp.lt.s32.totalorder %s26, 1
        %s2421 = scalar_select %p2420, %s26, 1
        %s2422 = smul.addr %s2421, 8
        %s2423 = scalar_lea.vmem %s5, %s2422
        // Predicated region
        $region49: #{lstm_classifier_forward_batch.1} parent=35 // pred_check
          %p2424 = pneg %p128
        $region50: #{lstm_classifier_forward_batch.1} parent=35 // pred_check_branch
          %2426 = sbr.rel (%p2424) target = $region52
        $region51: #{lstm_classifier_forward_batch.1} parent=35 // pred_region
          _
        $region52: #{lstm_classifier_forward_batch.1} parent=35 // pred_fallthru
          _
      $region36: #{lstm_classifier_forward_batch.1} parent=5 // pred_fallthru
        _
      %p2427 = scmp.le.s32.totalorder 2, %s21
      // Predicated region
      $region53: #{lstm_classifier_forward_batch.1} parent=5 // pred_check
        %p2428 = pneg %p2427
      $region54: #{lstm_classifier_forward_batch.1} parent=5 // pred_check_branch
        %2430 = sbr.rel (%p2428) target = $region56
      $region55: #{lstm_classifier_forward_batch.1} parent=5 // pred_region
        %s2431 = ssub.s32 %s21, 2
        // Predicated region
        $region57: #{lstm_classifier_forward_batch.1} parent=55 // pred_check
          %p2432 = pneg %p134
        $region58: #{lstm_classifier_forward_batch.1} parent=55 // pred_check_branch
          %2434 = sbr.rel (%p2432) target = $region60
        $region59: #{lstm_classifier_forward_batch.1} parent=55 // pred_region
          %p2435 = scmp.lt.s32.totalorder %s27, 1
          %s2436 = scalar_select %p2435, %s27, 1
          %s2437 = smul.addr %s2436, 8
          %s2438 = scalar_lea.vmem %s5, %s2437
        $region60: #{lstm_classifier_forward_batch.1} parent=55 // pred_fallthru
          _
      $region56: #{lstm_classifier_forward_batch.1} parent=5 // pred_fallthru
        _
    $region6: #{lstm_classifier_forward_batch.1} parent=1 // loop_footer
      %s25 = sadd.s32 1, %s21
    $region7: #{lstm_classifier_forward_batch.1} parent=1 // loop_footer_branch
      %20 = sbr.rel target = $region3
    $region8: #{lstm_classifier_forward_batch.1} parent=1 // loop_exit
      _
    %2439 = vsyncpa [#allocation6], 1
    %s2440 = scalar_lea.sflag [#allocation6], 1
    %2441 = vsyncpa %s2440, 1
    %2442 = vsyncpa [#allocation8], 1

</llo_original>
